<compile_context>
chip_gen: v6e
topology: v6e:2x2x1
jax: 0.10.0
libtpu: 0.0.40
codegen_flags: <defaults>
</compile_context>

<pallas_src>
import functools

import jax
import jax.numpy as jnp
from jax.experimental import pallas as pl
from jax.experimental.pallas import tpu as pltpu

NEG_SLOPE = 0.01
C = 32           # internal channel width (real 2 in/out channels zero-padded to 32)
N_LAYERS = 5


def _leaky_relu(x, slope):
    return jnp.where(x >= 0, x, slope * x)


def _ffu_kernel(x_ref, t_ref, b_ref, out_ref, a_ref):
    """One conv layer per grid step (grid=(N_LAYERS,)); weights streamed per layer.

    x_ref:   (N, H, W*C)        f32   lane-dense input (channels padded to C)
    t_ref:   (1, 3, W*C, W*C)   bf16  this layer's block-banded (Toeplitz) weights
    b_ref:   (1, 1, W*C)        f32   this layer's bias, tiled across W
    out_ref: (N, H, W*C)        f32
    a_ref:   (N*(H+1)+1, W*C)   f32   persistent activation scratch; one shared
                                      zero halo row between/around batch items
    """
    layer = pl.program_id(0)
    last = pl.num_programs(0) - 1
    n, h, wc = x_ref.shape
    stride = h + 1                       # per-batch row stride in the slab
    m = n * stride - 1                   # matmul M: all batch rows + separators

    # --- step 0: zero the halo rows once and copy x into the slab -------------
    @pl.when(layer == 0)
    def _():
        a_ref[...] = jnp.zeros_like(a_ref)
        for b in range(n):
            r0 = b * stride + 1
            a_ref[r0:r0 + h, :] = x_ref[b]

    # --- 3x3 SAME conv == 3 contiguous-window lane-dense MXU matmuls ----------
    # SAME padding in W is folded into the banded weights; SAME padding in H is
    # the shared zero rows of a_ref, so each row tap kh is a row-shifted window.
    acc = None
    for kh in range(3):
        lhs = a_ref[kh:kh + m, :].astype(jnp.bfloat16)        # (m, W*C)
        p = jnp.dot(lhs, t_ref[0, kh], preferred_element_type=jnp.float32)
        acc = p if acc is None else acc + p
    acc = acc + b_ref[0]                 # (1, W*C) broadcast, full lane width

    # --- layers 0..3: LeakyReLU, write activations back, keep halos zero ------
    @pl.when(layer < last)
    def _():
        a_ref[1:1 + m, :] = _leaky_relu(acc, NEG_SLOPE)
        for b in range(1, n):            # re-zero the inter-batch halo rows
            r = b * stride
            a_ref[r:r + 1, :] = jnp.zeros((1, wc), a_ref.dtype)

    # --- last layer: residual (f32) + LeakyReLU, lane-dense output write ------
    @pl.when(layer == last)
    def _():
        for b in range(n):
            y = acc[b * stride:b * stride + h, :] + x_ref[b]
            out_ref[b] = _leaky_relu(y, NEG_SLOPE)


def _build_banded_weights(w_hwio, width):
    """Fold the 3 dw taps of each dh row of a 3x3 HWIO conv weight into one
    (width*C, width*C) block-banded matrix (implicit SAME zero-padding in W)."""
    rows = []
    for dh in range(3):
        t = None
        for dw in range(3):
            band = jnp.kron(jnp.eye(width, k=1 - dw, dtype=jnp.float32),
                            w_hwio[dh, dw])
            t = band if t is None else t + band
        rows.append(t)
    return jnp.stack(rows)               # (3, width*C, width*C)


def prepare_params(params, width):
    """Hoisted out of the per-call path: build banded weights / tiled bias ONCE."""
    t_all = jnp.stack([_build_banded_weights(w, width) for (w, _) in params])
    t_all = t_all.astype(jnp.bfloat16)                            # (5,3,W*C,W*C)
    b_all = jnp.stack([jnp.tile(b, width) for (_, b) in params])  # (5, W*C)
    b_all = b_all.reshape(len(params), 1, width * C).astype(jnp.float32)
    return t_all, b_all


@jax.jit
def feature_forward_unit(x_nchw, t_all, b_all):
    """x_nchw: (N, 2, H, W) f32; t_all/b_all from prepare_params (computed once)."""
    n, cin, h, w = x_nchw.shape
    wc = w * C
    x = jnp.transpose(x_nchw, (0, 2, 3, 1)).astype(jnp.float32)   # NHWC
    x = jnp.pad(x, ((0, 0), (0, 0), (0, 0), (0, C - cin)))        # channels -> 32
    x = x.reshape(n, h, wc)                                       # lane-dense (free)

    rows = n * (h + 1) + 1
    flops = 2 * N_LAYERS * 3 * (rows - 2) * wc * wc
    bytes_accessed = t_all.size * 2 + b_all.size * 4 + 2 * x.size * 4

    out = pl.pallas_call(
        _ffu_kernel,
        out_shape=jax.ShapeDtypeStruct((n, h, wc), jnp.float32),
        grid=(N_LAYERS,),
        in_specs=[
            pl.BlockSpec((n, h, wc), lambda l: (0, 0, 0)),         # x: resident
            pl.BlockSpec((1, 3, wc, wc), lambda l: (l, 0, 0, 0)),  # weights: streamed
            pl.BlockSpec((1, 1, wc), lambda l: (l, 0, 0)),         # bias: streamed
        ],
        out_specs=pl.BlockSpec((n, h, wc), lambda l: (0, 0, 0)),   # written at end
        scratch_shapes=[pltpu.VMEM((rows, wc), jnp.float32)],
        compiler_params=pltpu.CompilerParams(
            dimension_semantics=("arbitrary",)),                   # layers are sequential
        cost_estimate=pl.CostEstimate(flops=flops, transcendentals=0,
                                      bytes_accessed=bytes_accessed),
    )(x, t_all, b_all)

    out = out.reshape(n, h, w, C)[..., :cin]                       # drop padded channels
    return jnp.transpose(out, (0, 3, 1, 2))                        # back to NCHW


def make_params(key):
    """Deterministic synthetic parameters; BN folded (inference mode)."""
    eps = 1e-5

    def conv_w(k, cin, cout):
        kw, kb = jax.random.split(k)
        w = 0.1 * jax.random.normal(kw, (3, 3, cin, cout), jnp.float32)
        b = 0.05 * jax.random.normal(kb, (cout,), jnp.float32)
        return w, b

    def bn_params(k, ch):
        kg, kb = jax.random.split(k)
        gamma = 1.0 + 0.1 * jax.random.normal(kg, (ch,), jnp.float32)
        beta = 0.1 * jax.random.normal(kb, (ch,), jnp.float32)
        mean = jnp.zeros((ch,), jnp.float32)   # running stats (eval mode)
        var = jnp.ones((ch,), jnp.float32)
        return gamma, beta, mean, var

    def fold(w, b, gamma, beta, mean, var):
        scale = gamma / jnp.sqrt(var + eps)
        return w * scale, (b - mean) * scale + beta

    keys = jax.random.split(key, 10)
    layers = []

    # conv1: 2 -> 32, BN folded; pad input channels to 32 (zero weight rows)
    w, b = conv_w(keys[0], 2, 32)
    w, b = fold(w, b, *bn_params(keys[1], 32))
    w = jnp.pad(w, ((0, 0), (0, 0), (0, C - 2), (0, 0)))
    layers.append((w, b))

    # conv2..conv4: 32 -> 32, BN folded
    for i in range(3):
        w, b = conv_w(keys[2 + 2 * i], 32, 32)
        w, b = fold(w, b, *bn_params(keys[3 + 2 * i], 32))
        layers.append((w, b))

    # conv6: 32 -> 2, no BN; pad output channels to 32 (zero weight/bias)
    w, b = conv_w(keys[8], 32, 2)
    w = jnp.pad(w, ((0, 0), (0, 0), (0, 0), (0, C - 2)))
    b = jnp.pad(b, (0, C - 2))
    layers.append((w, b))
    return layers


def ref_forward(x_nchw, params):
    """Pure-JAX reference (XLA f32 convs) for correctness checking."""
    x = jnp.transpose(x_nchw, (0, 2, 3, 1)).astype(jnp.float32)
    cin = x.shape[-1]
    xp = jnp.pad(x, ((0, 0), (0, 0), (0, 0), (0, C - cin)))
    dn = ('NHWC', 'HWIO', 'NHWC')

    t = xp
    for (wt, bt) in params[:4]:
        t = jax.lax.conv_general_dilated(t, wt, (1, 1), 'SAME', dimension_numbers=dn)
        t = _leaky_relu(t + bt.reshape(1, 1, 1, -1), NEG_SLOPE)
    w6, b6 = params[4]
    t = jax.lax.conv_general_dilated(t, w6, (1, 1), 'SAME', dimension_numbers=dn)
    y = _leaky_relu(t + b6.reshape(1, 1, 1, -1) + xp, NEG_SLOPE)
    return jnp.transpose(y[..., :cin], (0, 3, 1, 2))


if __name__ == "__main__":
    key = jax.random.PRNGKey(0)
    kx, kp = jax.random.split(key)

    # Module implies 2 input channels (Conv2d(2, 32, ...)); small spatial size.
    x = jax.random.normal(kx, (2, 2, 16, 16), jnp.float32)   # NCHW, like PyTorch
    params = make_params(kp)

    # Weight/bias preprocessing hoisted out of the per-call path (done once).
    t_all, b_all = jax.block_until_ready(prepare_params(params, x.shape[-1]))

    out = feature_forward_unit(x, t_all, b_all)
    out = jax.block_until_ready(out)

    ref = ref_forward(x, params)
    assert out.shape == (2, 2, 16, 16), out.shape
    max_err = float(jnp.max(jnp.abs(out - ref)))
    # Matmul operands are bf16 (f32 accumulation); tolerance sized for bf16 rounding
    # over the 5-layer chain.
    assert jnp.allclose(out, ref, atol=3e-2, rtol=2e-2), f"max_err={max_err}"

    # TODO(synk): training-mode BatchNorm (batch statistics) is not implemented;
    # BN is folded as an inference-mode per-channel affine.
    print("KERNEL_OK")
</pallas_src>

<mosaic_0001>
module attributes {stable_mosaic.version = 11 : i64} {
  func.func @_ffu_kernel(%arg0: i32, %arg1: memref<2x16x512xf32, #tpu.memory_space<vmem>>, %arg2: memref<1x3x512x512xbf16, #tpu.memory_space<vmem>>, %arg3: memref<1x1x512xf32, #tpu.memory_space<vmem>>, %arg4: memref<2x16x512xf32, #tpu.memory_space<vmem>>, %arg5: memref<35x512xf32, #tpu.memory_space<vmem>>) attributes {dimension_semantics = [#tpu.dimension_semantics<arbitrary>], iteration_bounds = array<i64: 5>, scalar_prefetch = 0 : i64, scratch_operands = 1 : i64, tpu.core_type = #tpu.core_type<tc>, window_params = [{pipeline_mode = #tpu.pipeline_mode<synchronous>, transform_indices = @transform_0, window_bounds = array<i64: 2, 16, 512>}, {transform_indices = @transform_1, window_bounds = array<i64: 1, 3, 512, 512>}, {transform_indices = @transform_2, window_bounds = array<i64: 1, 1, 512>}, {pipeline_mode = #tpu.pipeline_mode<synchronous>, transform_indices = @transform_3, window_bounds = array<i64: 2, 16, 512>}]} {
    %c0_i32 = arith.constant 0 : i32
    %0 = arith.cmpi eq, %arg0, %c0_i32 : i32
    %1 = arith.extui %0 : i1 to i32
    %c0_i32_0 = arith.constant 0 : i32
    %2 = arith.cmpi ne, %1, %c0_i32_0 : i32
    scf.if %2 {
      %cst_24 = arith.constant 0.000000e+00 : f32
      %30 = vector.broadcast %cst_24 : f32 to vector<35x512xf32>
      %c0_25 = arith.constant 0 : index
      %c0_26 = arith.constant 0 : index
      %31 = vector.load %arg5[%c0_25, %c0_26] : memref<35x512xf32, #tpu.memory_space<vmem>>, vector<35x512xf32>
      tpu.vector_store %arg5[%c0_25, %c0_26], %30 {strides = array<i32>} : memref<35x512xf32, #tpu.memory_space<vmem>>, vector<35x512xf32>,
      %c0_27 = arith.constant 0 : index
      %c0_28 = arith.constant 0 : index
      %c0_29 = arith.constant 0 : index
      %32 = vector.load %arg1[%c0_27, %c0_28, %c0_29] : memref<2x16x512xf32, #tpu.memory_space<vmem>>, vector<1x16x512xf32>
      %33 = vector.shape_cast %32 : vector<1x16x512xf32> to vector<16x512xf32>
      %c1_30 = arith.constant 1 : index
      %c0_31 = arith.constant 0 : index
      %34 = vector.load %arg5[%c1_30, %c0_31] : memref<35x512xf32, #tpu.memory_space<vmem>>, vector<16x512xf32>
      tpu.vector_store %arg5[%c1_30, %c0_31], %33 {strides = array<i32>} : memref<35x512xf32, #tpu.memory_space<vmem>>, vector<16x512xf32>,
      %c1_32 = arith.constant 1 : index
      %c0_33 = arith.constant 0 : index
      %c0_34 = arith.constant 0 : index
      %35 = vector.load %arg1[%c1_32, %c0_33, %c0_34] : memref<2x16x512xf32, #tpu.memory_space<vmem>>, vector<1x16x512xf32>
      %36 = vector.shape_cast %35 : vector<1x16x512xf32> to vector<16x512xf32>
      %c18 = arith.constant 18 : index
      %c0_35 = arith.constant 0 : index
      %37 = vector.load %arg5[%c18, %c0_35] : memref<35x512xf32, #tpu.memory_space<vmem>>, vector<16x512xf32>
      tpu.vector_store %arg5[%c18, %c0_35], %36 {strides = array<i32>} : memref<35x512xf32, #tpu.memory_space<vmem>>, vector<16x512xf32>,
    } else {
    }
    %c0 = arith.constant 0 : index
    %c0_1 = arith.constant 0 : index
    %3 = vector.load %arg5[%c0, %c0_1] : memref<35x512xf32, #tpu.memory_space<vmem>>, vector<33x512xf32>
    %4 = arith.truncf %3 : vector<33x512xf32> to vector<33x512xbf16>
    %c0_2 = arith.constant 0 : index
    %c0_3 = arith.constant 0 : index
    %c0_4 = arith.constant 0 : index
    %c0_5 = arith.constant 0 : index
    %5 = vector.load %arg2[%c0_2, %c0_3, %c0_4, %c0_5] : memref<1x3x512x512xbf16, #tpu.memory_space<vmem>>, vector<1x1x512x512xbf16>
    %6 = vector.shape_cast %5 : vector<1x1x512x512xbf16> to vector<512x512xbf16>
    %cst = arith.constant dense<0.000000e+00> : vector<33x512xf32>
    %7 = tpu.matmul %4, %6, %cst {dimension_numbers = #tpu.dot_dimension_numbers<[1], [0], [0], [1], [0, 0, 1, 1], [], []>} : vector<33x512xbf16>, vector<512x512xbf16>, vector<33x512xf32> -> vector<33x512xf32>
    %c1 = arith.constant 1 : index
    %c0_6 = arith.constant 0 : index
    %8 = vector.load %arg5[%c1, %c0_6] : memref<35x512xf32, #tpu.memory_space<vmem>>, vector<33x512xf32>
    %9 = arith.truncf %8 : vector<33x512xf32> to vector<33x512xbf16>
    %c0_7 = arith.constant 0 : index
    %c1_8 = arith.constant 1 : index
    %c0_9 = arith.constant 0 : index
    %c0_10 = arith.constant 0 : index
    %10 = vector.load %arg2[%c0_7, %c1_8, %c0_9, %c0_10] : memref<1x3x512x512xbf16, #tpu.memory_space<vmem>>, vector<1x1x512x512xbf16>
    %11 = vector.shape_cast %10 : vector<1x1x512x512xbf16> to vector<512x512xbf16>
    %cst_11 = arith.constant dense<0.000000e+00> : vector<33x512xf32>
    %12 = tpu.matmul %9, %11, %cst_11 {dimension_numbers = #tpu.dot_dimension_numbers<[1], [0], [0], [1], [0, 0, 1, 1], [], []>} : vector<33x512xbf16>, vector<512x512xbf16>, vector<33x512xf32> -> vector<33x512xf32>
    %13 = arith.addf %7, %12 : vector<33x512xf32>
    %c2 = arith.constant 2 : index
    %c0_12 = arith.constant 0 : index
    %14 = vector.load %arg5[%c2, %c0_12] : memref<35x512xf32, #tpu.memory_space<vmem>>, vector<33x512xf32>
    %15 = arith.truncf %14 : vector<33x512xf32> to vector<33x512xbf16>
    %c0_13 = arith.constant 0 : index
    %c2_14 = arith.constant 2 : index
    %c0_15 = arith.constant 0 : index
    %c0_16 = arith.constant 0 : index
    %16 = vector.load %arg2[%c0_13, %c2_14, %c0_15, %c0_16] : memref<1x3x512x512xbf16, #tpu.memory_space<vmem>>, vector<1x1x512x512xbf16>
    %17 = vector.shape_cast %16 : vector<1x1x512x512xbf16> to vector<512x512xbf16>
    %cst_17 = arith.constant dense<0.000000e+00> : vector<33x512xf32>
    %18 = tpu.matmul %15, %17, %cst_17 {dimension_numbers = #tpu.dot_dimension_numbers<[1], [0], [0], [1], [0, 0, 1, 1], [], []>} : vector<33x512xbf16>, vector<512x512xbf16>, vector<33x512xf32> -> vector<33x512xf32>
    %19 = arith.addf %13, %18 : vector<33x512xf32>
    %c0_18 = arith.constant 0 : index
    %c0_19 = arith.constant 0 : index
    %c0_20 = arith.constant 0 : index
    %20 = vector.load %arg3[%c0_18, %c0_19, %c0_20] : memref<1x1x512xf32, #tpu.memory_space<vmem>>, vector<1x1x512xf32>
    %21 = vector.shape_cast %20 : vector<1x1x512xf32> to vector<1x512xf32>
    %22 = vector.broadcast %21 : vector<1x512xf32> to vector<33x512xf32>
    %23 = arith.addf %19, %22 : vector<33x512xf32>
    %c4_i32 = arith.constant 4 : i32
    %24 = arith.cmpi slt, %arg0, %c4_i32 : i32
    %25 = arith.extui %24 : i1 to i32
    %c0_i32_21 = arith.constant 0 : i32
    %26 = arith.cmpi ne, %25, %c0_i32_21 : i32
    scf.if %26 {
      %cst_24 = arith.constant 0.000000e+00 : f32
      %30 = vector.broadcast %cst_24 : f32 to vector<33x512xf32>
      %31 = arith.cmpf oge, %23, %30 : vector<33x512xf32>
      %cst_25 = arith.constant 0.00999999977 : f32
      %32 = vector.broadcast %cst_25 : f32 to vector<33x512xf32>
      %33 = arith.mulf %32, %23 : vector<33x512xf32>
      %34 = arith.select %31, %23, %33 : vector<33x512xi1>, vector<33x512xf32>
      %c1_26 = arith.constant 1 : index
      %c0_27 = arith.constant 0 : index
      %35 = vector.load %arg5[%c1_26, %c0_27] : memref<35x512xf32, #tpu.memory_space<vmem>>, vector<33x512xf32>
      tpu.vector_store %arg5[%c1_26, %c0_27], %34 {strides = array<i32>} : memref<35x512xf32, #tpu.memory_space<vmem>>, vector<33x512xf32>,
      %cst_28 = arith.constant 0.000000e+00 : f32
      %36 = vector.broadcast %cst_28 : f32 to vector<1x512xf32>
      %c17 = arith.constant 17 : index
      %c0_29 = arith.constant 0 : index
      %37 = vector.load %arg5[%c17, %c0_29] : memref<35x512xf32, #tpu.memory_space<vmem>>, vector<1x512xf32>
      tpu.vector_store %arg5[%c17, %c0_29], %36 {strides = array<i32>} : memref<35x512xf32, #tpu.memory_space<vmem>>, vector<1x512xf32>,
    } else {
    }
    %c4_i32_22 = arith.constant 4 : i32
    %27 = arith.cmpi eq, %arg0, %c4_i32_22 : i32
    %28 = arith.extui %27 : i1 to i32
    %c0_i32_23 = arith.constant 0 : i32
    %29 = arith.cmpi ne, %28, %c0_i32_23 : i32
    scf.if %29 {
      %30 = vector.extract_strided_slice %23 {offsets = [0, 0], sizes = [16, 512], strides = [1, 1]} : vector<33x512xf32> to vector<16x512xf32>
      %c0_24 = arith.constant 0 : index
      %c0_25 = arith.constant 0 : index
      %c0_26 = arith.constant 0 : index
      %31 = vector.load %arg1[%c0_24, %c0_25, %c0_26] : memref<2x16x512xf32, #tpu.memory_space<vmem>>, vector<1x16x512xf32>
      %32 = vector.shape_cast %31 : vector<1x16x512xf32> to vector<16x512xf32>
      %33 = arith.addf %30, %32 : vector<16x512xf32>
      %cst_27 = arith.constant 0.000000e+00 : f32
      %34 = vector.broadcast %cst_27 : f32 to vector<16x512xf32>
      %35 = arith.cmpf oge, %33, %34 : vector<16x512xf32>
      %cst_28 = arith.constant 0.00999999977 : f32
      %36 = vector.broadcast %cst_28 : f32 to vector<16x512xf32>
      %37 = arith.mulf %36, %33 : vector<16x512xf32>
      %38 = arith.select %35, %33, %37 : vector<16x512xi1>, vector<16x512xf32>
      %c0_29 = arith.constant 0 : index
      %c0_30 = arith.constant 0 : index
      %c0_31 = arith.constant 0 : index
      %39 = vector.load %arg4[%c0_29, %c0_30, %c0_31] : memref<2x16x512xf32, #tpu.memory_space<vmem>>, vector<1x16x512xf32>
      %40 = vector.shape_cast %39 : vector<1x16x512xf32> to vector<16x512xf32>
      %41 = vector.shape_cast %38 : vector<16x512xf32> to vector<1x16x512xf32>
      tpu.vector_store %arg4[%c0_29, %c0_30, %c0_31], %41 {strides = array<i32>} : memref<2x16x512xf32, #tpu.memory_space<vmem>>, vector<1x16x512xf32>,
      %42 = vector.extract_strided_slice %23 {offsets = [17, 0], sizes = [16, 512], strides = [1, 1]} : vector<33x512xf32> to vector<16x512xf32>
      %c1_32 = arith.constant 1 : index
      %c0_33 = arith.constant 0 : index
      %c0_34 = arith.constant 0 : index
      %43 = vector.load %arg1[%c1_32, %c0_33, %c0_34] : memref<2x16x512xf32, #tpu.memory_space<vmem>>, vector<1x16x512xf32>
      %44 = vector.shape_cast %43 : vector<1x16x512xf32> to vector<16x512xf32>
      %45 = arith.addf %42, %44 : vector<16x512xf32>
      %cst_35 = arith.constant 0.000000e+00 : f32
      %46 = vector.broadcast %cst_35 : f32 to vector<16x512xf32>
      %47 = arith.cmpf oge, %45, %46 : vector<16x512xf32>
      %cst_36 = arith.constant 0.00999999977 : f32
      %48 = vector.broadcast %cst_36 : f32 to vector<16x512xf32>
      %49 = arith.mulf %48, %45 : vector<16x512xf32>
      %50 = arith.select %47, %45, %49 : vector<16x512xi1>, vector<16x512xf32>
      %c1_37 = arith.constant 1 : index
      %c0_38 = arith.constant 0 : index
      %c0_39 = arith.constant 0 : index
      %51 = vector.load %arg4[%c1_37, %c0_38, %c0_39] : memref<2x16x512xf32, #tpu.memory_space<vmem>>, vector<1x16x512xf32>
      %52 = vector.shape_cast %51 : vector<1x16x512xf32> to vector<16x512xf32>
      %53 = vector.shape_cast %50 : vector<16x512xf32> to vector<1x16x512xf32>
      tpu.vector_store %arg4[%c1_37, %c0_38, %c0_39], %53 {strides = array<i32>} : memref<2x16x512xf32, #tpu.memory_space<vmem>>, vector<1x16x512xf32>,
    } else {
    }
    return
  }
  func.func @transform_0(%arg0: i32) -> (i32, i32, i32) {
    %c0_i32 = arith.constant 0 : i32
    %c0_i32_0 = arith.constant 0 : i32
    %c0_i32_1 = arith.constant 0 : i32
    %c0_i32_2 = arith.constant 0 : i32
    return %c0_i32, %c0_i32_0, %c0_i32_1 : i32, i32, i32
  }
  func.func @transform_1(%arg0: i32) -> (i32, i32, i32, i32) {
    %c0_i32 = arith.constant 0 : i32
    %c0_i32_0 = arith.constant 0 : i32
    %c0_i32_1 = arith.constant 0 : i32
    %c0_i32_2 = arith.constant 0 : i32
    return %arg0, %c0_i32, %c0_i32_0, %c0_i32_1 : i32, i32, i32, i32
  }
  func.func @transform_2(%arg0: i32) -> (i32, i32, i32) {
    %c0_i32 = arith.constant 0 : i32
    %c0_i32_0 = arith.constant 0 : i32
    %c0_i32_1 = arith.constant 0 : i32
    return %arg0, %c0_i32, %c0_i32_0 : i32, i32, i32
  }
  func.func @transform_3(%arg0: i32) -> (i32, i32, i32) {
    %c0_i32 = arith.constant 0 : i32
    %c0_i32_0 = arith.constant 0 : i32
    %c0_i32_1 = arith.constant 0 : i32
    %c0_i32_2 = arith.constant 0 : i32
    return %c0_i32, %c0_i32_0, %c0_i32_1 : i32, i32, i32
  }
}

</mosaic_0001>

<llo_original>
// kernel: feature_forward_unit.1
$region0: #{feature_forward_unit.1}
  #allocation0 [shape = 'u32[]', space=smem, size = 0x4, offset = 0x4, fixed_abs, tag = 'smem constant byte address 0x4 - core index']
  #allocation1 [shape = 'u32[144,128]{1,0:T(1,128)}', space=vmem, size = 0x12000, scoped, tag = 'internal scratch']
  #allocation2 [shape = 'f32[35,512]{1,0:T(8,128)}', space=vmem, size = 0x14000, scoped, tag = 'scratch operand']
  %s0 = inlined_call_operand.vmem [shape: f32[2,16,512], index: 0, kind: input, shape index: {}]
  %s1 = inlined_call_operand.hbm [shape: bf16[5,3,512,512], index: 1, kind: input, shape index: {}]
  %s2 = inlined_call_operand.hbm [shape: f32[5,1,512], index: 2, kind: input, shape index: {}]
  %s3 = inlined_call_operand.vmem [shape: f32[2,16,512], index: 3, kind: output, shape index: {}]
  %s4 = sld [smem:[#allocation0]]
  $region65: #{feature_forward_unit.1} parent=0
    _
  %s6 = ssub.s32 1, %s4
  %s7 = scalar_select 0, %s6, %s4
  $region1: #{feature_forward_unit.1} parent=0
    #allocation3 [shape = 'u8[3145728]{0}', space=vmem, size = 0x300000, scoped, tag = 'input window, operand 1']
    #allocation4 [shape = 's32[2]{0}', space=sflag, size = 0x8, scoped, tag = 'scoped memory for feature_forward_unit.1']
    #allocation5 [shape = 'u8[4096]{0}', space=vmem, size = 0x1000, scoped, tag = 'input window, operand 2']
    #allocation6 [shape = 's32[2]{0}', space=sflag, size = 0x8, scoped, tag = 'scoped memory for feature_forward_unit.1']
    %8 = vsyncpa [#allocation4], 0
    %s9 = scalar_lea.sflag [#allocation4], 1
    %10 = vsyncpa %s9, 0
    %11 = vsyncpa [#allocation6], 0
    %s12 = scalar_lea.sflag [#allocation6], 1
    %13 = vsyncpa %s12, 0
    loop: start=0, step=1, limit=7
    $region2: #{feature_forward_unit.1} parent=1 // loop_pre_header
      _
    $region3: #{feature_forward_unit.1} parent=1 // loop_header
      %s15 = sphi 0, %s19
      %p16 = scmp.ge.s32.totalorder %s15, 7
      %s23 = sphi 0, %s23
      %s25 = sphi 0, %s23
      %s26 = sphi 0, %s25
      %s40 = sphi 0, %s26
      %s46 = sphi 0, %s48
      %s49 = sphi 0, %s46
      %s50 = sphi 0, %s49
      %s66 = sphi 0, %s50
      %s72 = sphi 0, %s74
      %s75 = sphi 0, %s72
      %s76 = sphi 0, %s75
      %s92 = sphi 0, %s76
      %s96 = sphi 0, %s96
      %s98 = sphi 0, %s96
      %s99 = sphi 0, %s98
      %s113 = sphi 0, %s99
    $region4: #{feature_forward_unit.1} parent=1 // loop_header_branch
      %18 = sbr.rel (%p16) target = $region8
    $region5: #{feature_forward_unit.1} parent=1 // loop_body
      %s20 = ssub.s32 %s15, 1
      %s21 = ssub.s32 %s15, 2
      %s22 = sadd.s32 %s15, 1
      %s24 = sadd.s32 %s23, 1
      %p27 = scmp.eq.s32.totalorder %s15, 4
      %p28 = scmp.ne.s32.totalorder %s23, %s25
      %p29 = scmp.eq.s32.totalorder %s15, 0
      %p30 = por %p28, %p29
      %p31 = scmp.ne.s32.totalorder %s23, %s25
      %p32 = scmp.eq.s32.totalorder %s20, 4
      %p33 = por %p31, %p32
      %p34 = scmp.ne.s32.totalorder %s25, %s26
      %p35 = scmp.eq.s32.totalorder %s20, 0
      %p36 = por %p34, %p35
      %p37 = scmp.ne.s32.totalorder %s25, %s26
      %p38 = scmp.eq.s32.totalorder %s21, 4
      %p39 = por %p37, %p38
      %p41 = scmp.ne.s32.totalorder %s26, %s40
      %p42 = scmp.eq.s32.totalorder %s21, 0
      %p43 = por %p41, %p42
      %s44 = ssub.s32 %s15, %s22
      %p45 = scmp.eq.s32.totalorder %s44, 0
      %s47 = sadd.s32 %s46, 1
      %s48 = scalar_select %p45, %s46, %s47
      %p51 = pneg %p45
      %p52 = scmp.eq.s32.totalorder %s15, 4
      %p53 = por %p51, %p52
      %p54 = scmp.ne.s32.totalorder %s46, %s49
      %p55 = scmp.eq.s32.totalorder %s15, 0
      %p56 = por %p54, %p55
      %p57 = scmp.ne.s32.totalorder %s46, %s49
      %p58 = scmp.eq.s32.totalorder %s20, 4
      %p59 = por %p57, %p58
      %p60 = scmp.ne.s32.totalorder %s49, %s50
      %p61 = scmp.eq.s32.totalorder %s20, 0
      %p62 = por %p60, %p61
      %p63 = scmp.ne.s32.totalorder %s49, %s50
      %p64 = scmp.eq.s32.totalorder %s21, 4
      %p65 = por %p63, %p64
      %p67 = scmp.ne.s32.totalorder %s50, %s66
      %p68 = scmp.eq.s32.totalorder %s21, 0
      %p69 = por %p67, %p68
      %s70 = ssub.s32 %s15, %s22
      %p71 = scmp.eq.s32.totalorder %s70, 0
      %s73 = sadd.s32 %s72, 1
      %s74 = scalar_select %p71, %s72, %s73
      %p77 = pneg %p71
      %p78 = scmp.eq.s32.totalorder %s15, 4
      %p79 = por %p77, %p78
      %p80 = scmp.ne.s32.totalorder %s72, %s75
      %p81 = scmp.eq.s32.totalorder %s15, 0
      %p82 = por %p80, %p81
      %p83 = scmp.ne.s32.totalorder %s72, %s75
      %p84 = scmp.eq.s32.totalorder %s20, 4
      %p85 = por %p83, %p84
      %p86 = scmp.ne.s32.totalorder %s75, %s76
      %p87 = scmp.eq.s32.totalorder %s20, 0
      %p88 = por %p86, %p87
      %p89 = scmp.ne.s32.totalorder %s75, %s76
      %p90 = scmp.eq.s32.totalorder %s21, 4
      %p91 = por %p89, %p90
      %p93 = scmp.ne.s32.totalorder %s76, %s92
      %p94 = scmp.eq.s32.totalorder %s21, 0
      %p95 = por %p93, %p94
      %s97 = sadd.s32 %s96, 1
      %p100 = scmp.eq.s32.totalorder %s15, 4
      %p101 = scmp.ne.s32.totalorder %s96, %s98
      %p102 = scmp.eq.s32.totalorder %s15, 0
      %p103 = por %p101, %p102
      %p104 = scmp.ne.s32.totalorder %s96, %s98
      %p105 = scmp.eq.s32.totalorder %s20, 4
      %p106 = por %p104, %p105
      %p107 = scmp.ne.s32.totalorder %s98, %s99
      %p108 = scmp.eq.s32.totalorder %s20, 0
      %p109 = por %p107, %p108
      %p110 = scmp.ne.s32.totalorder %s98, %s99
      %p111 = scmp.eq.s32.totalorder %s21, 4
      %p112 = por %p110, %p111
      %p114 = scmp.ne.s32.totalorder %s99, %s113
      %p115 = scmp.eq.s32.totalorder %s21, 0
      %p116 = por %p114, %p115
      %p117 = scmp.le.s32.totalorder 1, %s15
      %p118 = scmp.lt.s32.totalorder %s15, 6
      %p119 = pnand %p117, %p118
      %p120 = pneg %p119
      // Predicated region
      $region9: #{feature_forward_unit.1} parent=5 // pred_check
        _
      $region10: #{feature_forward_unit.1} parent=5 // pred_check_branch
        %122 = sbr.rel (%p119) target = $region12
      $region11: #{feature_forward_unit.1} parent=5 // pred_region
        %s123 = ssub.s32 %s15, 1
        // Predicated region
        $region13: #{feature_forward_unit.1} parent=11 // pred_check
          %p124 = pneg %p36
        $region14: #{feature_forward_unit.1} parent=11 // pred_check_branch
          %126 = sbr.rel (%p124) target = $region16
        $region15: #{feature_forward_unit.1} parent=11 // pred_region
          _
        $region16: #{feature_forward_unit.1} parent=11 // pred_fallthru
          _
      $region12: #{feature_forward_unit.1} parent=5 // pred_fallthru
        _
      %p127 = scmp.lt.s32.totalorder %s15, 5
      // Predicated region
      $region17: #{feature_forward_unit.1} parent=5 // pred_check
        %p128 = pneg %p127
      $region18: #{feature_forward_unit.1} parent=5 // pred_check_branch
        %130 = sbr.rel (%p128) target = $region20
      $region19: #{feature_forward_unit.1} parent=5 // pred_region
        // Predicated region
        $region21: #{feature_forward_unit.1} parent=19 // pred_check
          %p131 = pneg %p56
        $region22: #{feature_forward_unit.1} parent=19 // pred_check_branch
          %133 = sbr.rel (%p131) target = $region24
        $region23: #{feature_forward_unit.1} parent=19 // pred_region
          %s134 = sand.u32 %s46, 1
          %s135 = scalar_lea.sflag [#allocation4], %s134
          %s136 = sand.u32 %s46, 1
          %s137 = smul.addr %s136, 3072
          %s138 = scalar_lea.vmem [#allocation3], %s137
          %s140 = ssub.s32 49152, 49152
          %141 = vsyncadd %s135, %s140
          %s142 = smul.addr %s15, 768
          %s143 = smul.addr %s142, 64
          %s144 = scalar_lea.hbm %s1, %s143
          %s145 = sshll.u32 %s138, 4
          %s146 = int_to_ptr.vmem [resolvable:$true] %s145
          %151 = dma.hbm_to_vmem [thread:$0]  %s144, 49152, %s146, %s135, 256, 256, 16
        $region24: #{feature_forward_unit.1} parent=19 // pred_fallthru
          _
        // Predicated region
        $region25: #{feature_forward_unit.1} parent=19 // pred_check
          %p152 = pneg %p82
        $region26: #{feature_forward_unit.1} parent=19 // pred_check_branch
          %154 = sbr.rel (%p152) target = $region28
        $region27: #{feature_forward_unit.1} parent=19 // pred_region
          %s155 = sand.u32 %s72, 1
          %s156 = scalar_lea.sflag [#allocation6], %s155
          %s157 = sand.u32 %s72, 1
          %s158 = smul.addr %s157, 4
          %s159 = scalar_lea.vmem [#allocation5], %s158
          %s161 = ssub.s32 64, 64
          %162 = vsyncadd %s156, %s161
          %s163 = smul.addr %s15, 4
          %s164 = smul.addr %s163, 16
          %s165 = scalar_lea.hbm %s2, %s164
          %s167 = sshll.u32 %s159, 4
          %s168 = int_to_ptr.vmem [resolvable:$true] %s167
          %170 = dma.hbm_to_vmem [thread:$0]  %s165, 64, %s168, %s156
        $region28: #{feature_forward_unit.1} parent=19 // pred_fallthru
          _
      $region20: #{feature_forward_unit.1} parent=5 // pred_fallthru
        _
      %p171 = scmp.le.s32.totalorder 1, %s15
      %p172 = scmp.lt.s32.totalorder %s15, 6
      %p173 = pnand %p171, %p172
      %p174 = pneg %p173
      // Predicated region
      $region29: #{feature_forward_unit.1} parent=5 // pred_check
        _
      $region30: #{feature_forward_unit.1} parent=5 // pred_check_branch
        %176 = sbr.rel (%p173) target = $region32
      $region31: #{feature_forward_unit.1} parent=5 // pred_region
        %s177 = ssub.s32 %s15, 1
        %s178 = sand.u32 %s49, 1
        %s179 = scalar_lea.sflag [#allocation4], %s178
        %s180 = sand.u32 %s49, 1
        %s181 = smul.addr %s180, 3072
        %s182 = scalar_lea.vmem [#allocation3], %s181
        // Predicated region
        $region33: #{feature_forward_unit.1} parent=31 // pred_check
          %p183 = pneg %p62
        $region34: #{feature_forward_unit.1} parent=31 // pred_check_branch
          %185 = sbr.rel (%p183) target = $region36
        $region35: #{feature_forward_unit.1} parent=31 // pred_region
          %186 = dma.done %s179, 49152
        $region36: #{feature_forward_unit.1} parent=31 // pred_fallthru
          _
        %s187 = sand.u32 %s75, 1
        %s188 = scalar_lea.sflag [#allocation6], %s187
        %s189 = sand.u32 %s75, 1
        %s190 = smul.addr %s189, 4
        %s191 = scalar_lea.vmem [#allocation5], %s190
        // Predicated region
        $region37: #{feature_forward_unit.1} parent=31 // pred_check
          %p192 = pneg %p88
        $region38: #{feature_forward_unit.1} parent=31 // pred_check_branch
          %194 = sbr.rel (%p192) target = $region40
        $region39: #{feature_forward_unit.1} parent=31 // pred_region
          %195 = dma.done %s188, 64
        $region40: #{feature_forward_unit.1} parent=31 // pred_fallthru
          _
        %p196 = pneg %p36
        %p197 = pneg %p33
        %s198 = sand.u32 %s49, 1
        %s199 = scalar_lea.sflag [#allocation4], %s198
        %s200 = sand.u32 %s49, 1
        %s201 = smul.addr %s200, 3072
        %s202 = scalar_lea.vmem [#allocation3], %s201
        %p203 = pneg %p62
        %p204 = pneg %p59
        %s205 = sand.u32 %s75, 1
        %s206 = scalar_lea.sflag [#allocation6], %s205
        %s207 = sand.u32 %s75, 1
        %s208 = smul.addr %s207, 4
        %s209 = scalar_lea.vmem [#allocation5], %s208
        %p210 = pneg %p88
        %p211 = pneg %p85
        %p212 = pneg %p109
        %p213 = pneg %p106
        %p214 = scmp.eq.s32.totalorder %s20, 0
        // Predicated region
        $region41: #{feature_forward_unit.1} parent=31 // pred_check
          %p215 = pneg %p214
        $region42: #{feature_forward_unit.1} parent=31 // pred_check_branch
          %217 = sbr.rel (%p215) target = $region44
        $region43: #{feature_forward_unit.1} parent=31 // pred_region
          %218 = vst [vmem:[#allocation2] sm:$0xff] 0.0
          %219 = vst [vmem:[#allocation2 + $0x8] sm:$0xff] 0.0
          %220 = vst [vmem:[#allocation2 + $0x10] sm:$0xff] 0.0
          %221 = vst [vmem:[#allocation2 + $0x18] sm:$0xff] 0.0
          %222 = vst [vmem:[#allocation2 + $0x20] sm:$0xff] 0.0
          %223 = vst [vmem:[#allocation2 + $0x28] sm:$0xff] 0.0
          %224 = vst [vmem:[#allocation2 + $0x30] sm:$0xff] 0.0
          %225 = vst [vmem:[#allocation2 + $0x38] sm:$0xff] 0.0
          %226 = vst [vmem:[#allocation2 + $0x40] sm:$0xff] 0.0
          %227 = vst [vmem:[#allocation2 + $0x48] sm:$0xff] 0.0
          %228 = vst [vmem:[#allocation2 + $0x50] sm:$0xff] 0.0
          %229 = vst [vmem:[#allocation2 + $0x58] sm:$0xff] 0.0
          %230 = vst [vmem:[#allocation2 + $0x60] sm:$0xff] 0.0
          %231 = vst [vmem:[#allocation2 + $0x68] sm:$0xff] 0.0
          %232 = vst [vmem:[#allocation2 + $0x70] sm:$0xff] 0.0
          %233 = vst [vmem:[#allocation2 + $0x78] sm:$0xff] 0.0
          %234 = vst [vmem:[#allocation2 + $0x80] sm:$0x7] 0.0
          %235 = vst [vmem:[#allocation2 + $0x88] sm:$0x7] 0.0
          %236 = vst [vmem:[#allocation2 + $0x90] sm:$0x7] 0.0
          %237 = vst [vmem:[#allocation2 + $0x98] sm:$0x7] 0.0
          %v238 = vld [vmem:[%s0] sm:$0xff]
          %v239 = vld [vmem:[%s0 + $0x8] sm:$0xff]
          %v240 = vld [vmem:[%s0 + $0x10] sm:$0xff]
          %v241 = vld [vmem:[%s0 + $0x18] sm:$0xff]
          %v242 = vld [vmem:[%s0 + $0x20] sm:$0xff]
          %v243 = vld [vmem:[%s0 + $0x28] sm:$0xff]
          %v244 = vld [vmem:[%s0 + $0x30] sm:$0xff]
          %v245 = vld [vmem:[%s0 + $0x38] sm:$0xff]
          %vm254 = vcmask 1040384
          %v255 = vrot.slane %v238, 7
          %v256 = vrot.slane %v239, 7
          %v257 = vrot.slane %v240, 7
          %v258 = vrot.slane %v241, 7
          %v259 = vrot.slane %v242, 7
          %v260 = vsel %vm254, %v255, %v259
          %v261 = vrot.slane %v243, 7
          %v262 = vsel %vm254, %v256, %v261
          %v263 = vrot.slane %v244, 7
          %v264 = vsel %vm254, %v257, %v263
          %v265 = vrot.slane %v245, 7
          %v266 = vsel %vm254, %v258, %v265
          %279 = vst [vmem:[#allocation2] sm:$0xfe] %v255
          %280 = vst [vmem:[#allocation2 + $0x8] sm:$0xfe] %v256
          %281 = vst [vmem:[#allocation2 + $0x10] sm:$0xfe] %v257
          %282 = vst [vmem:[#allocation2 + $0x18] sm:$0xfe] %v258
          %283 = vst [vmem:[#allocation2 + $0x20] sm:$0xff] %v260
          %284 = vst [vmem:[#allocation2 + $0x28] sm:$0xff] %v262
          %285 = vst [vmem:[#allocation2 + $0x30] sm:$0xff] %v264
          %286 = vst [vmem:[#allocation2 + $0x38] sm:$0xff] %v266
          %287 = vst [vmem:[#allocation2 + $0x40] sm:$0x1] %v259
          %288 = vst [vmem:[#allocation2 + $0x48] sm:$0x1] %v261
          %289 = vst [vmem:[#allocation2 + $0x50] sm:$0x1] %v263
          %290 = vst [vmem:[#allocation2 + $0x58] sm:$0x1] %v265
          %s291 = scalar_lea.vmem %s0, 64
          %v292 = vld [vmem:[%s291] sm:$0xff]
          %v293 = vld [vmem:[%s291 + $0x8] sm:$0xff]
          %v294 = vld [vmem:[%s291 + $0x10] sm:$0xff]
          %v295 = vld [vmem:[%s291 + $0x18] sm:$0xff]
          %v296 = vld [vmem:[%s291 + $0x20] sm:$0xff]
          %v297 = vld [vmem:[%s291 + $0x28] sm:$0xff]
          %v298 = vld [vmem:[%s291 + $0x30] sm:$0xff]
          %v299 = vld [vmem:[%s291 + $0x38] sm:$0xff]
          %vm308 = vcmask 1041408
          %v309 = vrot.slane %v292, 6
          %v310 = vrot.slane %v293, 6
          %v311 = vrot.slane %v294, 6
          %v312 = vrot.slane %v295, 6
          %v313 = vrot.slane %v296, 6
          %v314 = vsel %vm308, %v309, %v313
          %v315 = vrot.slane %v297, 6
          %v316 = vsel %vm308, %v310, %v315
          %v317 = vrot.slane %v298, 6
          %v318 = vsel %vm308, %v311, %v317
          %v319 = vrot.slane %v299, 6
          %v320 = vsel %vm308, %v312, %v319
          %333 = vst [vmem:[#allocation2 + $0x40] sm:$0xfc] %v309
          %334 = vst [vmem:[#allocation2 + $0x48] sm:$0xfc] %v310
          %335 = vst [vmem:[#allocation2 + $0x50] sm:$0xfc] %v311
          %336 = vst [vmem:[#allocation2 + $0x58] sm:$0xfc] %v312
          %337 = vst [vmem:[#allocation2 + $0x60] sm:$0xff] %v314
          %338 = vst [vmem:[#allocation2 + $0x68] sm:$0xff] %v316
          %339 = vst [vmem:[#allocation2 + $0x70] sm:$0xff] %v318
          %340 = vst [vmem:[#allocation2 + $0x78] sm:$0xff] %v320
          %341 = vst [vmem:[#allocation2 + $0x80] sm:$0x3] %v313
          %342 = vst [vmem:[#allocation2 + $0x88] sm:$0x3] %v315
          %343 = vst [vmem:[#allocation2 + $0x90] sm:$0x3] %v317
          %344 = vst [vmem:[#allocation2 + $0x98] sm:$0x3] %v319
        $region44: #{feature_forward_unit.1} parent=31 // pred_fallthru
          _
        %v345 = vld [vmem:[#allocation2] sm:$0xff]
        %v346 = vld [vmem:[#allocation2 + $0x8] sm:$0xff]
        %v347 = vld [vmem:[#allocation2 + $0x10] sm:$0xff]
        %v348 = vld [vmem:[#allocation2 + $0x18] sm:$0xff]
        %v349 = vld [vmem:[#allocation2 + $0x20] sm:$0xff]
        %v350 = vld [vmem:[#allocation2 + $0x28] sm:$0xff]
        %v351 = vld [vmem:[#allocation2 + $0x30] sm:$0xff]
        %v352 = vld [vmem:[#allocation2 + $0x38] sm:$0xff]
        %v353 = vld [vmem:[#allocation2 + $0x40] sm:$0xff]
        %v354 = vld [vmem:[#allocation2 + $0x48] sm:$0xff]
        %v355 = vld [vmem:[#allocation2 + $0x50] sm:$0xff]
        %v356 = vld [vmem:[#allocation2 + $0x58] sm:$0xff]
        %v357 = vld [vmem:[#allocation2 + $0x60] sm:$0xff]
        %v358 = vld [vmem:[#allocation2 + $0x68] sm:$0xff]
        %v359 = vld [vmem:[#allocation2 + $0x70] sm:$0xff]
        %v360 = vld [vmem:[#allocation2 + $0x78] sm:$0xff]
        %v361 = vld [vmem:[#allocation2 + $0x80] sm:$0x1]
        %v362 = vld [vmem:[#allocation2 + $0x88] sm:$0x1]
        %v363 = vld [vmem:[#allocation2 + $0x90] sm:$0x1]
        %v364 = vld [vmem:[#allocation2 + $0x98] sm:$0x1]
        %v365 = vpack.c.bf16 %v349, %v345
        %v366 = vpack.c.bf16 %v350, %v346
        %v367 = vpack.c.bf16 %v351, %v347
        %v368 = vpack.c.bf16 %v352, %v348
        %v369 = vpack.c.bf16 %v357, %v353
        %v370 = vpack.c.bf16 %v358, %v354
        %v371 = vpack.c.bf16 %v359, %v355
        %v372 = vpack.c.bf16 %v360, %v356
        %v373 = vpack.c.bf16 %v361, %v361
        %v374 = vpack.c.bf16 %v362, %v362
        %v375 = vpack.c.bf16 %v363, %v363
        %v376 = vpack.c.bf16 %v364, %v364
        %v377 = vld [vmem:[%s182] sm:$0xff]
        %v378 = vld [vmem:[%s182 + $0x8] sm:$0xff]
        %v379 = vld [vmem:[%s182 + $0x10] sm:$0xff]
        %v380 = vld [vmem:[%s182 + $0x18] sm:$0xff]
        %v381 = vld [vmem:[%s182 + $0x20] sm:$0xff]
        %v382 = vld [vmem:[%s182 + $0x28] sm:$0xff]
        %v383 = vld [vmem:[%s182 + $0x30] sm:$0xff]
        %v384 = vld [vmem:[%s182 + $0x38] sm:$0xff]
        %v385 = vld [vmem:[%s182 + $0x40] sm:$0xff]
        %v386 = vld [vmem:[%s182 + $0x48] sm:$0xff]
        %v387 = vld [vmem:[%s182 + $0x50] sm:$0xff]
        %v388 = vld [vmem:[%s182 + $0x58] sm:$0xff]
        %v389 = vld [vmem:[%s182 + $0x60] sm:$0xff]
        %v390 = vld [vmem:[%s182 + $0x68] sm:$0xff]
        %v391 = vld [vmem:[%s182 + $0x70] sm:$0xff]
        %v392 = vld [vmem:[%s182 + $0x78] sm:$0xff]
        %v393 = vld [vmem:[%s182 + $0x80] sm:$0xff]
        %v394 = vld [vmem:[%s182 + $0x88] sm:$0xff]
        %v395 = vld [vmem:[%s182 + $0x90] sm:$0xff]
        %v396 = vld [vmem:[%s182 + $0x98] sm:$0xff]
        %v397 = vld [vmem:[%s182 + $0xa0] sm:$0xff]
        %v398 = vld [vmem:[%s182 + $0xa8] sm:$0xff]
        %v399 = vld [vmem:[%s182 + $0xb0] sm:$0xff]
        %v400 = vld [vmem:[%s182 + $0xb8] sm:$0xff]
        %v401 = vld [vmem:[%s182 + $0xc0] sm:$0xff]
        %v402 = vld [vmem:[%s182 + $0xc8] sm:$0xff]
        %v403 = vld [vmem:[%s182 + $0xd0] sm:$0xff]
        %v404 = vld [vmem:[%s182 + $0xd8] sm:$0xff]
        %v405 = vld [vmem:[%s182 + $0xe0] sm:$0xff]
        %v406 = vld [vmem:[%s182 + $0xe8] sm:$0xff]
        %v407 = vld [vmem:[%s182 + $0xf0] sm:$0xff]
        %v408 = vld [vmem:[%s182 + $0xf8] sm:$0xff]
        %v409 = vld [vmem:[%s182 + $0x100] sm:$0xff]
        %v410 = vld [vmem:[%s182 + $0x108] sm:$0xff]
        %v411 = vld [vmem:[%s182 + $0x110] sm:$0xff]
        %v412 = vld [vmem:[%s182 + $0x118] sm:$0xff]
        %v413 = vld [vmem:[%s182 + $0x120] sm:$0xff]
        %v414 = vld [vmem:[%s182 + $0x128] sm:$0xff]
        %v415 = vld [vmem:[%s182 + $0x130] sm:$0xff]
        %v416 = vld [vmem:[%s182 + $0x138] sm:$0xff]
        %v417 = vld [vmem:[%s182 + $0x140] sm:$0xff]
        %v418 = vld [vmem:[%s182 + $0x148] sm:$0xff]
        %v419 = vld [vmem:[%s182 + $0x150] sm:$0xff]
        %v420 = vld [vmem:[%s182 + $0x158] sm:$0xff]
        %v421 = vld [vmem:[%s182 + $0x160] sm:$0xff]
        %v422 = vld [vmem:[%s182 + $0x168] sm:$0xff]
        %v423 = vld [vmem:[%s182 + $0x170] sm:$0xff]
        %v424 = vld [vmem:[%s182 + $0x178] sm:$0xff]
        %v425 = vld [vmem:[%s182 + $0x180] sm:$0xff]
        %v426 = vld [vmem:[%s182 + $0x188] sm:$0xff]
        %v427 = vld [vmem:[%s182 + $0x190] sm:$0xff]
        %v428 = vld [vmem:[%s182 + $0x198] sm:$0xff]
        %v429 = vld [vmem:[%s182 + $0x1a0] sm:$0xff]
        %v430 = vld [vmem:[%s182 + $0x1a8] sm:$0xff]
        %v431 = vld [vmem:[%s182 + $0x1b0] sm:$0xff]
        %v432 = vld [vmem:[%s182 + $0x1b8] sm:$0xff]
        %v433 = vld [vmem:[%s182 + $0x1c0] sm:$0xff]
        %v434 = vld [vmem:[%s182 + $0x1c8] sm:$0xff]
        %v435 = vld [vmem:[%s182 + $0x1d0] sm:$0xff]
        %v436 = vld [vmem:[%s182 + $0x1d8] sm:$0xff]
        %v437 = vld [vmem:[%s182 + $0x1e0] sm:$0xff]
        %v438 = vld [vmem:[%s182 + $0x1e8] sm:$0xff]
        %v439 = vld [vmem:[%s182 + $0x1f0] sm:$0xff]
        %v440 = vld [vmem:[%s182 + $0x1f8] sm:$0xff]
        %v441 = vld [vmem:[%s182 + $0x200] sm:$0xff]
        %v442 = vld [vmem:[%s182 + $0x208] sm:$0xff]
        %v443 = vld [vmem:[%s182 + $0x210] sm:$0xff]
        %v444 = vld [vmem:[%s182 + $0x218] sm:$0xff]
        %v445 = vld [vmem:[%s182 + $0x220] sm:$0xff]
        %v446 = vld [vmem:[%s182 + $0x228] sm:$0xff]
        %v447 = vld [vmem:[%s182 + $0x230] sm:$0xff]
        %v448 = vld [vmem:[%s182 + $0x238] sm:$0xff]
        %v449 = vld [vmem:[%s182 + $0x240] sm:$0xff]
        %v450 = vld [vmem:[%s182 + $0x248] sm:$0xff]
        %v451 = vld [vmem:[%s182 + $0x250] sm:$0xff]
        %v452 = vld [vmem:[%s182 + $0x258] sm:$0xff]
        %v453 = vld [vmem:[%s182 + $0x260] sm:$0xff]
        %v454 = vld [vmem:[%s182 + $0x268] sm:$0xff]
        %v455 = vld [vmem:[%s182 + $0x270] sm:$0xff]
        %v456 = vld [vmem:[%s182 + $0x278] sm:$0xff]
        %v457 = vld [vmem:[%s182 + $0x280] sm:$0xff]
        %v458 = vld [vmem:[%s182 + $0x288] sm:$0xff]
        %v459 = vld [vmem:[%s182 + $0x290] sm:$0xff]
        %v460 = vld [vmem:[%s182 + $0x298] sm:$0xff]
        %v461 = vld [vmem:[%s182 + $0x2a0] sm:$0xff]
        %v462 = vld [vmem:[%s182 + $0x2a8] sm:$0xff]
        %v463 = vld [vmem:[%s182 + $0x2b0] sm:$0xff]
        %v464 = vld [vmem:[%s182 + $0x2b8] sm:$0xff]
        %v465 = vld [vmem:[%s182 + $0x2c0] sm:$0xff]
        %v466 = vld [vmem:[%s182 + $0x2c8] sm:$0xff]
        %v467 = vld [vmem:[%s182 + $0x2d0] sm:$0xff]
        %v468 = vld [vmem:[%s182 + $0x2d8] sm:$0xff]
        %v469 = vld [vmem:[%s182 + $0x2e0] sm:$0xff]
        %v470 = vld [vmem:[%s182 + $0x2e8] sm:$0xff]
        %v471 = vld [vmem:[%s182 + $0x2f0] sm:$0xff]
        %v472 = vld [vmem:[%s182 + $0x2f8] sm:$0xff]
        %v473 = vld [vmem:[%s182 + $0x300] sm:$0xff]
        %v474 = vld [vmem:[%s182 + $0x308] sm:$0xff]
        %v475 = vld [vmem:[%s182 + $0x310] sm:$0xff]
        %v476 = vld [vmem:[%s182 + $0x318] sm:$0xff]
        %v477 = vld [vmem:[%s182 + $0x320] sm:$0xff]
        %v478 = vld [vmem:[%s182 + $0x328] sm:$0xff]
        %v479 = vld [vmem:[%s182 + $0x330] sm:$0xff]
        %v480 = vld [vmem:[%s182 + $0x338] sm:$0xff]
        %v481 = vld [vmem:[%s182 + $0x340] sm:$0xff]
        %v482 = vld [vmem:[%s182 + $0x348] sm:$0xff]
        %v483 = vld [vmem:[%s182 + $0x350] sm:$0xff]
        %v484 = vld [vmem:[%s182 + $0x358] sm:$0xff]
        %v485 = vld [vmem:[%s182 + $0x360] sm:$0xff]
        %v486 = vld [vmem:[%s182 + $0x368] sm:$0xff]
        %v487 = vld [vmem:[%s182 + $0x370] sm:$0xff]
        %v488 = vld [vmem:[%s182 + $0x378] sm:$0xff]
        %v489 = vld [vmem:[%s182 + $0x380] sm:$0xff]
        %v490 = vld [vmem:[%s182 + $0x388] sm:$0xff]
        %v491 = vld [vmem:[%s182 + $0x390] sm:$0xff]
        %v492 = vld [vmem:[%s182 + $0x398] sm:$0xff]
        %v493 = vld [vmem:[%s182 + $0x3a0] sm:$0xff]
        %v494 = vld [vmem:[%s182 + $0x3a8] sm:$0xff]
        %v495 = vld [vmem:[%s182 + $0x3b0] sm:$0xff]
        %v496 = vld [vmem:[%s182 + $0x3b8] sm:$0xff]
        %v497 = vld [vmem:[%s182 + $0x3c0] sm:$0xff]
        %v498 = vld [vmem:[%s182 + $0x3c8] sm:$0xff]
        %v499 = vld [vmem:[%s182 + $0x3d0] sm:$0xff]
        %v500 = vld [vmem:[%s182 + $0x3d8] sm:$0xff]
        %v501 = vld [vmem:[%s182 + $0x3e0] sm:$0xff]
        %v502 = vld [vmem:[%s182 + $0x3e8] sm:$0xff]
        %v503 = vld [vmem:[%s182 + $0x3f0] sm:$0xff]
        %v504 = vld [vmem:[%s182 + $0x3f8] sm:$0xff]
        %v505 = vld [vmem:[#allocation2] sm:$0xfe]
        %v506 = vld [vmem:[#allocation2 + $0x8] sm:$0xfe]
        %v507 = vld [vmem:[#allocation2 + $0x10] sm:$0xfe]
        %v508 = vld [vmem:[#allocation2 + $0x18] sm:$0xfe]
        %v509 = vld [vmem:[#allocation2 + $0x80] sm:$0x3]
        %v510 = vld [vmem:[#allocation2 + $0x88] sm:$0x3]
        %v511 = vld [vmem:[#allocation2 + $0x90] sm:$0x3]
        %v512 = vld [vmem:[#allocation2 + $0x98] sm:$0x3]
        %v513 = vpack.c.bf16 %v349, %v505
        %v514 = vpack.c.bf16 %v350, %v506
        %v515 = vpack.c.bf16 %v351, %v507
        %v516 = vpack.c.bf16 %v352, %v508
        %v517 = vpack.c.bf16 %v509, %v509
        %v518 = vpack.c.bf16 %v510, %v510
        %v519 = vpack.c.bf16 %v511, %v511
        %v520 = vpack.c.bf16 %v512, %v512
        %s521 = scalar_lea.vmem %s182, 1024 [#allocation3]
        %v522 = vld [vmem:[%s521] sm:$0xff]
        %v523 = vld [vmem:[%s521 + $0x8] sm:$0xff]
        %v524 = vld [vmem:[%s521 + $0x10] sm:$0xff]
        %v525 = vld [vmem:[%s521 + $0x18] sm:$0xff]
        %v526 = vld [vmem:[%s521 + $0x20] sm:$0xff]
        %v527 = vld [vmem:[%s521 + $0x28] sm:$0xff]
        %v528 = vld [vmem:[%s521 + $0x30] sm:$0xff]
        %v529 = vld [vmem:[%s521 + $0x38] sm:$0xff]
        %v530 = vld [vmem:[%s521 + $0x40] sm:$0xff]
        %v531 = vld [vmem:[%s521 + $0x48] sm:$0xff]
        %v532 = vld [vmem:[%s521 + $0x50] sm:$0xff]
        %v533 = vld [vmem:[%s521 + $0x58] sm:$0xff]
        %v534 = vld [vmem:[%s521 + $0x60] sm:$0xff]
        %v535 = vld [vmem:[%s521 + $0x68] sm:$0xff]
        %v536 = vld [vmem:[%s521 + $0x70] sm:$0xff]
        %v537 = vld [vmem:[%s521 + $0x78] sm:$0xff]
        %v538 = vld [vmem:[%s521 + $0x80] sm:$0xff]
        %v539 = vld [vmem:[%s521 + $0x88] sm:$0xff]
        %v540 = vld [vmem:[%s521 + $0x90] sm:$0xff]
        %v541 = vld [vmem:[%s521 + $0x98] sm:$0xff]
        %v542 = vld [vmem:[%s521 + $0xa0] sm:$0xff]
        %v543 = vld [vmem:[%s521 + $0xa8] sm:$0xff]
        %v544 = vld [vmem:[%s521 + $0xb0] sm:$0xff]
        %v545 = vld [vmem:[%s521 + $0xb8] sm:$0xff]
        %v546 = vld [vmem:[%s521 + $0xc0] sm:$0xff]
        %v547 = vld [vmem:[%s521 + $0xc8] sm:$0xff]
        %v548 = vld [vmem:[%s521 + $0xd0] sm:$0xff]
        %v549 = vld [vmem:[%s521 + $0xd8] sm:$0xff]
        %v550 = vld [vmem:[%s521 + $0xe0] sm:$0xff]
        %v551 = vld [vmem:[%s521 + $0xe8] sm:$0xff]
        %v552 = vld [vmem:[%s521 + $0xf0] sm:$0xff]
        %v553 = vld [vmem:[%s521 + $0xf8] sm:$0xff]
        %v554 = vld [vmem:[%s521 + $0x100] sm:$0xff]
        %v555 = vld [vmem:[%s521 + $0x108] sm:$0xff]
        %v556 = vld [vmem:[%s521 + $0x110] sm:$0xff]
        %v557 = vld [vmem:[%s521 + $0x118] sm:$0xff]
        %v558 = vld [vmem:[%s521 + $0x120] sm:$0xff]
        %v559 = vld [vmem:[%s521 + $0x128] sm:$0xff]
        %v560 = vld [vmem:[%s521 + $0x130] sm:$0xff]
        %v561 = vld [vmem:[%s521 + $0x138] sm:$0xff]
        %v562 = vld [vmem:[%s521 + $0x140] sm:$0xff]
        %v563 = vld [vmem:[%s521 + $0x148] sm:$0xff]
        %v564 = vld [vmem:[%s521 + $0x150] sm:$0xff]
        %v565 = vld [vmem:[%s521 + $0x158] sm:$0xff]
        %v566 = vld [vmem:[%s521 + $0x160] sm:$0xff]
        %v567 = vld [vmem:[%s521 + $0x168] sm:$0xff]
        %v568 = vld [vmem:[%s521 + $0x170] sm:$0xff]
        %v569 = vld [vmem:[%s521 + $0x178] sm:$0xff]
        %v570 = vld [vmem:[%s521 + $0x180] sm:$0xff]
        %v571 = vld [vmem:[%s521 + $0x188] sm:$0xff]
        %v572 = vld [vmem:[%s521 + $0x190] sm:$0xff]
        %v573 = vld [vmem:[%s521 + $0x198] sm:$0xff]
        %v574 = vld [vmem:[%s521 + $0x1a0] sm:$0xff]
        %v575 = vld [vmem:[%s521 + $0x1a8] sm:$0xff]
        %v576 = vld [vmem:[%s521 + $0x1b0] sm:$0xff]
        %v577 = vld [vmem:[%s521 + $0x1b8] sm:$0xff]
        %v578 = vld [vmem:[%s521 + $0x1c0] sm:$0xff]
        %v579 = vld [vmem:[%s521 + $0x1c8] sm:$0xff]
        %v580 = vld [vmem:[%s521 + $0x1d0] sm:$0xff]
        %v581 = vld [vmem:[%s521 + $0x1d8] sm:$0xff]
        %v582 = vld [vmem:[%s521 + $0x1e0] sm:$0xff]
        %v583 = vld [vmem:[%s521 + $0x1e8] sm:$0xff]
        %v584 = vld [vmem:[%s521 + $0x1f0] sm:$0xff]
        %v585 = vld [vmem:[%s521 + $0x1f8] sm:$0xff]
        %v586 = vld [vmem:[%s521 + $0x200] sm:$0xff]
        %v587 = vld [vmem:[%s521 + $0x208] sm:$0xff]
        %v588 = vld [vmem:[%s521 + $0x210] sm:$0xff]
        %v589 = vld [vmem:[%s521 + $0x218] sm:$0xff]
        %v590 = vld [vmem:[%s521 + $0x220] sm:$0xff]
        %v591 = vld [vmem:[%s521 + $0x228] sm:$0xff]
        %v592 = vld [vmem:[%s521 + $0x230] sm:$0xff]
        %v593 = vld [vmem:[%s521 + $0x238] sm:$0xff]
        %v594 = vld [vmem:[%s521 + $0x240] sm:$0xff]
        %v595 = vld [vmem:[%s521 + $0x248] sm:$0xff]
        %v596 = vld [vmem:[%s521 + $0x250] sm:$0xff]
        %v597 = vld [vmem:[%s521 + $0x258] sm:$0xff]
        %v598 = vld [vmem:[%s521 + $0x260] sm:$0xff]
        %v599 = vld [vmem:[%s521 + $0x268] sm:$0xff]
        %v600 = vld [vmem:[%s521 + $0x270] sm:$0xff]
        %v601 = vld [vmem:[%s521 + $0x278] sm:$0xff]
        %v602 = vld [vmem:[%s521 + $0x280] sm:$0xff]
        %v603 = vld [vmem:[%s521 + $0x288] sm:$0xff]
        %v604 = vld [vmem:[%s521 + $0x290] sm:$0xff]
        %v605 = vld [vmem:[%s521 + $0x298] sm:$0xff]
        %v606 = vld [vmem:[%s521 + $0x2a0] sm:$0xff]
        %v607 = vld [vmem:[%s521 + $0x2a8] sm:$0xff]
        %v608 = vld [vmem:[%s521 + $0x2b0] sm:$0xff]
        %v609 = vld [vmem:[%s521 + $0x2b8] sm:$0xff]
        %v610 = vld [vmem:[%s521 + $0x2c0] sm:$0xff]
        %v611 = vld [vmem:[%s521 + $0x2c8] sm:$0xff]
        %v612 = vld [vmem:[%s521 + $0x2d0] sm:$0xff]
        %v613 = vld [vmem:[%s521 + $0x2d8] sm:$0xff]
        %v614 = vld [vmem:[%s521 + $0x2e0] sm:$0xff]
        %v615 = vld [vmem:[%s521 + $0x2e8] sm:$0xff]
        %v616 = vld [vmem:[%s521 + $0x2f0] sm:$0xff]
        %v617 = vld [vmem:[%s521 + $0x2f8] sm:$0xff]
        %v618 = vld [vmem:[%s521 + $0x300] sm:$0xff]
        %v619 = vld [vmem:[%s521 + $0x308] sm:$0xff]
        %v620 = vld [vmem:[%s521 + $0x310] sm:$0xff]
        %v621 = vld [vmem:[%s521 + $0x318] sm:$0xff]
        %v622 = vld [vmem:[%s521 + $0x320] sm:$0xff]
        %v623 = vld [vmem:[%s521 + $0x328] sm:$0xff]
        %v624 = vld [vmem:[%s521 + $0x330] sm:$0xff]
        %v625 = vld [vmem:[%s521 + $0x338] sm:$0xff]
        %v626 = vld [vmem:[%s521 + $0x340] sm:$0xff]
        %v627 = vld [vmem:[%s521 + $0x348] sm:$0xff]
        %v628 = vld [vmem:[%s521 + $0x350] sm:$0xff]
        %v629 = vld [vmem:[%s521 + $0x358] sm:$0xff]
        %v630 = vld [vmem:[%s521 + $0x360] sm:$0xff]
        %v631 = vld [vmem:[%s521 + $0x368] sm:$0xff]
        %v632 = vld [vmem:[%s521 + $0x370] sm:$0xff]
        %v633 = vld [vmem:[%s521 + $0x378] sm:$0xff]
        %v634 = vld [vmem:[%s521 + $0x380] sm:$0xff]
        %v635 = vld [vmem:[%s521 + $0x388] sm:$0xff]
        %v636 = vld [vmem:[%s521 + $0x390] sm:$0xff]
        %v637 = vld [vmem:[%s521 + $0x398] sm:$0xff]
        %v638 = vld [vmem:[%s521 + $0x3a0] sm:$0xff]
        %v639 = vld [vmem:[%s521 + $0x3a8] sm:$0xff]
        %v640 = vld [vmem:[%s521 + $0x3b0] sm:$0xff]
        %v641 = vld [vmem:[%s521 + $0x3b8] sm:$0xff]
        %v642 = vld [vmem:[%s521 + $0x3c0] sm:$0xff]
        %v643 = vld [vmem:[%s521 + $0x3c8] sm:$0xff]
        %v644 = vld [vmem:[%s521 + $0x3d0] sm:$0xff]
        %v645 = vld [vmem:[%s521 + $0x3d8] sm:$0xff]
        %v646 = vld [vmem:[%s521 + $0x3e0] sm:$0xff]
        %v647 = vld [vmem:[%s521 + $0x3e8] sm:$0xff]
        %v648 = vld [vmem:[%s521 + $0x3f0] sm:$0xff]
        %v649 = vld [vmem:[%s521 + $0x3f8] sm:$0xff]
        %vm650 = vsmask.f32 7424
        %v652 = vshrl.u32 %v513, 16
        %v654 = vshll.u32 %v513, 16
        %v656 = vrot.slane %v654, 1
        %v657 = vor.u32 %v652, %v656
        %v659 = vshll.u32 %v369, 16
        %v661 = vrot.slane %v659, 1
        %v662 = vsel %vm650, %v657, %v661
        %v664 = vshrl.u32 %v514, 16
        %v666 = vshll.u32 %v514, 16
        %v668 = vrot.slane %v666, 1
        %v669 = vor.u32 %v664, %v668
        %v671 = vshll.u32 %v370, 16
        %v673 = vrot.slane %v671, 1
        %v674 = vsel %vm650, %v669, %v673
        %v676 = vshrl.u32 %v515, 16
        %v678 = vshll.u32 %v515, 16
        %v680 = vrot.slane %v678, 1
        %v681 = vor.u32 %v676, %v680
        %v683 = vshll.u32 %v371, 16
        %v685 = vrot.slane %v683, 1
        %v686 = vsel %vm650, %v681, %v685
        %v688 = vshrl.u32 %v516, 16
        %v690 = vshll.u32 %v516, 16
        %v692 = vrot.slane %v690, 1
        %v693 = vor.u32 %v688, %v692
        %v695 = vshll.u32 %v372, 16
        %v697 = vrot.slane %v695, 1
        %v698 = vsel %vm650, %v693, %v697
        %v699 = vshrl.u32 %v369, 16
        %v701 = vor.u32 %v699, %v661
        %v703 = vshll.u32 %v517, 16
        %v705 = vrot.slane %v703, 1
        %v706 = vsel %vm650, %v701, %v705
        %v707 = vshrl.u32 %v370, 16
        %v709 = vor.u32 %v707, %v673
        %v711 = vshll.u32 %v518, 16
        %v713 = vrot.slane %v711, 1
        %v714 = vsel %vm650, %v709, %v713
        %v715 = vshrl.u32 %v371, 16
        %v717 = vor.u32 %v715, %v685
        %v719 = vshll.u32 %v519, 16
        %v721 = vrot.slane %v719, 1
        %v722 = vsel %vm650, %v717, %v721
        %v723 = vshrl.u32 %v372, 16
        %v725 = vor.u32 %v723, %v697
        %v727 = vshll.u32 %v520, 16
        %v729 = vrot.slane %v727, 1
        %v730 = vsel %vm650, %v725, %v729
        %v731 = vshrl.u32 %v517, 16
        %v733 = vshrl.u32 %v518, 16
        %v735 = vshrl.u32 %v519, 16
        %v737 = vshrl.u32 %v520, 16
        %v879 = vunpack.c.l.b16 %v522
        %v880 = vunpack.c.h.b16 %v522
        %v881 = vunpack.c.l.b16 %v523
        %v882 = vunpack.c.h.b16 %v523
        %v883 = vunpack.c.l.b16 %v524
        %v884 = vunpack.c.h.b16 %v524
        %v885 = vunpack.c.l.b16 %v525
        %v886 = vunpack.c.h.b16 %v525
        %v887 = vunpack.c.l.b16 %v526
        %v888 = vunpack.c.h.b16 %v526
        %v889 = vunpack.c.l.b16 %v527
        %v890 = vunpack.c.h.b16 %v527
        %v891 = vunpack.c.l.b16 %v528
        %v892 = vunpack.c.h.b16 %v528
        %v893 = vunpack.c.l.b16 %v529
        %v894 = vunpack.c.h.b16 %v529
        %v895 = vunpack.c.l.b16 %v530
        %v896 = vunpack.c.h.b16 %v530
        %v897 = vunpack.c.l.b16 %v531
        %v898 = vunpack.c.h.b16 %v531
        %v899 = vunpack.c.l.b16 %v532
        %v900 = vunpack.c.h.b16 %v532
        %v901 = vunpack.c.l.b16 %v533
        %v902 = vunpack.c.h.b16 %v533
        %v903 = vunpack.c.l.b16 %v534
        %v904 = vunpack.c.h.b16 %v534
        %v905 = vunpack.c.l.b16 %v535
        %v906 = vunpack.c.h.b16 %v535
        %v907 = vunpack.c.l.b16 %v536
        %v908 = vunpack.c.h.b16 %v536
        %v909 = vunpack.c.l.b16 %v537
        %v910 = vunpack.c.h.b16 %v537
        %v911 = vunpack.c.l.b16 %v538
        %v912 = vunpack.c.h.b16 %v538
        %v913 = vunpack.c.l.b16 %v539
        %v914 = vunpack.c.h.b16 %v539
        %v915 = vunpack.c.l.b16 %v540
        %v916 = vunpack.c.h.b16 %v540
        %v917 = vunpack.c.l.b16 %v541
        %v918 = vunpack.c.h.b16 %v541
        %v919 = vunpack.c.l.b16 %v542
        %v920 = vunpack.c.h.b16 %v542
        %v921 = vunpack.c.l.b16 %v543
        %v922 = vunpack.c.h.b16 %v543
        %v923 = vunpack.c.l.b16 %v544
        %v924 = vunpack.c.h.b16 %v544
        %v925 = vunpack.c.l.b16 %v545
        %v926 = vunpack.c.h.b16 %v545
        %v927 = vunpack.c.l.b16 %v546
        %v928 = vunpack.c.h.b16 %v546
        %v929 = vunpack.c.l.b16 %v547
        %v930 = vunpack.c.h.b16 %v547
        %v931 = vunpack.c.l.b16 %v548
        %v932 = vunpack.c.h.b16 %v548
        %v933 = vunpack.c.l.b16 %v549
        %v934 = vunpack.c.h.b16 %v549
        %v935 = vunpack.c.l.b16 %v550
        %v936 = vunpack.c.h.b16 %v550
        %v937 = vunpack.c.l.b16 %v551
        %v938 = vunpack.c.h.b16 %v551
        %v939 = vunpack.c.l.b16 %v552
        %v940 = vunpack.c.h.b16 %v552
        %v941 = vunpack.c.l.b16 %v553
        %v942 = vunpack.c.h.b16 %v553
        %v943 = vunpack.c.l.b16 %v554
        %v944 = vunpack.c.h.b16 %v554
        %v945 = vunpack.c.l.b16 %v555
        %v946 = vunpack.c.h.b16 %v555
        %v947 = vunpack.c.l.b16 %v556
        %v948 = vunpack.c.h.b16 %v556
        %v949 = vunpack.c.l.b16 %v557
        %v950 = vunpack.c.h.b16 %v557
        %v951 = vunpack.c.l.b16 %v558
        %v952 = vunpack.c.h.b16 %v558
        %v953 = vunpack.c.l.b16 %v559
        %v954 = vunpack.c.h.b16 %v559
        %v955 = vunpack.c.l.b16 %v560
        %v956 = vunpack.c.h.b16 %v560
        %v957 = vunpack.c.l.b16 %v561
        %v958 = vunpack.c.h.b16 %v561
        %v959 = vunpack.c.l.b16 %v562
        %v960 = vunpack.c.h.b16 %v562
        %v961 = vunpack.c.l.b16 %v563
        %v962 = vunpack.c.h.b16 %v563
        %v963 = vunpack.c.l.b16 %v564
        %v964 = vunpack.c.h.b16 %v564
        %v965 = vunpack.c.l.b16 %v565
        %v966 = vunpack.c.h.b16 %v565
        %v967 = vunpack.c.l.b16 %v566
        %v968 = vunpack.c.h.b16 %v566
        %v969 = vunpack.c.l.b16 %v567
        %v970 = vunpack.c.h.b16 %v567
        %v971 = vunpack.c.l.b16 %v568
        %v972 = vunpack.c.h.b16 %v568
        %v973 = vunpack.c.l.b16 %v569
        %v974 = vunpack.c.h.b16 %v569
        %v975 = vunpack.c.l.b16 %v570
        %v976 = vunpack.c.h.b16 %v570
        %v977 = vunpack.c.l.b16 %v571
        %v978 = vunpack.c.h.b16 %v571
        %v979 = vunpack.c.l.b16 %v572
        %v980 = vunpack.c.h.b16 %v572
        %v981 = vunpack.c.l.b16 %v573
        %v982 = vunpack.c.h.b16 %v573
        %v983 = vunpack.c.l.b16 %v574
        %v984 = vunpack.c.h.b16 %v574
        %v985 = vunpack.c.l.b16 %v575
        %v986 = vunpack.c.h.b16 %v575
        %v987 = vunpack.c.l.b16 %v576
        %v988 = vunpack.c.h.b16 %v576
        %v989 = vunpack.c.l.b16 %v577
        %v990 = vunpack.c.h.b16 %v577
        %v991 = vunpack.c.l.b16 %v578
        %v992 = vunpack.c.h.b16 %v578
        %v993 = vunpack.c.l.b16 %v579
        %v994 = vunpack.c.h.b16 %v579
        %v995 = vunpack.c.l.b16 %v580
        %v996 = vunpack.c.h.b16 %v580
        %v997 = vunpack.c.l.b16 %v581
        %v998 = vunpack.c.h.b16 %v581
        %v999 = vunpack.c.l.b16 %v582
        %v1000 = vunpack.c.h.b16 %v582
        %v1001 = vunpack.c.l.b16 %v583
        %v1002 = vunpack.c.h.b16 %v583
        %v1003 = vunpack.c.l.b16 %v584
        %v1004 = vunpack.c.h.b16 %v584
        %v1005 = vunpack.c.l.b16 %v585
        %v1006 = vunpack.c.h.b16 %v585
        %v1007 = vunpack.c.l.b16 %v586
        %v1008 = vunpack.c.h.b16 %v586
        %v1009 = vunpack.c.l.b16 %v587
        %v1010 = vunpack.c.h.b16 %v587
        %v1011 = vunpack.c.l.b16 %v588
        %v1012 = vunpack.c.h.b16 %v588
        %v1013 = vunpack.c.l.b16 %v589
        %v1014 = vunpack.c.h.b16 %v589
        %v1015 = vunpack.c.l.b16 %v590
        %v1016 = vunpack.c.h.b16 %v590
        %v1017 = vunpack.c.l.b16 %v591
        %v1018 = vunpack.c.h.b16 %v591
        %v1019 = vunpack.c.l.b16 %v592
        %v1020 = vunpack.c.h.b16 %v592
        %v1021 = vunpack.c.l.b16 %v593
        %v1022 = vunpack.c.h.b16 %v593
        %v1023 = vunpack.c.l.b16 %v594
        %v1024 = vunpack.c.h.b16 %v594
        %v1025 = vunpack.c.l.b16 %v595
        %v1026 = vunpack.c.h.b16 %v595
        %v1027 = vunpack.c.l.b16 %v596
        %v1028 = vunpack.c.h.b16 %v596
        %v1029 = vunpack.c.l.b16 %v597
        %v1030 = vunpack.c.h.b16 %v597
        %v1031 = vunpack.c.l.b16 %v598
        %v1032 = vunpack.c.h.b16 %v598
        %v1033 = vunpack.c.l.b16 %v599
        %v1034 = vunpack.c.h.b16 %v599
        %v1035 = vunpack.c.l.b16 %v600
        %v1036 = vunpack.c.h.b16 %v600
        %v1037 = vunpack.c.l.b16 %v601
        %v1038 = vunpack.c.h.b16 %v601
        %v1039 = vunpack.c.l.b16 %v602
        %v1040 = vunpack.c.h.b16 %v602
        %v1041 = vunpack.c.l.b16 %v603
        %v1042 = vunpack.c.h.b16 %v603
        %v1043 = vunpack.c.l.b16 %v604
        %v1044 = vunpack.c.h.b16 %v604
        %v1045 = vunpack.c.l.b16 %v605
        %v1046 = vunpack.c.h.b16 %v605
        %v1047 = vunpack.c.l.b16 %v606
        %v1048 = vunpack.c.h.b16 %v606
        %v1049 = vunpack.c.l.b16 %v607
        %v1050 = vunpack.c.h.b16 %v607
        %v1051 = vunpack.c.l.b16 %v608
        %v1052 = vunpack.c.h.b16 %v608
        %v1053 = vunpack.c.l.b16 %v609
        %v1054 = vunpack.c.h.b16 %v609
        %v1055 = vunpack.c.l.b16 %v610
        %v1056 = vunpack.c.h.b16 %v610
        %v1057 = vunpack.c.l.b16 %v611
        %v1058 = vunpack.c.h.b16 %v611
        %v1059 = vunpack.c.l.b16 %v612
        %v1060 = vunpack.c.h.b16 %v612
        %v1061 = vunpack.c.l.b16 %v613
        %v1062 = vunpack.c.h.b16 %v613
        %v1063 = vunpack.c.l.b16 %v614
        %v1064 = vunpack.c.h.b16 %v614
        %v1065 = vunpack.c.l.b16 %v615
        %v1066 = vunpack.c.h.b16 %v615
        %v1067 = vunpack.c.l.b16 %v616
        %v1068 = vunpack.c.h.b16 %v616
        %v1069 = vunpack.c.l.b16 %v617
        %v1070 = vunpack.c.h.b16 %v617
        %v1071 = vunpack.c.l.b16 %v618
        %v1072 = vunpack.c.h.b16 %v618
        %v1073 = vunpack.c.l.b16 %v619
        %v1074 = vunpack.c.h.b16 %v619
        %v1075 = vunpack.c.l.b16 %v620
        %v1076 = vunpack.c.h.b16 %v620
        %v1077 = vunpack.c.l.b16 %v621
        %v1078 = vunpack.c.h.b16 %v621
        %v1079 = vunpack.c.l.b16 %v622
        %v1080 = vunpack.c.h.b16 %v622
        %v1081 = vunpack.c.l.b16 %v623
        %v1082 = vunpack.c.h.b16 %v623
        %v1083 = vunpack.c.l.b16 %v624
        %v1084 = vunpack.c.h.b16 %v624
        %v1085 = vunpack.c.l.b16 %v625
        %v1086 = vunpack.c.h.b16 %v625
        %v1087 = vunpack.c.l.b16 %v626
        %v1088 = vunpack.c.h.b16 %v626
        %v1089 = vunpack.c.l.b16 %v627
        %v1090 = vunpack.c.h.b16 %v627
        %v1091 = vunpack.c.l.b16 %v628
        %v1092 = vunpack.c.h.b16 %v628
        %v1093 = vunpack.c.l.b16 %v629
        %v1094 = vunpack.c.h.b16 %v629
        %v1095 = vunpack.c.l.b16 %v630
        %v1096 = vunpack.c.h.b16 %v630
        %v1097 = vunpack.c.l.b16 %v631
        %v1098 = vunpack.c.h.b16 %v631
        %v1099 = vunpack.c.l.b16 %v632
        %v1100 = vunpack.c.h.b16 %v632
        %v1101 = vunpack.c.l.b16 %v633
        %v1102 = vunpack.c.h.b16 %v633
        %v1103 = vunpack.c.l.b16 %v634
        %v1104 = vunpack.c.h.b16 %v634
        %v1105 = vunpack.c.l.b16 %v635
        %v1106 = vunpack.c.h.b16 %v635
        %v1107 = vunpack.c.l.b16 %v636
        %v1108 = vunpack.c.h.b16 %v636
        %v1109 = vunpack.c.l.b16 %v637
        %v1110 = vunpack.c.h.b16 %v637
        %v1111 = vunpack.c.l.b16 %v638
        %v1112 = vunpack.c.h.b16 %v638
        %v1113 = vunpack.c.l.b16 %v639
        %v1114 = vunpack.c.h.b16 %v639
        %v1115 = vunpack.c.l.b16 %v640
        %v1116 = vunpack.c.h.b16 %v640
        %v1117 = vunpack.c.l.b16 %v641
        %v1118 = vunpack.c.h.b16 %v641
        %v1119 = vunpack.c.l.b16 %v642
        %v1120 = vunpack.c.h.b16 %v642
        %v1121 = vunpack.c.l.b16 %v643
        %v1122 = vunpack.c.h.b16 %v643
        %v1123 = vunpack.c.l.b16 %v644
        %v1124 = vunpack.c.h.b16 %v644
        %v1125 = vunpack.c.l.b16 %v645
        %v1126 = vunpack.c.h.b16 %v645
        %v1127 = vunpack.c.l.b16 %v646
        %v1128 = vunpack.c.h.b16 %v646
        %v1129 = vunpack.c.l.b16 %v647
        %v1130 = vunpack.c.h.b16 %v647
        %v1131 = vunpack.c.l.b16 %v648
        %v1132 = vunpack.c.h.b16 %v648
        %v1133 = vunpack.c.l.b16 %v649
        %v1134 = vunpack.c.h.b16 %v649
        %v1135 = vpack.c.b16 %v883, %v879
        %v1136 = vpack.c.b16 %v884, %v880
        %v1137 = vpack.c.b16 %v885, %v881
        %v1138 = vpack.c.b16 %v886, %v882
        %v1139 = vpack.c.b16 %v891, %v887
        %v1140 = vpack.c.b16 %v892, %v888
        %v1141 = vpack.c.b16 %v893, %v889
        %v1142 = vpack.c.b16 %v894, %v890
        %v1143 = vpack.c.b16 %v899, %v895
        %v1144 = vpack.c.b16 %v900, %v896
        %v1145 = vpack.c.b16 %v901, %v897
        %v1146 = vpack.c.b16 %v902, %v898
        %v1147 = vpack.c.b16 %v907, %v903
        %v1148 = vpack.c.b16 %v908, %v904
        %v1149 = vpack.c.b16 %v909, %v905
        %v1150 = vpack.c.b16 %v910, %v906
        %v1151 = vpack.c.b16 %v915, %v911
        %v1152 = vpack.c.b16 %v916, %v912
        %v1153 = vpack.c.b16 %v917, %v913
        %v1154 = vpack.c.b16 %v918, %v914
        %v1155 = vpack.c.b16 %v923, %v919
        %v1156 = vpack.c.b16 %v924, %v920
        %v1157 = vpack.c.b16 %v925, %v921
        %v1158 = vpack.c.b16 %v926, %v922
        %v1159 = vpack.c.b16 %v931, %v927
        %v1160 = vpack.c.b16 %v932, %v928
        %v1161 = vpack.c.b16 %v933, %v929
        %v1162 = vpack.c.b16 %v934, %v930
        %v1163 = vpack.c.b16 %v939, %v935
        %v1164 = vpack.c.b16 %v940, %v936
        %v1165 = vpack.c.b16 %v941, %v937
        %v1166 = vpack.c.b16 %v942, %v938
        %v1167 = vpack.c.b16 %v947, %v943
        %v1168 = vpack.c.b16 %v948, %v944
        %v1169 = vpack.c.b16 %v949, %v945
        %v1170 = vpack.c.b16 %v950, %v946
        %v1171 = vpack.c.b16 %v955, %v951
        %v1172 = vpack.c.b16 %v956, %v952
        %v1173 = vpack.c.b16 %v957, %v953
        %v1174 = vpack.c.b16 %v958, %v954
        %v1175 = vpack.c.b16 %v963, %v959
        %v1176 = vpack.c.b16 %v964, %v960
        %v1177 = vpack.c.b16 %v965, %v961
        %v1178 = vpack.c.b16 %v966, %v962
        %v1179 = vpack.c.b16 %v971, %v967
        %v1180 = vpack.c.b16 %v972, %v968
        %v1181 = vpack.c.b16 %v973, %v969
        %v1182 = vpack.c.b16 %v974, %v970
        %v1183 = vpack.c.b16 %v979, %v975
        %v1184 = vpack.c.b16 %v980, %v976
        %v1185 = vpack.c.b16 %v981, %v977
        %v1186 = vpack.c.b16 %v982, %v978
        %v1187 = vpack.c.b16 %v987, %v983
        %v1188 = vpack.c.b16 %v988, %v984
        %v1189 = vpack.c.b16 %v989, %v985
        %v1190 = vpack.c.b16 %v990, %v986
        %v1191 = vpack.c.b16 %v995, %v991
        %v1192 = vpack.c.b16 %v996, %v992
        %v1193 = vpack.c.b16 %v997, %v993
        %v1194 = vpack.c.b16 %v998, %v994
        %v1195 = vpack.c.b16 %v1003, %v999
        %v1196 = vpack.c.b16 %v1004, %v1000
        %v1197 = vpack.c.b16 %v1005, %v1001
        %v1198 = vpack.c.b16 %v1006, %v1002
        %v1199 = vpack.c.b16 %v1011, %v1007
        %v1200 = vpack.c.b16 %v1012, %v1008
        %v1201 = vpack.c.b16 %v1013, %v1009
        %v1202 = vpack.c.b16 %v1014, %v1010
        %v1203 = vpack.c.b16 %v1019, %v1015
        %v1204 = vpack.c.b16 %v1020, %v1016
        %v1205 = vpack.c.b16 %v1021, %v1017
        %v1206 = vpack.c.b16 %v1022, %v1018
        %v1207 = vpack.c.b16 %v1027, %v1023
        %v1208 = vpack.c.b16 %v1028, %v1024
        %v1209 = vpack.c.b16 %v1029, %v1025
        %v1210 = vpack.c.b16 %v1030, %v1026
        %v1211 = vpack.c.b16 %v1035, %v1031
        %v1212 = vpack.c.b16 %v1036, %v1032
        %v1213 = vpack.c.b16 %v1037, %v1033
        %v1214 = vpack.c.b16 %v1038, %v1034
        %v1215 = vpack.c.b16 %v1043, %v1039
        %v1216 = vpack.c.b16 %v1044, %v1040
        %v1217 = vpack.c.b16 %v1045, %v1041
        %v1218 = vpack.c.b16 %v1046, %v1042
        %v1219 = vpack.c.b16 %v1051, %v1047
        %v1220 = vpack.c.b16 %v1052, %v1048
        %v1221 = vpack.c.b16 %v1053, %v1049
        %v1222 = vpack.c.b16 %v1054, %v1050
        %v1223 = vpack.c.b16 %v1059, %v1055
        %v1224 = vpack.c.b16 %v1060, %v1056
        %v1225 = vpack.c.b16 %v1061, %v1057
        %v1226 = vpack.c.b16 %v1062, %v1058
        %v1227 = vpack.c.b16 %v1067, %v1063
        %v1228 = vpack.c.b16 %v1068, %v1064
        %v1229 = vpack.c.b16 %v1069, %v1065
        %v1230 = vpack.c.b16 %v1070, %v1066
        %v1231 = vpack.c.b16 %v1075, %v1071
        %v1232 = vpack.c.b16 %v1076, %v1072
        %v1233 = vpack.c.b16 %v1077, %v1073
        %v1234 = vpack.c.b16 %v1078, %v1074
        %v1235 = vpack.c.b16 %v1083, %v1079
        %v1236 = vpack.c.b16 %v1084, %v1080
        %v1237 = vpack.c.b16 %v1085, %v1081
        %v1238 = vpack.c.b16 %v1086, %v1082
        %v1239 = vpack.c.b16 %v1091, %v1087
        %v1240 = vpack.c.b16 %v1092, %v1088
        %v1241 = vpack.c.b16 %v1093, %v1089
        %v1242 = vpack.c.b16 %v1094, %v1090
        %v1243 = vpack.c.b16 %v1099, %v1095
        %v1244 = vpack.c.b16 %v1100, %v1096
        %v1245 = vpack.c.b16 %v1101, %v1097
        %v1246 = vpack.c.b16 %v1102, %v1098
        %v1247 = vpack.c.b16 %v1107, %v1103
        %v1248 = vpack.c.b16 %v1108, %v1104
        %v1249 = vpack.c.b16 %v1109, %v1105
        %v1250 = vpack.c.b16 %v1110, %v1106
        %v1251 = vpack.c.b16 %v1115, %v1111
        %v1252 = vpack.c.b16 %v1116, %v1112
        %v1253 = vpack.c.b16 %v1117, %v1113
        %v1254 = vpack.c.b16 %v1118, %v1114
        %v1255 = vpack.c.b16 %v1123, %v1119
        %v1256 = vpack.c.b16 %v1124, %v1120
        %v1257 = vpack.c.b16 %v1125, %v1121
        %v1258 = vpack.c.b16 %v1126, %v1122
        %v1259 = vpack.c.b16 %v1131, %v1127
        %v1260 = vpack.c.b16 %v1132, %v1128
        %v1261 = vpack.c.b16 %v1133, %v1129
        %v1262 = vpack.c.b16 %v1134, %v1130
        %1391 = vmatprep.subr.bf16.mxu0 %v1164
        %1392 = vmatpush1.bf16.msra.mxu0 %v1163
        %1393 = vmatprep.subr.bf16.mxu0 %v1160
        %1394 = vmatpush1.bf16.msra.mxu0 %v1159
        %1395 = vmatprep.subr.bf16.mxu0 %v1156
        %1396 = vmatpush1.bf16.msra.mxu0 %v1155
        %1397 = vmatprep.subr.bf16.mxu0 %v1152
        %1398 = vmatpush1.bf16.msra.mxu0 %v1151
        %1399 = vmatprep.subr.bf16.mxu0 %v1148
        %1400 = vmatpush1.bf16.msra.mxu0 %v1147
        %1401 = vmatprep.subr.bf16.mxu0 %v1144
        %1402 = vmatpush1.bf16.msra.mxu0 %v1143
        %1403 = vmatprep.subr.bf16.mxu0 %v1140
        %1404 = vmatpush1.bf16.msra.mxu0 %v1139
        %1405 = vmatprep.subr.bf16.mxu0 %v1136
        %1406 = vmatpush1.bf16.msra.mxu0 %v1135
        %1407 = vmatprep.subr.bf16.mxu0 %v1196
        %1408 = vmatpush2.bf16.msra.mxu0 %v1195
        %1409 = vmatprep.subr.bf16.mxu0 %v1192
        %1410 = vmatpush2.bf16.msra.mxu0 %v1191
        %1411 = vmatprep.subr.bf16.mxu0 %v1188
        %1412 = vmatpush2.bf16.msra.mxu0 %v1187
        %1413 = vmatprep.subr.bf16.mxu0 %v1184
        %1414 = vmatpush2.bf16.msra.mxu0 %v1183
        %1415 = vmatprep.subr.bf16.mxu0 %v1180
        %1416 = vmatpush2.bf16.msra.mxu0 %v1179
        %1417 = vmatprep.subr.bf16.mxu0 %v1176
        %1418 = vmatpush2.bf16.msra.mxu0 %v1175
        %1419 = vmatprep.subr.bf16.mxu0 %v1172
        %1420 = vmatpush2.bf16.msra.mxu0 %v1171
        %1421 = vmatprep.subr.bf16.mxu0 %v1168
        %1422 = vmatpush2.bf16.msra.mxu0 %v1167
        %1423 = vmatprep.mubr.bf16.mxu0 %v674
        %1424 = vmatmul.mubr.bf16.gmra.mxu0 %v662
        %v1425 = vpop.f32.mrf.mxu0
        %v1426 = vadd.f32 0.0, %v1425
        %v1427 = vpop.f32.mrf.mxu0
        %v1428 = vadd.f32 0.0, %v1427
        %v1429 = vpop.f32.mrf.mxu0
        %v1430 = vadd.f32 0.0, %v1429
        %v1431 = vpop.f32.mrf.mxu0
        %v1432 = vadd.f32 0.0, %v1431
        %1433 = vmatprep.mubr.bf16.mxu0 %v714
        %1434 = vmatmul.mubr.bf16.gmra.mxu0 %v706
        %v1435 = vpop.f32.mrf.mxu0
        %v1436 = vadd.f32 0.0, %v1435
        %v1437 = vpop.f32.mrf.mxu0
        %v1438 = vadd.f32 0.0, %v1437
        %v1439 = vpop.f32.mrf.mxu0
        %v1440 = vadd.f32 0.0, %v1439
        %v1441 = vpop.f32.mrf.mxu0
        %v1442 = vadd.f32 0.0, %v1441
        %1443 = vmatprep.mubr.bf16.mxu0 %v733
        %1444 = vmatmul.mubr.bf16.gmra.mxu0 %v731
        %v1445 = vpop.f32.mrf.mxu0
        %v1446 = vadd.f32 0.0, %v1445
        %v1447 = vpop.f32.mrf.mxu0
        %v1448 = vadd.f32 0.0, %v1447
        %v1449 = vpop.f32.mrf.mxu0
        %v1450 = vpop.f32.mrf.mxu0
        %1451 = vdwg.mxu0
        %1452 = vmatprep.subr.bf16.mxu0 %v1228
        %1453 = vmatpush1.bf16.msra.mxu0 %v1227
        %1454 = vmatprep.subr.bf16.mxu0 %v1224
        %1455 = vmatpush1.bf16.msra.mxu0 %v1223
        %1456 = vmatprep.subr.bf16.mxu0 %v1220
        %1457 = vmatpush1.bf16.msra.mxu0 %v1219
        %1458 = vmatprep.subr.bf16.mxu0 %v1216
        %1459 = vmatpush1.bf16.msra.mxu0 %v1215
        %1460 = vmatprep.subr.bf16.mxu0 %v1212
        %1461 = vmatpush1.bf16.msra.mxu0 %v1211
        %1462 = vmatprep.subr.bf16.mxu0 %v1208
        %1463 = vmatpush1.bf16.msra.mxu0 %v1207
        %1464 = vmatprep.subr.bf16.mxu0 %v1204
        %1465 = vmatpush1.bf16.msra.mxu0 %v1203
        %1466 = vmatprep.subr.bf16.mxu0 %v1200
        %1467 = vmatpush1.bf16.msra.mxu0 %v1199
        %1468 = vmatprep.subr.bf16.mxu0 %v1260
        %1469 = vmatpush2.bf16.msra.mxu0 %v1259
        %1470 = vmatprep.subr.bf16.mxu0 %v1256
        %1471 = vmatpush2.bf16.msra.mxu0 %v1255
        %1472 = vmatprep.subr.bf16.mxu0 %v1252
        %1473 = vmatpush2.bf16.msra.mxu0 %v1251
        %1474 = vmatprep.subr.bf16.mxu0 %v1248
        %1475 = vmatpush2.bf16.msra.mxu0 %v1247
        %1476 = vmatprep.subr.bf16.mxu0 %v1244
        %1477 = vmatpush2.bf16.msra.mxu0 %v1243
        %1478 = vmatprep.subr.bf16.mxu0 %v1240
        %1479 = vmatpush2.bf16.msra.mxu0 %v1239
        %1480 = vmatprep.subr.bf16.mxu0 %v1236
        %1481 = vmatpush2.bf16.msra.mxu0 %v1235
        %1482 = vmatprep.subr.bf16.mxu0 %v1232
        %1483 = vmatpush2.bf16.msra.mxu0 %v1231
        %1484 = vmatprep.mubr.bf16.mxu0 %v698
        %1485 = vmatmul.mubr.bf16.gmra.mxu0 %v686
        %v1486 = vpop.f32.mrf.mxu0
        %v1487 = vadd.f32 %v1426, %v1486
        %v1488 = vpop.f32.mrf.mxu0
        %v1489 = vadd.f32 %v1428, %v1488
        %v1490 = vpop.f32.mrf.mxu0
        %v1491 = vadd.f32 %v1430, %v1490
        %v1492 = vpop.f32.mrf.mxu0
        %v1493 = vadd.f32 %v1432, %v1492
        %1494 = vmatprep.mubr.bf16.mxu0 %v730
        %1495 = vmatmul.mubr.bf16.gmra.mxu0 %v722
        %v1496 = vpop.f32.mrf.mxu0
        %v1497 = vadd.f32 %v1436, %v1496
        %v1498 = vpop.f32.mrf.mxu0
        %v1499 = vadd.f32 %v1438, %v1498
        %v1500 = vpop.f32.mrf.mxu0
        %v1501 = vadd.f32 %v1440, %v1500
        %v1502 = vpop.f32.mrf.mxu0
        %v1503 = vadd.f32 %v1442, %v1502
        %1504 = vmatprep.mubr.bf16.mxu0 %v737
        %1505 = vmatmul.mubr.bf16.gmra.mxu0 %v735
        %v1506 = vpop.f32.mrf.mxu0
        %v1507 = vadd.f32 %v1446, %v1506
        %v1508 = vpop.f32.mrf.mxu0
        %v1509 = vadd.f32 %v1448, %v1508
        %v1510 = vpop.f32.mrf.mxu0
        %v1511 = vpop.f32.mrf.mxu0
        %1512 = vdwg.mxu0
        %1513 = vmatprep.subr.bf16.mxu0 %v1166
        %1514 = vmatpush1.bf16.msra.mxu0 %v1165
        %1515 = vmatprep.subr.bf16.mxu0 %v1162
        %1516 = vmatpush1.bf16.msra.mxu0 %v1161
        %1517 = vmatprep.subr.bf16.mxu0 %v1158
        %1518 = vmatpush1.bf16.msra.mxu0 %v1157
        %1519 = vmatprep.subr.bf16.mxu0 %v1154
        %1520 = vmatpush1.bf16.msra.mxu0 %v1153
        %1521 = vmatprep.subr.bf16.mxu0 %v1150
        %1522 = vmatpush1.bf16.msra.mxu0 %v1149
        %1523 = vmatprep.subr.bf16.mxu0 %v1146
        %1524 = vmatpush1.bf16.msra.mxu0 %v1145
        %1525 = vmatprep.subr.bf16.mxu0 %v1142
        %1526 = vmatpush1.bf16.msra.mxu0 %v1141
        %1527 = vmatprep.subr.bf16.mxu0 %v1138
        %1528 = vmatpush1.bf16.msra.mxu0 %v1137
        %1529 = vmatprep.subr.bf16.mxu0 %v1198
        %1530 = vmatpush2.bf16.msra.mxu0 %v1197
        %1531 = vmatprep.subr.bf16.mxu0 %v1194
        %1532 = vmatpush2.bf16.msra.mxu0 %v1193
        %1533 = vmatprep.subr.bf16.mxu0 %v1190
        %1534 = vmatpush2.bf16.msra.mxu0 %v1189
        %1535 = vmatprep.subr.bf16.mxu0 %v1186
        %1536 = vmatpush2.bf16.msra.mxu0 %v1185
        %1537 = vmatprep.subr.bf16.mxu0 %v1182
        %1538 = vmatpush2.bf16.msra.mxu0 %v1181
        %1539 = vmatprep.subr.bf16.mxu0 %v1178
        %1540 = vmatpush2.bf16.msra.mxu0 %v1177
        %1541 = vmatprep.subr.bf16.mxu0 %v1174
        %1542 = vmatpush2.bf16.msra.mxu0 %v1173
        %1543 = vmatprep.subr.bf16.mxu0 %v1170
        %1544 = vmatpush2.bf16.msra.mxu0 %v1169
        %1545 = vmatprep.mubr.bf16.mxu0 %v674
        %1546 = vmatmul.mubr.bf16.gmra.mxu0 %v662
        %v1547 = vpop.f32.mrf.mxu0
        %v1548 = vadd.f32 0.0, %v1547
        %v1549 = vpop.f32.mrf.mxu0
        %v1550 = vadd.f32 0.0, %v1549
        %v1551 = vpop.f32.mrf.mxu0
        %v1552 = vadd.f32 0.0, %v1551
        %v1553 = vpop.f32.mrf.mxu0
        %v1554 = vadd.f32 0.0, %v1553
        %1555 = vmatprep.mubr.bf16.mxu0 %v714
        %1556 = vmatmul.mubr.bf16.gmra.mxu0 %v706
        %v1557 = vpop.f32.mrf.mxu0
        %v1558 = vadd.f32 0.0, %v1557
        %v1559 = vpop.f32.mrf.mxu0
        %v1560 = vadd.f32 0.0, %v1559
        %v1561 = vpop.f32.mrf.mxu0
        %v1562 = vadd.f32 0.0, %v1561
        %v1563 = vpop.f32.mrf.mxu0
        %v1564 = vadd.f32 0.0, %v1563
        %1565 = vmatprep.mubr.bf16.mxu0 %v733
        %1566 = vmatmul.mubr.bf16.gmra.mxu0 %v731
        %v1567 = vpop.f32.mrf.mxu0
        %v1568 = vadd.f32 0.0, %v1567
        %v1569 = vpop.f32.mrf.mxu0
        %v1570 = vadd.f32 0.0, %v1569
        %v1571 = vpop.f32.mrf.mxu0
        %v1572 = vpop.f32.mrf.mxu0
        %1573 = vdwg.mxu0
        %1574 = vmatprep.subr.bf16.mxu0 %v1230
        %1575 = vmatpush1.bf16.msra.mxu0 %v1229
        %1576 = vmatprep.subr.bf16.mxu0 %v1226
        %1577 = vmatpush1.bf16.msra.mxu0 %v1225
        %1578 = vmatprep.subr.bf16.mxu0 %v1222
        %1579 = vmatpush1.bf16.msra.mxu0 %v1221
        %1580 = vmatprep.subr.bf16.mxu0 %v1218
        %1581 = vmatpush1.bf16.msra.mxu0 %v1217
        %1582 = vmatprep.subr.bf16.mxu0 %v1214
        %1583 = vmatpush1.bf16.msra.mxu0 %v1213
        %1584 = vmatprep.subr.bf16.mxu0 %v1210
        %1585 = vmatpush1.bf16.msra.mxu0 %v1209
        %1586 = vmatprep.subr.bf16.mxu0 %v1206
        %1587 = vmatpush1.bf16.msra.mxu0 %v1205
        %1588 = vmatprep.subr.bf16.mxu0 %v1202
        %1589 = vmatpush1.bf16.msra.mxu0 %v1201
        %1590 = vmatprep.subr.bf16.mxu0 %v1262
        %1591 = vmatpush2.bf16.msra.mxu0 %v1261
        %1592 = vmatprep.subr.bf16.mxu0 %v1258
        %1593 = vmatpush2.bf16.msra.mxu0 %v1257
        %1594 = vmatprep.subr.bf16.mxu0 %v1254
        %1595 = vmatpush2.bf16.msra.mxu0 %v1253
        %1596 = vmatprep.subr.bf16.mxu0 %v1250
        %1597 = vmatpush2.bf16.msra.mxu0 %v1249
        %1598 = vmatprep.subr.bf16.mxu0 %v1246
        %1599 = vmatpush2.bf16.msra.mxu0 %v1245
        %1600 = vmatprep.subr.bf16.mxu0 %v1242
        %1601 = vmatpush2.bf16.msra.mxu0 %v1241
        %1602 = vmatprep.subr.bf16.mxu0 %v1238
        %1603 = vmatpush2.bf16.msra.mxu0 %v1237
        %1604 = vmatprep.subr.bf16.mxu0 %v1234
        %1605 = vmatpush2.bf16.msra.mxu0 %v1233
        %1606 = vmatprep.mubr.bf16.mxu0 %v698
        %1607 = vmatmul.mubr.bf16.gmra.mxu0 %v686
        %v1608 = vpop.f32.mrf.mxu0
        %v1609 = vadd.f32 %v1548, %v1608
        %v1610 = vpop.f32.mrf.mxu0
        %v1611 = vadd.f32 %v1550, %v1610
        %v1612 = vpop.f32.mrf.mxu0
        %v1613 = vadd.f32 %v1552, %v1612
        %v1614 = vpop.f32.mrf.mxu0
        %v1615 = vadd.f32 %v1554, %v1614
        %1616 = vmatprep.mubr.bf16.mxu0 %v730
        %1617 = vmatmul.mubr.bf16.gmra.mxu0 %v722
        %v1618 = vpop.f32.mrf.mxu0
        %v1619 = vadd.f32 %v1558, %v1618
        %v1620 = vpop.f32.mrf.mxu0
        %v1621 = vadd.f32 %v1560, %v1620
        %v1622 = vpop.f32.mrf.mxu0
        %v1623 = vadd.f32 %v1562, %v1622
        %v1624 = vpop.f32.mrf.mxu0
        %v1625 = vadd.f32 %v1564, %v1624
        %1626 = vmatprep.mubr.bf16.mxu0 %v737
        %1627 = vmatmul.mubr.bf16.gmra.mxu0 %v735
        %v1628 = vpop.f32.mrf.mxu0
        %v1629 = vadd.f32 %v1568, %v1628
        %v1630 = vpop.f32.mrf.mxu0
        %v1631 = vadd.f32 %v1570, %v1630
        %v1632 = vpop.f32.mrf.mxu0
        %v1633 = vpop.f32.mrf.mxu0
        %1634 = vdwg.mxu0
        %v1763 = vunpack.c.l.b16 %v377
        %v1764 = vunpack.c.h.b16 %v377
        %v1765 = vunpack.c.l.b16 %v378
        %v1766 = vunpack.c.h.b16 %v378
        %v1767 = vunpack.c.l.b16 %v379
        %v1768 = vunpack.c.h.b16 %v379
        %v1769 = vunpack.c.l.b16 %v380
        %v1770 = vunpack.c.h.b16 %v380
        %v1771 = vunpack.c.l.b16 %v381
        %v1772 = vunpack.c.h.b16 %v381
        %v1773 = vunpack.c.l.b16 %v382
        %v1774 = vunpack.c.h.b16 %v382
        %v1775 = vunpack.c.l.b16 %v383
        %v1776 = vunpack.c.h.b16 %v383
        %v1777 = vunpack.c.l.b16 %v384
        %v1778 = vunpack.c.h.b16 %v384
        %v1779 = vunpack.c.l.b16 %v385
        %v1780 = vunpack.c.h.b16 %v385
        %v1781 = vunpack.c.l.b16 %v386
        %v1782 = vunpack.c.h.b16 %v386
        %v1783 = vunpack.c.l.b16 %v387
        %v1784 = vunpack.c.h.b16 %v387
        %v1785 = vunpack.c.l.b16 %v388
        %v1786 = vunpack.c.h.b16 %v388
        %v1787 = vunpack.c.l.b16 %v389
        %v1788 = vunpack.c.h.b16 %v389
        %v1789 = vunpack.c.l.b16 %v390
        %v1790 = vunpack.c.h.b16 %v390
        %v1791 = vunpack.c.l.b16 %v391
        %v1792 = vunpack.c.h.b16 %v391
        %v1793 = vunpack.c.l.b16 %v392
        %v1794 = vunpack.c.h.b16 %v392
        %v1795 = vunpack.c.l.b16 %v393
        %v1796 = vunpack.c.h.b16 %v393
        %v1797 = vunpack.c.l.b16 %v394
        %v1798 = vunpack.c.h.b16 %v394
        %v1799 = vunpack.c.l.b16 %v395
        %v1800 = vunpack.c.h.b16 %v395
        %v1801 = vunpack.c.l.b16 %v396
        %v1802 = vunpack.c.h.b16 %v396
        %v1803 = vunpack.c.l.b16 %v397
        %v1804 = vunpack.c.h.b16 %v397
        %v1805 = vunpack.c.l.b16 %v398
        %v1806 = vunpack.c.h.b16 %v398
        %v1807 = vunpack.c.l.b16 %v399
        %v1808 = vunpack.c.h.b16 %v399
        %v1809 = vunpack.c.l.b16 %v400
        %v1810 = vunpack.c.h.b16 %v400
        %v1811 = vunpack.c.l.b16 %v401
        %v1812 = vunpack.c.h.b16 %v401
        %v1813 = vunpack.c.l.b16 %v402
        %v1814 = vunpack.c.h.b16 %v402
        %v1815 = vunpack.c.l.b16 %v403
        %v1816 = vunpack.c.h.b16 %v403
        %v1817 = vunpack.c.l.b16 %v404
        %v1818 = vunpack.c.h.b16 %v404
        %v1819 = vunpack.c.l.b16 %v405
        %v1820 = vunpack.c.h.b16 %v405
        %v1821 = vunpack.c.l.b16 %v406
        %v1822 = vunpack.c.h.b16 %v406
        %v1823 = vunpack.c.l.b16 %v407
        %v1824 = vunpack.c.h.b16 %v407
        %v1825 = vunpack.c.l.b16 %v408
        %v1826 = vunpack.c.h.b16 %v408
        %v1827 = vunpack.c.l.b16 %v409
        %v1828 = vunpack.c.h.b16 %v409
        %v1829 = vunpack.c.l.b16 %v410
        %v1830 = vunpack.c.h.b16 %v410
        %v1831 = vunpack.c.l.b16 %v411
        %v1832 = vunpack.c.h.b16 %v411
        %v1833 = vunpack.c.l.b16 %v412
        %v1834 = vunpack.c.h.b16 %v412
        %v1835 = vunpack.c.l.b16 %v413
        %v1836 = vunpack.c.h.b16 %v413
        %v1837 = vunpack.c.l.b16 %v414
        %v1838 = vunpack.c.h.b16 %v414
        %v1839 = vunpack.c.l.b16 %v415
        %v1840 = vunpack.c.h.b16 %v415
        %v1841 = vunpack.c.l.b16 %v416
        %v1842 = vunpack.c.h.b16 %v416
        %v1843 = vunpack.c.l.b16 %v417
        %v1844 = vunpack.c.h.b16 %v417
        %v1845 = vunpack.c.l.b16 %v418
        %v1846 = vunpack.c.h.b16 %v418
        %v1847 = vunpack.c.l.b16 %v419
        %v1848 = vunpack.c.h.b16 %v419
        %v1849 = vunpack.c.l.b16 %v420
        %v1850 = vunpack.c.h.b16 %v420
        %v1851 = vunpack.c.l.b16 %v421
        %v1852 = vunpack.c.h.b16 %v421
        %v1853 = vunpack.c.l.b16 %v422
        %v1854 = vunpack.c.h.b16 %v422
        %v1855 = vunpack.c.l.b16 %v423
        %v1856 = vunpack.c.h.b16 %v423
        %v1857 = vunpack.c.l.b16 %v424
        %v1858 = vunpack.c.h.b16 %v424
        %v1859 = vunpack.c.l.b16 %v425
        %v1860 = vunpack.c.h.b16 %v425
        %v1861 = vunpack.c.l.b16 %v426
        %v1862 = vunpack.c.h.b16 %v426
        %v1863 = vunpack.c.l.b16 %v427
        %v1864 = vunpack.c.h.b16 %v427
        %v1865 = vunpack.c.l.b16 %v428
        %v1866 = vunpack.c.h.b16 %v428
        %v1867 = vunpack.c.l.b16 %v429
        %v1868 = vunpack.c.h.b16 %v429
        %v1869 = vunpack.c.l.b16 %v430
        %v1870 = vunpack.c.h.b16 %v430
        %v1871 = vunpack.c.l.b16 %v431
        %v1872 = vunpack.c.h.b16 %v431
        %v1873 = vunpack.c.l.b16 %v432
        %v1874 = vunpack.c.h.b16 %v432
        %v1875 = vunpack.c.l.b16 %v433
        %v1876 = vunpack.c.h.b16 %v433
        %v1877 = vunpack.c.l.b16 %v434
        %v1878 = vunpack.c.h.b16 %v434
        %v1879 = vunpack.c.l.b16 %v435
        %v1880 = vunpack.c.h.b16 %v435
        %v1881 = vunpack.c.l.b16 %v436
        %v1882 = vunpack.c.h.b16 %v436
        %v1883 = vunpack.c.l.b16 %v437
        %v1884 = vunpack.c.h.b16 %v437
        %v1885 = vunpack.c.l.b16 %v438
        %v1886 = vunpack.c.h.b16 %v438
        %v1887 = vunpack.c.l.b16 %v439
        %v1888 = vunpack.c.h.b16 %v439
        %v1889 = vunpack.c.l.b16 %v440
        %v1890 = vunpack.c.h.b16 %v440
        %v1891 = vunpack.c.l.b16 %v441
        %v1892 = vunpack.c.h.b16 %v441
        %v1893 = vunpack.c.l.b16 %v442
        %v1894 = vunpack.c.h.b16 %v442
        %v1895 = vunpack.c.l.b16 %v443
        %v1896 = vunpack.c.h.b16 %v443
        %v1897 = vunpack.c.l.b16 %v444
        %v1898 = vunpack.c.h.b16 %v444
        %v1899 = vunpack.c.l.b16 %v445
        %v1900 = vunpack.c.h.b16 %v445
        %v1901 = vunpack.c.l.b16 %v446
        %v1902 = vunpack.c.h.b16 %v446
        %v1903 = vunpack.c.l.b16 %v447
        %v1904 = vunpack.c.h.b16 %v447
        %v1905 = vunpack.c.l.b16 %v448
        %v1906 = vunpack.c.h.b16 %v448
        %v1907 = vunpack.c.l.b16 %v449
        %v1908 = vunpack.c.h.b16 %v449
        %v1909 = vunpack.c.l.b16 %v450
        %v1910 = vunpack.c.h.b16 %v450
        %v1911 = vunpack.c.l.b16 %v451
        %v1912 = vunpack.c.h.b16 %v451
        %v1913 = vunpack.c.l.b16 %v452
        %v1914 = vunpack.c.h.b16 %v452
        %v1915 = vunpack.c.l.b16 %v453
        %v1916 = vunpack.c.h.b16 %v453
        %v1917 = vunpack.c.l.b16 %v454
        %v1918 = vunpack.c.h.b16 %v454
        %v1919 = vunpack.c.l.b16 %v455
        %v1920 = vunpack.c.h.b16 %v455
        %v1921 = vunpack.c.l.b16 %v456
        %v1922 = vunpack.c.h.b16 %v456
        %v1923 = vunpack.c.l.b16 %v457
        %v1924 = vunpack.c.h.b16 %v457
        %v1925 = vunpack.c.l.b16 %v458
        %v1926 = vunpack.c.h.b16 %v458
        %v1927 = vunpack.c.l.b16 %v459
        %v1928 = vunpack.c.h.b16 %v459
        %v1929 = vunpack.c.l.b16 %v460
        %v1930 = vunpack.c.h.b16 %v460
        %v1931 = vunpack.c.l.b16 %v461
        %v1932 = vunpack.c.h.b16 %v461
        %v1933 = vunpack.c.l.b16 %v462
        %v1934 = vunpack.c.h.b16 %v462
        %v1935 = vunpack.c.l.b16 %v463
        %v1936 = vunpack.c.h.b16 %v463
        %v1937 = vunpack.c.l.b16 %v464
        %v1938 = vunpack.c.h.b16 %v464
        %v1939 = vunpack.c.l.b16 %v465
        %v1940 = vunpack.c.h.b16 %v465
        %v1941 = vunpack.c.l.b16 %v466
        %v1942 = vunpack.c.h.b16 %v466
        %v1943 = vunpack.c.l.b16 %v467
        %v1944 = vunpack.c.h.b16 %v467
        %v1945 = vunpack.c.l.b16 %v468
        %v1946 = vunpack.c.h.b16 %v468
        %v1947 = vunpack.c.l.b16 %v469
        %v1948 = vunpack.c.h.b16 %v469
        %v1949 = vunpack.c.l.b16 %v470
        %v1950 = vunpack.c.h.b16 %v470
        %v1951 = vunpack.c.l.b16 %v471
        %v1952 = vunpack.c.h.b16 %v471
        %v1953 = vunpack.c.l.b16 %v472
        %v1954 = vunpack.c.h.b16 %v472
        %v1955 = vunpack.c.l.b16 %v473
        %v1956 = vunpack.c.h.b16 %v473
        %v1957 = vunpack.c.l.b16 %v474
        %v1958 = vunpack.c.h.b16 %v474
        %v1959 = vunpack.c.l.b16 %v475
        %v1960 = vunpack.c.h.b16 %v475
        %v1961 = vunpack.c.l.b16 %v476
        %v1962 = vunpack.c.h.b16 %v476
        %v1963 = vunpack.c.l.b16 %v477
        %v1964 = vunpack.c.h.b16 %v477
        %v1965 = vunpack.c.l.b16 %v478
        %v1966 = vunpack.c.h.b16 %v478
        %v1967 = vunpack.c.l.b16 %v479
        %v1968 = vunpack.c.h.b16 %v479
        %v1969 = vunpack.c.l.b16 %v480
        %v1970 = vunpack.c.h.b16 %v480
        %v1971 = vunpack.c.l.b16 %v481
        %v1972 = vunpack.c.h.b16 %v481
        %v1973 = vunpack.c.l.b16 %v482
        %v1974 = vunpack.c.h.b16 %v482
        %v1975 = vunpack.c.l.b16 %v483
        %v1976 = vunpack.c.h.b16 %v483
        %v1977 = vunpack.c.l.b16 %v484
        %v1978 = vunpack.c.h.b16 %v484
        %v1979 = vunpack.c.l.b16 %v485
        %v1980 = vunpack.c.h.b16 %v485
        %v1981 = vunpack.c.l.b16 %v486
        %v1982 = vunpack.c.h.b16 %v486
        %v1983 = vunpack.c.l.b16 %v487
        %v1984 = vunpack.c.h.b16 %v487
        %v1985 = vunpack.c.l.b16 %v488
        %v1986 = vunpack.c.h.b16 %v488
        %v1987 = vunpack.c.l.b16 %v489
        %v1988 = vunpack.c.h.b16 %v489
        %v1989 = vunpack.c.l.b16 %v490
        %v1990 = vunpack.c.h.b16 %v490
        %v1991 = vunpack.c.l.b16 %v491
        %v1992 = vunpack.c.h.b16 %v491
        %v1993 = vunpack.c.l.b16 %v492
        %v1994 = vunpack.c.h.b16 %v492
        %v1995 = vunpack.c.l.b16 %v493
        %v1996 = vunpack.c.h.b16 %v493
        %v1997 = vunpack.c.l.b16 %v494
        %v1998 = vunpack.c.h.b16 %v494
        %v1999 = vunpack.c.l.b16 %v495
        %v2000 = vunpack.c.h.b16 %v495
        %v2001 = vunpack.c.l.b16 %v496
        %v2002 = vunpack.c.h.b16 %v496
        %v2003 = vunpack.c.l.b16 %v497
        %v2004 = vunpack.c.h.b16 %v497
        %v2005 = vunpack.c.l.b16 %v498
        %v2006 = vunpack.c.h.b16 %v498
        %v2007 = vunpack.c.l.b16 %v499
        %v2008 = vunpack.c.h.b16 %v499
        %v2009 = vunpack.c.l.b16 %v500
        %v2010 = vunpack.c.h.b16 %v500
        %v2011 = vunpack.c.l.b16 %v501
        %v2012 = vunpack.c.h.b16 %v501
        %v2013 = vunpack.c.l.b16 %v502
        %v2014 = vunpack.c.h.b16 %v502
        %v2015 = vunpack.c.l.b16 %v503
        %v2016 = vunpack.c.h.b16 %v503
        %v2017 = vunpack.c.l.b16 %v504
        %v2018 = vunpack.c.h.b16 %v504
        %v2019 = vpack.c.b16 %v1767, %v1763
        %v2020 = vpack.c.b16 %v1768, %v1764
        %v2021 = vpack.c.b16 %v1769, %v1765
        %v2022 = vpack.c.b16 %v1770, %v1766
        %v2023 = vpack.c.b16 %v1775, %v1771
        %v2024 = vpack.c.b16 %v1776, %v1772
        %v2025 = vpack.c.b16 %v1777, %v1773
        %v2026 = vpack.c.b16 %v1778, %v1774
        %v2027 = vpack.c.b16 %v1783, %v1779
        %v2028 = vpack.c.b16 %v1784, %v1780
        %v2029 = vpack.c.b16 %v1785, %v1781
        %v2030 = vpack.c.b16 %v1786, %v1782
        %v2031 = vpack.c.b16 %v1791, %v1787
        %v2032 = vpack.c.b16 %v1792, %v1788
        %v2033 = vpack.c.b16 %v1793, %v1789
        %v2034 = vpack.c.b16 %v1794, %v1790
        %v2035 = vpack.c.b16 %v1799, %v1795
        %v2036 = vpack.c.b16 %v1800, %v1796
        %v2037 = vpack.c.b16 %v1801, %v1797
        %v2038 = vpack.c.b16 %v1802, %v1798
        %v2039 = vpack.c.b16 %v1807, %v1803
        %v2040 = vpack.c.b16 %v1808, %v1804
        %v2041 = vpack.c.b16 %v1809, %v1805
        %v2042 = vpack.c.b16 %v1810, %v1806
        %v2043 = vpack.c.b16 %v1815, %v1811
        %v2044 = vpack.c.b16 %v1816, %v1812
        %v2045 = vpack.c.b16 %v1817, %v1813
        %v2046 = vpack.c.b16 %v1818, %v1814
        %v2047 = vpack.c.b16 %v1823, %v1819
        %v2048 = vpack.c.b16 %v1824, %v1820
        %v2049 = vpack.c.b16 %v1825, %v1821
        %v2050 = vpack.c.b16 %v1826, %v1822
        %v2051 = vpack.c.b16 %v1831, %v1827
        %v2052 = vpack.c.b16 %v1832, %v1828
        %v2053 = vpack.c.b16 %v1833, %v1829
        %v2054 = vpack.c.b16 %v1834, %v1830
        %v2055 = vpack.c.b16 %v1839, %v1835
        %v2056 = vpack.c.b16 %v1840, %v1836
        %v2057 = vpack.c.b16 %v1841, %v1837
        %v2058 = vpack.c.b16 %v1842, %v1838
        %v2059 = vpack.c.b16 %v1847, %v1843
        %v2060 = vpack.c.b16 %v1848, %v1844
        %v2061 = vpack.c.b16 %v1849, %v1845
        %v2062 = vpack.c.b16 %v1850, %v1846
        %v2063 = vpack.c.b16 %v1855, %v1851
        %v2064 = vpack.c.b16 %v1856, %v1852
        %v2065 = vpack.c.b16 %v1857, %v1853
        %v2066 = vpack.c.b16 %v1858, %v1854
        %v2067 = vpack.c.b16 %v1863, %v1859
        %v2068 = vpack.c.b16 %v1864, %v1860
        %v2069 = vpack.c.b16 %v1865, %v1861
        %v2070 = vpack.c.b16 %v1866, %v1862
        %v2071 = vpack.c.b16 %v1871, %v1867
        %v2072 = vpack.c.b16 %v1872, %v1868
        %v2073 = vpack.c.b16 %v1873, %v1869
        %v2074 = vpack.c.b16 %v1874, %v1870
        %v2075 = vpack.c.b16 %v1879, %v1875
        %v2076 = vpack.c.b16 %v1880, %v1876
        %v2077 = vpack.c.b16 %v1881, %v1877
        %v2078 = vpack.c.b16 %v1882, %v1878
        %v2079 = vpack.c.b16 %v1887, %v1883
        %v2080 = vpack.c.b16 %v1888, %v1884
        %v2081 = vpack.c.b16 %v1889, %v1885
        %v2082 = vpack.c.b16 %v1890, %v1886
        %v2083 = vpack.c.b16 %v1895, %v1891
        %v2084 = vpack.c.b16 %v1896, %v1892
        %v2085 = vpack.c.b16 %v1897, %v1893
        %v2086 = vpack.c.b16 %v1898, %v1894
        %v2087 = vpack.c.b16 %v1903, %v1899
        %v2088 = vpack.c.b16 %v1904, %v1900
        %v2089 = vpack.c.b16 %v1905, %v1901
        %v2090 = vpack.c.b16 %v1906, %v1902
        %v2091 = vpack.c.b16 %v1911, %v1907
        %v2092 = vpack.c.b16 %v1912, %v1908
        %v2093 = vpack.c.b16 %v1913, %v1909
        %v2094 = vpack.c.b16 %v1914, %v1910
        %v2095 = vpack.c.b16 %v1919, %v1915
        %v2096 = vpack.c.b16 %v1920, %v1916
        %v2097 = vpack.c.b16 %v1921, %v1917
        %v2098 = vpack.c.b16 %v1922, %v1918
        %v2099 = vpack.c.b16 %v1927, %v1923
        %v2100 = vpack.c.b16 %v1928, %v1924
        %v2101 = vpack.c.b16 %v1929, %v1925
        %v2102 = vpack.c.b16 %v1930, %v1926
        %v2103 = vpack.c.b16 %v1935, %v1931
        %v2104 = vpack.c.b16 %v1936, %v1932
        %v2105 = vpack.c.b16 %v1937, %v1933
        %v2106 = vpack.c.b16 %v1938, %v1934
        %v2107 = vpack.c.b16 %v1943, %v1939
        %v2108 = vpack.c.b16 %v1944, %v1940
        %v2109 = vpack.c.b16 %v1945, %v1941
        %v2110 = vpack.c.b16 %v1946, %v1942
        %v2111 = vpack.c.b16 %v1951, %v1947
        %v2112 = vpack.c.b16 %v1952, %v1948
        %v2113 = vpack.c.b16 %v1953, %v1949
        %v2114 = vpack.c.b16 %v1954, %v1950
        %v2115 = vpack.c.b16 %v1959, %v1955
        %v2116 = vpack.c.b16 %v1960, %v1956
        %v2117 = vpack.c.b16 %v1961, %v1957
        %v2118 = vpack.c.b16 %v1962, %v1958
        %v2119 = vpack.c.b16 %v1967, %v1963
        %v2120 = vpack.c.b16 %v1968, %v1964
        %v2121 = vpack.c.b16 %v1969, %v1965
        %v2122 = vpack.c.b16 %v1970, %v1966
        %v2123 = vpack.c.b16 %v1975, %v1971
        %v2124 = vpack.c.b16 %v1976, %v1972
        %v2125 = vpack.c.b16 %v1977, %v1973
        %v2126 = vpack.c.b16 %v1978, %v1974
        %v2127 = vpack.c.b16 %v1983, %v1979
        %v2128 = vpack.c.b16 %v1984, %v1980
        %v2129 = vpack.c.b16 %v1985, %v1981
        %v2130 = vpack.c.b16 %v1986, %v1982
        %v2131 = vpack.c.b16 %v1991, %v1987
        %v2132 = vpack.c.b16 %v1992, %v1988
        %v2133 = vpack.c.b16 %v1993, %v1989
        %v2134 = vpack.c.b16 %v1994, %v1990
        %v2135 = vpack.c.b16 %v1999, %v1995
        %v2136 = vpack.c.b16 %v2000, %v1996
        %v2137 = vpack.c.b16 %v2001, %v1997
        %v2138 = vpack.c.b16 %v2002, %v1998
        %v2139 = vpack.c.b16 %v2007, %v2003
        %v2140 = vpack.c.b16 %v2008, %v2004
        %v2141 = vpack.c.b16 %v2009, %v2005
        %v2142 = vpack.c.b16 %v2010, %v2006
        %v2143 = vpack.c.b16 %v2015, %v2011
        %v2144 = vpack.c.b16 %v2016, %v2012
        %v2145 = vpack.c.b16 %v2017, %v2013
        %v2146 = vpack.c.b16 %v2018, %v2014
        %2275 = vmatprep.subr.bf16.mxu0 %v2048
        %2276 = vmatpush1.bf16.msra.mxu0 %v2047
        %2277 = vmatprep.subr.bf16.mxu0 %v2044
        %2278 = vmatpush1.bf16.msra.mxu0 %v2043
        %2279 = vmatprep.subr.bf16.mxu0 %v2040
        %2280 = vmatpush1.bf16.msra.mxu0 %v2039
        %2281 = vmatprep.subr.bf16.mxu0 %v2036
        %2282 = vmatpush1.bf16.msra.mxu0 %v2035
        %2283 = vmatprep.subr.bf16.mxu0 %v2032
        %2284 = vmatpush1.bf16.msra.mxu0 %v2031
        %2285 = vmatprep.subr.bf16.mxu0 %v2028
        %2286 = vmatpush1.bf16.msra.mxu0 %v2027
        %2287 = vmatprep.subr.bf16.mxu0 %v2024
        %2288 = vmatpush1.bf16.msra.mxu0 %v2023
        %2289 = vmatprep.subr.bf16.mxu0 %v2020
        %2290 = vmatpush1.bf16.msra.mxu0 %v2019
        %2291 = vmatprep.subr.bf16.mxu0 %v2080
        %2292 = vmatpush2.bf16.msra.mxu0 %v2079
        %2293 = vmatprep.subr.bf16.mxu0 %v2076
        %2294 = vmatpush2.bf16.msra.mxu0 %v2075
        %2295 = vmatprep.subr.bf16.mxu0 %v2072
        %2296 = vmatpush2.bf16.msra.mxu0 %v2071
        %2297 = vmatprep.subr.bf16.mxu0 %v2068
        %2298 = vmatpush2.bf16.msra.mxu0 %v2067
        %2299 = vmatprep.subr.bf16.mxu0 %v2064
        %2300 = vmatpush2.bf16.msra.mxu0 %v2063
        %2301 = vmatprep.subr.bf16.mxu0 %v2060
        %2302 = vmatpush2.bf16.msra.mxu0 %v2059
        %2303 = vmatprep.subr.bf16.mxu0 %v2056
        %2304 = vmatpush2.bf16.msra.mxu0 %v2055
        %2305 = vmatprep.subr.bf16.mxu0 %v2052
        %2306 = vmatpush2.bf16.msra.mxu0 %v2051
        %2307 = vmatprep.mubr.bf16.mxu0 %v366
        %2308 = vmatmul.mubr.bf16.gmra.mxu0 %v365
        %v2309 = vpop.f32.mrf.mxu0
        %v2310 = vadd.f32 %v1487, %v2309
        %v2311 = vpop.f32.mrf.mxu0
        %v2312 = vadd.f32 %v1489, %v2311
        %v2313 = vpop.f32.mrf.mxu0
        %v2314 = vadd.f32 %v1491, %v2313
        %v2315 = vpop.f32.mrf.mxu0
        %v2316 = vadd.f32 %v1493, %v2315
        %2317 = vmatprep.mubr.bf16.mxu0 %v370
        %2318 = vmatmul.mubr.bf16.gmra.mxu0 %v369
        %v2319 = vpop.f32.mrf.mxu0
        %v2320 = vadd.f32 %v1497, %v2319
        %v2321 = vpop.f32.mrf.mxu0
        %v2322 = vadd.f32 %v1499, %v2321
        %v2323 = vpop.f32.mrf.mxu0
        %v2324 = vadd.f32 %v1501, %v2323
        %v2325 = vpop.f32.mrf.mxu0
        %v2326 = vadd.f32 %v1503, %v2325
        %2327 = vmatprep.mubr.bf16.mxu0 %v374
        %2328 = vmatmul.mubr.bf16.gmra.mxu0 %v373
        %v2329 = vpop.f32.mrf.mxu0
        %v2330 = vadd.f32 %v1507, %v2329
        %v2331 = vpop.f32.mrf.mxu0
        %v2332 = vadd.f32 %v1509, %v2331
        %v2333 = vpop.f32.mrf.mxu0
        %v2334 = vpop.f32.mrf.mxu0
        %2335 = vdwg.mxu0
        %2336 = vmatprep.subr.bf16.mxu0 %v2112
        %2337 = vmatpush1.bf16.msra.mxu0 %v2111
        %2338 = vmatprep.subr.bf16.mxu0 %v2108
        %2339 = vmatpush1.bf16.msra.mxu0 %v2107
        %2340 = vmatprep.subr.bf16.mxu0 %v2104
        %2341 = vmatpush1.bf16.msra.mxu0 %v2103
        %2342 = vmatprep.subr.bf16.mxu0 %v2100
        %2343 = vmatpush1.bf16.msra.mxu0 %v2099
        %2344 = vmatprep.subr.bf16.mxu0 %v2096
        %2345 = vmatpush1.bf16.msra.mxu0 %v2095
        %2346 = vmatprep.subr.bf16.mxu0 %v2092
        %2347 = vmatpush1.bf16.msra.mxu0 %v2091
        %2348 = vmatprep.subr.bf16.mxu0 %v2088
        %2349 = vmatpush1.bf16.msra.mxu0 %v2087
        %2350 = vmatprep.subr.bf16.mxu0 %v2084
        %2351 = vmatpush1.bf16.msra.mxu0 %v2083
        %2352 = vmatprep.subr.bf16.mxu0 %v2144
        %2353 = vmatpush2.bf16.msra.mxu0 %v2143
        %2354 = vmatprep.subr.bf16.mxu0 %v2140
        %2355 = vmatpush2.bf16.msra.mxu0 %v2139
        %2356 = vmatprep.subr.bf16.mxu0 %v2136
        %2357 = vmatpush2.bf16.msra.mxu0 %v2135
        %2358 = vmatprep.subr.bf16.mxu0 %v2132
        %2359 = vmatpush2.bf16.msra.mxu0 %v2131
        %2360 = vmatprep.subr.bf16.mxu0 %v2128
        %2361 = vmatpush2.bf16.msra.mxu0 %v2127
        %2362 = vmatprep.subr.bf16.mxu0 %v2124
        %2363 = vmatpush2.bf16.msra.mxu0 %v2123
        %2364 = vmatprep.subr.bf16.mxu0 %v2120
        %2365 = vmatpush2.bf16.msra.mxu0 %v2119
        %2366 = vmatprep.subr.bf16.mxu0 %v2116
        %2367 = vmatpush2.bf16.msra.mxu0 %v2115
        %2368 = vmatprep.mubr.bf16.mxu0 %v368
        %2369 = vmatmul.mubr.bf16.gmra.mxu0 %v367
        %v2370 = vpop.f32.mrf.mxu0
        %v2371 = vadd.f32 %v2310, %v2370
        %v2372 = vpop.f32.mrf.mxu0
        %v2373 = vadd.f32 %v2312, %v2372
        %v2374 = vpop.f32.mrf.mxu0
        %v2375 = vadd.f32 %v2314, %v2374
        %v2376 = vpop.f32.mrf.mxu0
        %v2377 = vadd.f32 %v2316, %v2376
        %2378 = vmatprep.mubr.bf16.mxu0 %v372
        %2379 = vmatmul.mubr.bf16.gmra.mxu0 %v371
        %v2380 = vpop.f32.mrf.mxu0
        %v2381 = vadd.f32 %v2320, %v2380
        %v2382 = vpop.f32.mrf.mxu0
        %v2383 = vadd.f32 %v2322, %v2382
        %v2384 = vpop.f32.mrf.mxu0
        %v2385 = vadd.f32 %v2324, %v2384
        %v2386 = vpop.f32.mrf.mxu0
        %v2387 = vadd.f32 %v2326, %v2386
        %2388 = vmatprep.mubr.bf16.mxu0 %v376
        %2389 = vmatmul.mubr.bf16.gmra.mxu0 %v375
        %v2390 = vpop.f32.mrf.mxu0
        %v2391 = vadd.f32 %v2330, %v2390
        %v2392 = vpop.f32.mrf.mxu0
        %v2393 = vadd.f32 %v2332, %v2392
        %v2394 = vpop.f32.mrf.mxu0
        %v2395 = vpop.f32.mrf.mxu0
        %2396 = vdwg.mxu0
        %2397 = vmatprep.subr.bf16.mxu0 %v2050
        %2398 = vmatpush1.bf16.msra.mxu0 %v2049
        %2399 = vmatprep.subr.bf16.mxu0 %v2046
        %2400 = vmatpush1.bf16.msra.mxu0 %v2045
        %2401 = vmatprep.subr.bf16.mxu0 %v2042
        %2402 = vmatpush1.bf16.msra.mxu0 %v2041
        %2403 = vmatprep.subr.bf16.mxu0 %v2038
        %2404 = vmatpush1.bf16.msra.mxu0 %v2037
        %2405 = vmatprep.subr.bf16.mxu0 %v2034
        %2406 = vmatpush1.bf16.msra.mxu0 %v2033
        %2407 = vmatprep.subr.bf16.mxu0 %v2030
        %2408 = vmatpush1.bf16.msra.mxu0 %v2029
        %2409 = vmatprep.subr.bf16.mxu0 %v2026
        %2410 = vmatpush1.bf16.msra.mxu0 %v2025
        %2411 = vmatprep.subr.bf16.mxu0 %v2022
        %2412 = vmatpush1.bf16.msra.mxu0 %v2021
        %2413 = vmatprep.subr.bf16.mxu0 %v2082
        %2414 = vmatpush2.bf16.msra.mxu0 %v2081
        %2415 = vmatprep.subr.bf16.mxu0 %v2078
        %2416 = vmatpush2.bf16.msra.mxu0 %v2077
        %2417 = vmatprep.subr.bf16.mxu0 %v2074
        %2418 = vmatpush2.bf16.msra.mxu0 %v2073
        %2419 = vmatprep.subr.bf16.mxu0 %v2070
        %2420 = vmatpush2.bf16.msra.mxu0 %v2069
        %2421 = vmatprep.subr.bf16.mxu0 %v2066
        %2422 = vmatpush2.bf16.msra.mxu0 %v2065
        %2423 = vmatprep.subr.bf16.mxu0 %v2062
        %2424 = vmatpush2.bf16.msra.mxu0 %v2061
        %2425 = vmatprep.subr.bf16.mxu0 %v2058
        %2426 = vmatpush2.bf16.msra.mxu0 %v2057
        %2427 = vmatprep.subr.bf16.mxu0 %v2054
        %2428 = vmatpush2.bf16.msra.mxu0 %v2053
        %2429 = vmatprep.mubr.bf16.mxu0 %v366
        %2430 = vmatmul.mubr.bf16.gmra.mxu0 %v365
        %v2431 = vpop.f32.mrf.mxu0
        %v2432 = vadd.f32 %v1609, %v2431
        %v2433 = vpop.f32.mrf.mxu0
        %v2434 = vadd.f32 %v1611, %v2433
        %v2435 = vpop.f32.mrf.mxu0
        %v2436 = vadd.f32 %v1613, %v2435
        %v2437 = vpop.f32.mrf.mxu0
        %v2438 = vadd.f32 %v1615, %v2437
        %2439 = vmatprep.mubr.bf16.mxu0 %v370
        %2440 = vmatmul.mubr.bf16.gmra.mxu0 %v369
        %v2441 = vpop.f32.mrf.mxu0
        %v2442 = vadd.f32 %v1619, %v2441
        %v2443 = vpop.f32.mrf.mxu0
        %v2444 = vadd.f32 %v1621, %v2443
        %v2445 = vpop.f32.mrf.mxu0
        %v2446 = vadd.f32 %v1623, %v2445
        %v2447 = vpop.f32.mrf.mxu0
        %v2448 = vadd.f32 %v1625, %v2447
        %2449 = vmatprep.mubr.bf16.mxu0 %v374
        %2450 = vmatmul.mubr.bf16.gmra.mxu0 %v373
        %v2451 = vpop.f32.mrf.mxu0
        %v2452 = vadd.f32 %v1629, %v2451
        %v2453 = vpop.f32.mrf.mxu0
        %v2454 = vadd.f32 %v1631, %v2453
        %v2455 = vpop.f32.mrf.mxu0
        %v2456 = vpop.f32.mrf.mxu0
        %2457 = vdwg.mxu0
        %2458 = vmatprep.subr.bf16.mxu0 %v2114
        %2459 = vmatpush1.bf16.msra.mxu0 %v2113
        %2460 = vmatprep.subr.bf16.mxu0 %v2110
        %2461 = vmatpush1.bf16.msra.mxu0 %v2109
        %2462 = vmatprep.subr.bf16.mxu0 %v2106
        %2463 = vmatpush1.bf16.msra.mxu0 %v2105
        %2464 = vmatprep.subr.bf16.mxu0 %v2102
        %2465 = vmatpush1.bf16.msra.mxu0 %v2101
        %2466 = vmatprep.subr.bf16.mxu0 %v2098
        %2467 = vmatpush1.bf16.msra.mxu0 %v2097
        %2468 = vmatprep.subr.bf16.mxu0 %v2094
        %2469 = vmatpush1.bf16.msra.mxu0 %v2093
        %2470 = vmatprep.subr.bf16.mxu0 %v2090
        %2471 = vmatpush1.bf16.msra.mxu0 %v2089
        %2472 = vmatprep.subr.bf16.mxu0 %v2086
        %2473 = vmatpush1.bf16.msra.mxu0 %v2085
        %2474 = vmatprep.subr.bf16.mxu0 %v2146
        %2475 = vmatpush2.bf16.msra.mxu0 %v2145
        %2476 = vmatprep.subr.bf16.mxu0 %v2142
        %2477 = vmatpush2.bf16.msra.mxu0 %v2141
        %2478 = vmatprep.subr.bf16.mxu0 %v2138
        %2479 = vmatpush2.bf16.msra.mxu0 %v2137
        %2480 = vmatprep.subr.bf16.mxu0 %v2134
        %2481 = vmatpush2.bf16.msra.mxu0 %v2133
        %2482 = vmatprep.subr.bf16.mxu0 %v2130
        %2483 = vmatpush2.bf16.msra.mxu0 %v2129
        %2484 = vmatprep.subr.bf16.mxu0 %v2126
        %2485 = vmatpush2.bf16.msra.mxu0 %v2125
        %2486 = vmatprep.subr.bf16.mxu0 %v2122
        %2487 = vmatpush2.bf16.msra.mxu0 %v2121
        %2488 = vmatprep.subr.bf16.mxu0 %v2118
        %2489 = vmatpush2.bf16.msra.mxu0 %v2117
        %2490 = vmatprep.mubr.bf16.mxu0 %v368
        %2491 = vmatmul.mubr.bf16.gmra.mxu0 %v367
        %v2492 = vpop.f32.mrf.mxu0
        %v2493 = vadd.f32 %v2432, %v2492
        %v2494 = vpop.f32.mrf.mxu0
        %v2495 = vadd.f32 %v2434, %v2494
        %v2496 = vpop.f32.mrf.mxu0
        %v2497 = vadd.f32 %v2436, %v2496
        %v2498 = vpop.f32.mrf.mxu0
        %v2499 = vadd.f32 %v2438, %v2498
        %2500 = vmatprep.mubr.bf16.mxu0 %v372
        %2501 = vmatmul.mubr.bf16.gmra.mxu0 %v371
        %v2502 = vpop.f32.mrf.mxu0
        %v2503 = vadd.f32 %v2442, %v2502
        %v2504 = vpop.f32.mrf.mxu0
        %v2505 = vadd.f32 %v2444, %v2504
        %v2506 = vpop.f32.mrf.mxu0
        %v2507 = vadd.f32 %v2446, %v2506
        %v2508 = vpop.f32.mrf.mxu0
        %v2509 = vadd.f32 %v2448, %v2508
        %2510 = vmatprep.mubr.bf16.mxu0 %v376
        %2511 = vmatmul.mubr.bf16.gmra.mxu0 %v375
        %v2512 = vpop.f32.mrf.mxu0
        %v2513 = vadd.f32 %v2452, %v2512
        %v2514 = vpop.f32.mrf.mxu0
        %v2515 = vadd.f32 %v2454, %v2514
        %v2516 = vpop.f32.mrf.mxu0
        %v2517 = vpop.f32.mrf.mxu0
        %2518 = vdwg.mxu0
        %v2519 = vld [vmem:[#allocation2] sm:$0xfc]
        %v2520 = vld [vmem:[#allocation2 + $0x8] sm:$0xfc]
        %v2521 = vld [vmem:[#allocation2 + $0x10] sm:$0xfc]
        %v2522 = vld [vmem:[#allocation2 + $0x18] sm:$0xfc]
        %v2523 = vld [vmem:[#allocation2 + $0x80] sm:$0x7]
        %v2524 = vld [vmem:[#allocation2 + $0x88] sm:$0x7]
        %v2525 = vld [vmem:[#allocation2 + $0x90] sm:$0x7]
        %v2526 = vld [vmem:[#allocation2 + $0x98] sm:$0x7]
        %v2527 = vpack.c.bf16 %v349, %v2519
        %v2528 = vpack.c.bf16 %v350, %v2520
        %v2529 = vpack.c.bf16 %v351, %v2521
        %v2530 = vpack.c.bf16 %v352, %v2522
        %v2531 = vpack.c.bf16 %v2523, %v2523
        %v2532 = vpack.c.bf16 %v2524, %v2524
        %v2533 = vpack.c.bf16 %v2525, %v2525
        %v2534 = vpack.c.bf16 %v2526, %v2526
        %s2535 = scalar_lea.vmem %s182, 2048 [#allocation3]
        %v2536 = vld [vmem:[%s2535] sm:$0xff]
        %v2537 = vld [vmem:[%s2535 + $0x8] sm:$0xff]
        %v2538 = vld [vmem:[%s2535 + $0x10] sm:$0xff]
        %v2539 = vld [vmem:[%s2535 + $0x18] sm:$0xff]
        %v2540 = vld [vmem:[%s2535 + $0x20] sm:$0xff]
        %v2541 = vld [vmem:[%s2535 + $0x28] sm:$0xff]
        %v2542 = vld [vmem:[%s2535 + $0x30] sm:$0xff]
        %v2543 = vld [vmem:[%s2535 + $0x38] sm:$0xff]
        %v2544 = vld [vmem:[%s2535 + $0x40] sm:$0xff]
        %v2545 = vld [vmem:[%s2535 + $0x48] sm:$0xff]
        %v2546 = vld [vmem:[%s2535 + $0x50] sm:$0xff]
        %v2547 = vld [vmem:[%s2535 + $0x58] sm:$0xff]
        %v2548 = vld [vmem:[%s2535 + $0x60] sm:$0xff]
        %v2549 = vld [vmem:[%s2535 + $0x68] sm:$0xff]
        %v2550 = vld [vmem:[%s2535 + $0x70] sm:$0xff]
        %v2551 = vld [vmem:[%s2535 + $0x78] sm:$0xff]
        %v2552 = vld [vmem:[%s2535 + $0x80] sm:$0xff]
        %v2553 = vld [vmem:[%s2535 + $0x88] sm:$0xff]
        %v2554 = vld [vmem:[%s2535 + $0x90] sm:$0xff]
        %v2555 = vld [vmem:[%s2535 + $0x98] sm:$0xff]
        %v2556 = vld [vmem:[%s2535 + $0xa0] sm:$0xff]
        %v2557 = vld [vmem:[%s2535 + $0xa8] sm:$0xff]
        %v2558 = vld [vmem:[%s2535 + $0xb0] sm:$0xff]
        %v2559 = vld [vmem:[%s2535 + $0xb8] sm:$0xff]
        %v2560 = vld [vmem:[%s2535 + $0xc0] sm:$0xff]
        %v2561 = vld [vmem:[%s2535 + $0xc8] sm:$0xff]
        %v2562 = vld [vmem:[%s2535 + $0xd0] sm:$0xff]
        %v2563 = vld [vmem:[%s2535 + $0xd8] sm:$0xff]
        %v2564 = vld [vmem:[%s2535 + $0xe0] sm:$0xff]
        %v2565 = vld [vmem:[%s2535 + $0xe8] sm:$0xff]
        %v2566 = vld [vmem:[%s2535 + $0xf0] sm:$0xff]
        %v2567 = vld [vmem:[%s2535 + $0xf8] sm:$0xff]
        %v2568 = vld [vmem:[%s2535 + $0x100] sm:$0xff]
        %v2569 = vld [vmem:[%s2535 + $0x108] sm:$0xff]
        %v2570 = vld [vmem:[%s2535 + $0x110] sm:$0xff]
        %v2571 = vld [vmem:[%s2535 + $0x118] sm:$0xff]
        %v2572 = vld [vmem:[%s2535 + $0x120] sm:$0xff]
        %v2573 = vld [vmem:[%s2535 + $0x128] sm:$0xff]
        %v2574 = vld [vmem:[%s2535 + $0x130] sm:$0xff]
        %v2575 = vld [vmem:[%s2535 + $0x138] sm:$0xff]
        %v2576 = vld [vmem:[%s2535 + $0x140] sm:$0xff]
        %v2577 = vld [vmem:[%s2535 + $0x148] sm:$0xff]
        %v2578 = vld [vmem:[%s2535 + $0x150] sm:$0xff]
        %v2579 = vld [vmem:[%s2535 + $0x158] sm:$0xff]
        %v2580 = vld [vmem:[%s2535 + $0x160] sm:$0xff]
        %v2581 = vld [vmem:[%s2535 + $0x168] sm:$0xff]
        %v2582 = vld [vmem:[%s2535 + $0x170] sm:$0xff]
        %v2583 = vld [vmem:[%s2535 + $0x178] sm:$0xff]
        %v2584 = vld [vmem:[%s2535 + $0x180] sm:$0xff]
        %v2585 = vld [vmem:[%s2535 + $0x188] sm:$0xff]
        %v2586 = vld [vmem:[%s2535 + $0x190] sm:$0xff]
        %v2587 = vld [vmem:[%s2535 + $0x198] sm:$0xff]
        %v2588 = vld [vmem:[%s2535 + $0x1a0] sm:$0xff]
        %v2589 = vld [vmem:[%s2535 + $0x1a8] sm:$0xff]
        %v2590 = vld [vmem:[%s2535 + $0x1b0] sm:$0xff]
        %v2591 = vld [vmem:[%s2535 + $0x1b8] sm:$0xff]
        %v2592 = vld [vmem:[%s2535 + $0x1c0] sm:$0xff]
        %v2593 = vld [vmem:[%s2535 + $0x1c8] sm:$0xff]
        %v2594 = vld [vmem:[%s2535 + $0x1d0] sm:$0xff]
        %v2595 = vld [vmem:[%s2535 + $0x1d8] sm:$0xff]
        %v2596 = vld [vmem:[%s2535 + $0x1e0] sm:$0xff]
        %v2597 = vld [vmem:[%s2535 + $0x1e8] sm:$0xff]
        %v2598 = vld [vmem:[%s2535 + $0x1f0] sm:$0xff]
        %v2599 = vld [vmem:[%s2535 + $0x1f8] sm:$0xff]
        %v2600 = vld [vmem:[%s2535 + $0x200] sm:$0xff]
        %v2601 = vld [vmem:[%s2535 + $0x208] sm:$0xff]
        %v2602 = vld [vmem:[%s2535 + $0x210] sm:$0xff]
        %v2603 = vld [vmem:[%s2535 + $0x218] sm:$0xff]
        %v2604 = vld [vmem:[%s2535 + $0x220] sm:$0xff]
        %v2605 = vld [vmem:[%s2535 + $0x228] sm:$0xff]
        %v2606 = vld [vmem:[%s2535 + $0x230] sm:$0xff]
        %v2607 = vld [vmem:[%s2535 + $0x238] sm:$0xff]
        %v2608 = vld [vmem:[%s2535 + $0x240] sm:$0xff]
        %v2609 = vld [vmem:[%s2535 + $0x248] sm:$0xff]
        %v2610 = vld [vmem:[%s2535 + $0x250] sm:$0xff]
        %v2611 = vld [vmem:[%s2535 + $0x258] sm:$0xff]
        %v2612 = vld [vmem:[%s2535 + $0x260] sm:$0xff]
        %v2613 = vld [vmem:[%s2535 + $0x268] sm:$0xff]
        %v2614 = vld [vmem:[%s2535 + $0x270] sm:$0xff]
        %v2615 = vld [vmem:[%s2535 + $0x278] sm:$0xff]
        %v2616 = vld [vmem:[%s2535 + $0x280] sm:$0xff]
        %v2617 = vld [vmem:[%s2535 + $0x288] sm:$0xff]
        %v2618 = vld [vmem:[%s2535 + $0x290] sm:$0xff]
        %v2619 = vld [vmem:[%s2535 + $0x298] sm:$0xff]
        %v2620 = vld [vmem:[%s2535 + $0x2a0] sm:$0xff]
        %v2621 = vld [vmem:[%s2535 + $0x2a8] sm:$0xff]
        %v2622 = vld [vmem:[%s2535 + $0x2b0] sm:$0xff]
        %v2623 = vld [vmem:[%s2535 + $0x2b8] sm:$0xff]
        %v2624 = vld [vmem:[%s2535 + $0x2c0] sm:$0xff]
        %v2625 = vld [vmem:[%s2535 + $0x2c8] sm:$0xff]
        %v2626 = vld [vmem:[%s2535 + $0x2d0] sm:$0xff]
        %v2627 = vld [vmem:[%s2535 + $0x2d8] sm:$0xff]
        %v2628 = vld [vmem:[%s2535 + $0x2e0] sm:$0xff]
        %v2629 = vld [vmem:[%s2535 + $0x2e8] sm:$0xff]
        %v2630 = vld [vmem:[%s2535 + $0x2f0] sm:$0xff]
        %v2631 = vld [vmem:[%s2535 + $0x2f8] sm:$0xff]
        %v2632 = vld [vmem:[%s2535 + $0x300] sm:$0xff]
        %v2633 = vld [vmem:[%s2535 + $0x308] sm:$0xff]
        %v2634 = vld [vmem:[%s2535 + $0x310] sm:$0xff]
        %v2635 = vld [vmem:[%s2535 + $0x318] sm:$0xff]
        %v2636 = vld [vmem:[%s2535 + $0x320] sm:$0xff]
        %v2637 = vld [vmem:[%s2535 + $0x328] sm:$0xff]
        %v2638 = vld [vmem:[%s2535 + $0x330] sm:$0xff]
        %v2639 = vld [vmem:[%s2535 + $0x338] sm:$0xff]
        %v2640 = vld [vmem:[%s2535 + $0x340] sm:$0xff]
        %v2641 = vld [vmem:[%s2535 + $0x348] sm:$0xff]
        %v2642 = vld [vmem:[%s2535 + $0x350] sm:$0xff]
        %v2643 = vld [vmem:[%s2535 + $0x358] sm:$0xff]
        %v2644 = vld [vmem:[%s2535 + $0x360] sm:$0xff]
        %v2645 = vld [vmem:[%s2535 + $0x368] sm:$0xff]
        %v2646 = vld [vmem:[%s2535 + $0x370] sm:$0xff]
        %v2647 = vld [vmem:[%s2535 + $0x378] sm:$0xff]
        %v2648 = vld [vmem:[%s2535 + $0x380] sm:$0xff]
        %v2649 = vld [vmem:[%s2535 + $0x388] sm:$0xff]
        %v2650 = vld [vmem:[%s2535 + $0x390] sm:$0xff]
        %v2651 = vld [vmem:[%s2535 + $0x398] sm:$0xff]
        %v2652 = vld [vmem:[%s2535 + $0x3a0] sm:$0xff]
        %v2653 = vld [vmem:[%s2535 + $0x3a8] sm:$0xff]
        %v2654 = vld [vmem:[%s2535 + $0x3b0] sm:$0xff]
        %v2655 = vld [vmem:[%s2535 + $0x3b8] sm:$0xff]
        %v2656 = vld [vmem:[%s2535 + $0x3c0] sm:$0xff]
        %v2657 = vld [vmem:[%s2535 + $0x3c8] sm:$0xff]
        %v2658 = vld [vmem:[%s2535 + $0x3d0] sm:$0xff]
        %v2659 = vld [vmem:[%s2535 + $0x3d8] sm:$0xff]
        %v2660 = vld [vmem:[%s2535 + $0x3e0] sm:$0xff]
        %v2661 = vld [vmem:[%s2535 + $0x3e8] sm:$0xff]
        %v2662 = vld [vmem:[%s2535 + $0x3f0] sm:$0xff]
        %v2663 = vld [vmem:[%s2535 + $0x3f8] sm:$0xff]
        %vm2676 = vcmask 1046528
        %v2677 = vrot.slane %v2527, 1
        %v2678 = vrot.slane %v369, 1
        %v2679 = vsel %vm2676, %v2677, %v2678
        %v2680 = vrot.slane %v2528, 1
        %v2681 = vrot.slane %v370, 1
        %v2682 = vsel %vm2676, %v2680, %v2681
        %v2683 = vrot.slane %v2529, 1
        %v2684 = vrot.slane %v371, 1
        %v2685 = vsel %vm2676, %v2683, %v2684
        %v2686 = vrot.slane %v2530, 1
        %v2687 = vrot.slane %v372, 1
        %v2688 = vsel %vm2676, %v2686, %v2687
        %v2689 = vrot.slane %v2531, 1
        %v2690 = vsel %vm2676, %v2678, %v2689
        %v2691 = vrot.slane %v2532, 1
        %v2692 = vsel %vm2676, %v2681, %v2691
        %v2693 = vrot.slane %v2533, 1
        %v2694 = vsel %vm2676, %v2684, %v2693
        %v2695 = vrot.slane %v2534, 1
        %v2696 = vsel %vm2676, %v2687, %v2695
        %v2837 = vunpack.c.l.b16 %v2536
        %v2838 = vunpack.c.h.b16 %v2536
        %v2839 = vunpack.c.l.b16 %v2537
        %v2840 = vunpack.c.h.b16 %v2537
        %v2841 = vunpack.c.l.b16 %v2538
        %v2842 = vunpack.c.h.b16 %v2538
        %v2843 = vunpack.c.l.b16 %v2539
        %v2844 = vunpack.c.h.b16 %v2539
        %v2845 = vunpack.c.l.b16 %v2540
        %v2846 = vunpack.c.h.b16 %v2540
        %v2847 = vunpack.c.l.b16 %v2541
        %v2848 = vunpack.c.h.b16 %v2541
        %v2849 = vunpack.c.l.b16 %v2542
        %v2850 = vunpack.c.h.b16 %v2542
        %v2851 = vunpack.c.l.b16 %v2543
        %v2852 = vunpack.c.h.b16 %v2543
        %v2853 = vunpack.c.l.b16 %v2544
        %v2854 = vunpack.c.h.b16 %v2544
        %v2855 = vunpack.c.l.b16 %v2545
        %v2856 = vunpack.c.h.b16 %v2545
        %v2857 = vunpack.c.l.b16 %v2546
        %v2858 = vunpack.c.h.b16 %v2546
        %v2859 = vunpack.c.l.b16 %v2547
        %v2860 = vunpack.c.h.b16 %v2547
        %v2861 = vunpack.c.l.b16 %v2548
        %v2862 = vunpack.c.h.b16 %v2548
        %v2863 = vunpack.c.l.b16 %v2549
        %v2864 = vunpack.c.h.b16 %v2549
        %v2865 = vunpack.c.l.b16 %v2550
        %v2866 = vunpack.c.h.b16 %v2550
        %v2867 = vunpack.c.l.b16 %v2551
        %v2868 = vunpack.c.h.b16 %v2551
        %v2869 = vunpack.c.l.b16 %v2552
        %v2870 = vunpack.c.h.b16 %v2552
        %v2871 = vunpack.c.l.b16 %v2553
        %v2872 = vunpack.c.h.b16 %v2553
        %v2873 = vunpack.c.l.b16 %v2554
        %v2874 = vunpack.c.h.b16 %v2554
        %v2875 = vunpack.c.l.b16 %v2555
        %v2876 = vunpack.c.h.b16 %v2555
        %v2877 = vunpack.c.l.b16 %v2556
        %v2878 = vunpack.c.h.b16 %v2556
        %v2879 = vunpack.c.l.b16 %v2557
        %v2880 = vunpack.c.h.b16 %v2557
        %v2881 = vunpack.c.l.b16 %v2558
        %v2882 = vunpack.c.h.b16 %v2558
        %v2883 = vunpack.c.l.b16 %v2559
        %v2884 = vunpack.c.h.b16 %v2559
        %v2885 = vunpack.c.l.b16 %v2560
        %v2886 = vunpack.c.h.b16 %v2560
        %v2887 = vunpack.c.l.b16 %v2561
        %v2888 = vunpack.c.h.b16 %v2561
        %v2889 = vunpack.c.l.b16 %v2562
        %v2890 = vunpack.c.h.b16 %v2562
        %v2891 = vunpack.c.l.b16 %v2563
        %v2892 = vunpack.c.h.b16 %v2563
        %v2893 = vunpack.c.l.b16 %v2564
        %v2894 = vunpack.c.h.b16 %v2564
        %v2895 = vunpack.c.l.b16 %v2565
        %v2896 = vunpack.c.h.b16 %v2565
        %v2897 = vunpack.c.l.b16 %v2566
        %v2898 = vunpack.c.h.b16 %v2566
        %v2899 = vunpack.c.l.b16 %v2567
        %v2900 = vunpack.c.h.b16 %v2567
        %v2901 = vunpack.c.l.b16 %v2568
        %v2902 = vunpack.c.h.b16 %v2568
        %v2903 = vunpack.c.l.b16 %v2569
        %v2904 = vunpack.c.h.b16 %v2569
        %v2905 = vunpack.c.l.b16 %v2570
        %v2906 = vunpack.c.h.b16 %v2570
        %v2907 = vunpack.c.l.b16 %v2571
        %v2908 = vunpack.c.h.b16 %v2571
        %v2909 = vunpack.c.l.b16 %v2572
        %v2910 = vunpack.c.h.b16 %v2572
        %v2911 = vunpack.c.l.b16 %v2573
        %v2912 = vunpack.c.h.b16 %v2573
        %v2913 = vunpack.c.l.b16 %v2574
        %v2914 = vunpack.c.h.b16 %v2574
        %v2915 = vunpack.c.l.b16 %v2575
        %v2916 = vunpack.c.h.b16 %v2575
        %v2917 = vunpack.c.l.b16 %v2576
        %v2918 = vunpack.c.h.b16 %v2576
        %v2919 = vunpack.c.l.b16 %v2577
        %v2920 = vunpack.c.h.b16 %v2577
        %v2921 = vunpack.c.l.b16 %v2578
        %v2922 = vunpack.c.h.b16 %v2578
        %v2923 = vunpack.c.l.b16 %v2579
        %v2924 = vunpack.c.h.b16 %v2579
        %v2925 = vunpack.c.l.b16 %v2580
        %v2926 = vunpack.c.h.b16 %v2580
        %v2927 = vunpack.c.l.b16 %v2581
        %v2928 = vunpack.c.h.b16 %v2581
        %v2929 = vunpack.c.l.b16 %v2582
        %v2930 = vunpack.c.h.b16 %v2582
        %v2931 = vunpack.c.l.b16 %v2583
        %v2932 = vunpack.c.h.b16 %v2583
        %v2933 = vunpack.c.l.b16 %v2584
        %v2934 = vunpack.c.h.b16 %v2584
        %v2935 = vunpack.c.l.b16 %v2585
        %v2936 = vunpack.c.h.b16 %v2585
        %v2937 = vunpack.c.l.b16 %v2586
        %v2938 = vunpack.c.h.b16 %v2586
        %v2939 = vunpack.c.l.b16 %v2587
        %v2940 = vunpack.c.h.b16 %v2587
        %v2941 = vunpack.c.l.b16 %v2588
        %v2942 = vunpack.c.h.b16 %v2588
        %v2943 = vunpack.c.l.b16 %v2589
        %v2944 = vunpack.c.h.b16 %v2589
        %v2945 = vunpack.c.l.b16 %v2590
        %v2946 = vunpack.c.h.b16 %v2590
        %v2947 = vunpack.c.l.b16 %v2591
        %v2948 = vunpack.c.h.b16 %v2591
        %v2949 = vunpack.c.l.b16 %v2592
        %v2950 = vunpack.c.h.b16 %v2592
        %v2951 = vunpack.c.l.b16 %v2593
        %v2952 = vunpack.c.h.b16 %v2593
        %v2953 = vunpack.c.l.b16 %v2594
        %v2954 = vunpack.c.h.b16 %v2594
        %v2955 = vunpack.c.l.b16 %v2595
        %v2956 = vunpack.c.h.b16 %v2595
        %v2957 = vunpack.c.l.b16 %v2596
        %v2958 = vunpack.c.h.b16 %v2596
        %v2959 = vunpack.c.l.b16 %v2597
        %v2960 = vunpack.c.h.b16 %v2597
        %v2961 = vunpack.c.l.b16 %v2598
        %v2962 = vunpack.c.h.b16 %v2598
        %v2963 = vunpack.c.l.b16 %v2599
        %v2964 = vunpack.c.h.b16 %v2599
        %v2965 = vunpack.c.l.b16 %v2600
        %v2966 = vunpack.c.h.b16 %v2600
        %v2967 = vunpack.c.l.b16 %v2601
        %v2968 = vunpack.c.h.b16 %v2601
        %v2969 = vunpack.c.l.b16 %v2602
        %v2970 = vunpack.c.h.b16 %v2602
        %v2971 = vunpack.c.l.b16 %v2603
        %v2972 = vunpack.c.h.b16 %v2603
        %v2973 = vunpack.c.l.b16 %v2604
        %v2974 = vunpack.c.h.b16 %v2604
        %v2975 = vunpack.c.l.b16 %v2605
        %v2976 = vunpack.c.h.b16 %v2605
        %v2977 = vunpack.c.l.b16 %v2606
        %v2978 = vunpack.c.h.b16 %v2606
        %v2979 = vunpack.c.l.b16 %v2607
        %v2980 = vunpack.c.h.b16 %v2607
        %v2981 = vunpack.c.l.b16 %v2608
        %v2982 = vunpack.c.h.b16 %v2608
        %v2983 = vunpack.c.l.b16 %v2609
        %v2984 = vunpack.c.h.b16 %v2609
        %v2985 = vunpack.c.l.b16 %v2610
        %v2986 = vunpack.c.h.b16 %v2610
        %v2987 = vunpack.c.l.b16 %v2611
        %v2988 = vunpack.c.h.b16 %v2611
        %v2989 = vunpack.c.l.b16 %v2612
        %v2990 = vunpack.c.h.b16 %v2612
        %v2991 = vunpack.c.l.b16 %v2613
        %v2992 = vunpack.c.h.b16 %v2613
        %v2993 = vunpack.c.l.b16 %v2614
        %v2994 = vunpack.c.h.b16 %v2614
        %v2995 = vunpack.c.l.b16 %v2615
        %v2996 = vunpack.c.h.b16 %v2615
        %v2997 = vunpack.c.l.b16 %v2616
        %v2998 = vunpack.c.h.b16 %v2616
        %v2999 = vunpack.c.l.b16 %v2617
        %v3000 = vunpack.c.h.b16 %v2617
        %v3001 = vunpack.c.l.b16 %v2618
        %v3002 = vunpack.c.h.b16 %v2618
        %v3003 = vunpack.c.l.b16 %v2619
        %v3004 = vunpack.c.h.b16 %v2619
        %v3005 = vunpack.c.l.b16 %v2620
        %v3006 = vunpack.c.h.b16 %v2620
        %v3007 = vunpack.c.l.b16 %v2621
        %v3008 = vunpack.c.h.b16 %v2621
        %v3009 = vunpack.c.l.b16 %v2622
        %v3010 = vunpack.c.h.b16 %v2622
        %v3011 = vunpack.c.l.b16 %v2623
        %v3012 = vunpack.c.h.b16 %v2623
        %v3013 = vunpack.c.l.b16 %v2624
        %v3014 = vunpack.c.h.b16 %v2624
        %v3015 = vunpack.c.l.b16 %v2625
        %v3016 = vunpack.c.h.b16 %v2625
        %v3017 = vunpack.c.l.b16 %v2626
        %v3018 = vunpack.c.h.b16 %v2626
        %v3019 = vunpack.c.l.b16 %v2627
        %v3020 = vunpack.c.h.b16 %v2627
        %v3021 = vunpack.c.l.b16 %v2628
        %v3022 = vunpack.c.h.b16 %v2628
        %v3023 = vunpack.c.l.b16 %v2629
        %v3024 = vunpack.c.h.b16 %v2629
        %v3025 = vunpack.c.l.b16 %v2630
        %v3026 = vunpack.c.h.b16 %v2630
        %v3027 = vunpack.c.l.b16 %v2631
        %v3028 = vunpack.c.h.b16 %v2631
        %v3029 = vunpack.c.l.b16 %v2632
        %v3030 = vunpack.c.h.b16 %v2632
        %v3031 = vunpack.c.l.b16 %v2633
        %v3032 = vunpack.c.h.b16 %v2633
        %v3033 = vunpack.c.l.b16 %v2634
        %v3034 = vunpack.c.h.b16 %v2634
        %v3035 = vunpack.c.l.b16 %v2635
        %v3036 = vunpack.c.h.b16 %v2635
        %v3037 = vunpack.c.l.b16 %v2636
        %v3038 = vunpack.c.h.b16 %v2636
        %v3039 = vunpack.c.l.b16 %v2637
        %v3040 = vunpack.c.h.b16 %v2637
        %v3041 = vunpack.c.l.b16 %v2638
        %v3042 = vunpack.c.h.b16 %v2638
        %v3043 = vunpack.c.l.b16 %v2639
        %v3044 = vunpack.c.h.b16 %v2639
        %v3045 = vunpack.c.l.b16 %v2640
        %v3046 = vunpack.c.h.b16 %v2640
        %v3047 = vunpack.c.l.b16 %v2641
        %v3048 = vunpack.c.h.b16 %v2641
        %v3049 = vunpack.c.l.b16 %v2642
        %v3050 = vunpack.c.h.b16 %v2642
        %v3051 = vunpack.c.l.b16 %v2643
        %v3052 = vunpack.c.h.b16 %v2643
        %v3053 = vunpack.c.l.b16 %v2644
        %v3054 = vunpack.c.h.b16 %v2644
        %v3055 = vunpack.c.l.b16 %v2645
        %v3056 = vunpack.c.h.b16 %v2645
        %v3057 = vunpack.c.l.b16 %v2646
        %v3058 = vunpack.c.h.b16 %v2646
        %v3059 = vunpack.c.l.b16 %v2647
        %v3060 = vunpack.c.h.b16 %v2647
        %v3061 = vunpack.c.l.b16 %v2648
        %v3062 = vunpack.c.h.b16 %v2648
        %v3063 = vunpack.c.l.b16 %v2649
        %v3064 = vunpack.c.h.b16 %v2649
        %v3065 = vunpack.c.l.b16 %v2650
        %v3066 = vunpack.c.h.b16 %v2650
        %v3067 = vunpack.c.l.b16 %v2651
        %v3068 = vunpack.c.h.b16 %v2651
        %v3069 = vunpack.c.l.b16 %v2652
        %v3070 = vunpack.c.h.b16 %v2652
        %v3071 = vunpack.c.l.b16 %v2653
        %v3072 = vunpack.c.h.b16 %v2653
        %v3073 = vunpack.c.l.b16 %v2654
        %v3074 = vunpack.c.h.b16 %v2654
        %v3075 = vunpack.c.l.b16 %v2655
        %v3076 = vunpack.c.h.b16 %v2655
        %v3077 = vunpack.c.l.b16 %v2656
        %v3078 = vunpack.c.h.b16 %v2656
        %v3079 = vunpack.c.l.b16 %v2657
        %v3080 = vunpack.c.h.b16 %v2657
        %v3081 = vunpack.c.l.b16 %v2658
        %v3082 = vunpack.c.h.b16 %v2658
        %v3083 = vunpack.c.l.b16 %v2659
        %v3084 = vunpack.c.h.b16 %v2659
        %v3085 = vunpack.c.l.b16 %v2660
        %v3086 = vunpack.c.h.b16 %v2660
        %v3087 = vunpack.c.l.b16 %v2661
        %v3088 = vunpack.c.h.b16 %v2661
        %v3089 = vunpack.c.l.b16 %v2662
        %v3090 = vunpack.c.h.b16 %v2662
        %v3091 = vunpack.c.l.b16 %v2663
        %v3092 = vunpack.c.h.b16 %v2663
        %v3093 = vpack.c.b16 %v2841, %v2837
        %v3094 = vpack.c.b16 %v2842, %v2838
        %v3095 = vpack.c.b16 %v2843, %v2839
        %v3096 = vpack.c.b16 %v2844, %v2840
        %v3097 = vpack.c.b16 %v2849, %v2845
        %v3098 = vpack.c.b16 %v2850, %v2846
        %v3099 = vpack.c.b16 %v2851, %v2847
        %v3100 = vpack.c.b16 %v2852, %v2848
        %v3101 = vpack.c.b16 %v2857, %v2853
        %v3102 = vpack.c.b16 %v2858, %v2854
        %v3103 = vpack.c.b16 %v2859, %v2855
        %v3104 = vpack.c.b16 %v2860, %v2856
        %v3105 = vpack.c.b16 %v2865, %v2861
        %v3106 = vpack.c.b16 %v2866, %v2862
        %v3107 = vpack.c.b16 %v2867, %v2863
        %v3108 = vpack.c.b16 %v2868, %v2864
        %v3109 = vpack.c.b16 %v2873, %v2869
        %v3110 = vpack.c.b16 %v2874, %v2870
        %v3111 = vpack.c.b16 %v2875, %v2871
        %v3112 = vpack.c.b16 %v2876, %v2872
        %v3113 = vpack.c.b16 %v2881, %v2877
        %v3114 = vpack.c.b16 %v2882, %v2878
        %v3115 = vpack.c.b16 %v2883, %v2879
        %v3116 = vpack.c.b16 %v2884, %v2880
        %v3117 = vpack.c.b16 %v2889, %v2885
        %v3118 = vpack.c.b16 %v2890, %v2886
        %v3119 = vpack.c.b16 %v2891, %v2887
        %v3120 = vpack.c.b16 %v2892, %v2888
        %v3121 = vpack.c.b16 %v2897, %v2893
        %v3122 = vpack.c.b16 %v2898, %v2894
        %v3123 = vpack.c.b16 %v2899, %v2895
        %v3124 = vpack.c.b16 %v2900, %v2896
        %v3125 = vpack.c.b16 %v2905, %v2901
        %v3126 = vpack.c.b16 %v2906, %v2902
        %v3127 = vpack.c.b16 %v2907, %v2903
        %v3128 = vpack.c.b16 %v2908, %v2904
        %v3129 = vpack.c.b16 %v2913, %v2909
        %v3130 = vpack.c.b16 %v2914, %v2910
        %v3131 = vpack.c.b16 %v2915, %v2911
        %v3132 = vpack.c.b16 %v2916, %v2912
        %v3133 = vpack.c.b16 %v2921, %v2917
        %v3134 = vpack.c.b16 %v2922, %v2918
        %v3135 = vpack.c.b16 %v2923, %v2919
        %v3136 = vpack.c.b16 %v2924, %v2920
        %v3137 = vpack.c.b16 %v2929, %v2925
        %v3138 = vpack.c.b16 %v2930, %v2926
        %v3139 = vpack.c.b16 %v2931, %v2927
        %v3140 = vpack.c.b16 %v2932, %v2928
        %v3141 = vpack.c.b16 %v2937, %v2933
        %v3142 = vpack.c.b16 %v2938, %v2934
        %v3143 = vpack.c.b16 %v2939, %v2935
        %v3144 = vpack.c.b16 %v2940, %v2936
        %v3145 = vpack.c.b16 %v2945, %v2941
        %v3146 = vpack.c.b16 %v2946, %v2942
        %v3147 = vpack.c.b16 %v2947, %v2943
        %v3148 = vpack.c.b16 %v2948, %v2944
        %v3149 = vpack.c.b16 %v2953, %v2949
        %v3150 = vpack.c.b16 %v2954, %v2950
        %v3151 = vpack.c.b16 %v2955, %v2951
        %v3152 = vpack.c.b16 %v2956, %v2952
        %v3153 = vpack.c.b16 %v2961, %v2957
        %v3154 = vpack.c.b16 %v2962, %v2958
        %v3155 = vpack.c.b16 %v2963, %v2959
        %v3156 = vpack.c.b16 %v2964, %v2960
        %v3157 = vpack.c.b16 %v2969, %v2965
        %v3158 = vpack.c.b16 %v2970, %v2966
        %v3159 = vpack.c.b16 %v2971, %v2967
        %v3160 = vpack.c.b16 %v2972, %v2968
        %v3161 = vpack.c.b16 %v2977, %v2973
        %v3162 = vpack.c.b16 %v2978, %v2974
        %v3163 = vpack.c.b16 %v2979, %v2975
        %v3164 = vpack.c.b16 %v2980, %v2976
        %v3165 = vpack.c.b16 %v2985, %v2981
        %v3166 = vpack.c.b16 %v2986, %v2982
        %v3167 = vpack.c.b16 %v2987, %v2983
        %v3168 = vpack.c.b16 %v2988, %v2984
        %v3169 = vpack.c.b16 %v2993, %v2989
        %v3170 = vpack.c.b16 %v2994, %v2990
        %v3171 = vpack.c.b16 %v2995, %v2991
        %v3172 = vpack.c.b16 %v2996, %v2992
        %v3173 = vpack.c.b16 %v3001, %v2997
        %v3174 = vpack.c.b16 %v3002, %v2998
        %v3175 = vpack.c.b16 %v3003, %v2999
        %v3176 = vpack.c.b16 %v3004, %v3000
        %v3177 = vpack.c.b16 %v3009, %v3005
        %v3178 = vpack.c.b16 %v3010, %v3006
        %v3179 = vpack.c.b16 %v3011, %v3007
        %v3180 = vpack.c.b16 %v3012, %v3008
        %v3181 = vpack.c.b16 %v3017, %v3013
        %v3182 = vpack.c.b16 %v3018, %v3014
        %v3183 = vpack.c.b16 %v3019, %v3015
        %v3184 = vpack.c.b16 %v3020, %v3016
        %v3185 = vpack.c.b16 %v3025, %v3021
        %v3186 = vpack.c.b16 %v3026, %v3022
        %v3187 = vpack.c.b16 %v3027, %v3023
        %v3188 = vpack.c.b16 %v3028, %v3024
        %v3189 = vpack.c.b16 %v3033, %v3029
        %v3190 = vpack.c.b16 %v3034, %v3030
        %v3191 = vpack.c.b16 %v3035, %v3031
        %v3192 = vpack.c.b16 %v3036, %v3032
        %v3193 = vpack.c.b16 %v3041, %v3037
        %v3194 = vpack.c.b16 %v3042, %v3038
        %v3195 = vpack.c.b16 %v3043, %v3039
        %v3196 = vpack.c.b16 %v3044, %v3040
        %v3197 = vpack.c.b16 %v3049, %v3045
        %v3198 = vpack.c.b16 %v3050, %v3046
        %v3199 = vpack.c.b16 %v3051, %v3047
        %v3200 = vpack.c.b16 %v3052, %v3048
        %v3201 = vpack.c.b16 %v3057, %v3053
        %v3202 = vpack.c.b16 %v3058, %v3054
        %v3203 = vpack.c.b16 %v3059, %v3055
        %v3204 = vpack.c.b16 %v3060, %v3056
        %v3205 = vpack.c.b16 %v3065, %v3061
        %v3206 = vpack.c.b16 %v3066, %v3062
        %v3207 = vpack.c.b16 %v3067, %v3063
        %v3208 = vpack.c.b16 %v3068, %v3064
        %v3209 = vpack.c.b16 %v3073, %v3069
        %v3210 = vpack.c.b16 %v3074, %v3070
        %v3211 = vpack.c.b16 %v3075, %v3071
        %v3212 = vpack.c.b16 %v3076, %v3072
        %v3213 = vpack.c.b16 %v3081, %v3077
        %v3214 = vpack.c.b16 %v3082, %v3078
        %v3215 = vpack.c.b16 %v3083, %v3079
        %v3216 = vpack.c.b16 %v3084, %v3080
        %v3217 = vpack.c.b16 %v3089, %v3085
        %v3218 = vpack.c.b16 %v3090, %v3086
        %v3219 = vpack.c.b16 %v3091, %v3087
        %v3220 = vpack.c.b16 %v3092, %v3088
        %3349 = vmatprep.subr.bf16.mxu0 %v3122
        %3350 = vmatpush1.bf16.msra.mxu0 %v3121
        %3351 = vmatprep.subr.bf16.mxu0 %v3118
        %3352 = vmatpush1.bf16.msra.mxu0 %v3117
        %3353 = vmatprep.subr.bf16.mxu0 %v3114
        %3354 = vmatpush1.bf16.msra.mxu0 %v3113
        %3355 = vmatprep.subr.bf16.mxu0 %v3110
        %3356 = vmatpush1.bf16.msra.mxu0 %v3109
        %3357 = vmatprep.subr.bf16.mxu0 %v3106
        %3358 = vmatpush1.bf16.msra.mxu0 %v3105
        %3359 = vmatprep.subr.bf16.mxu0 %v3102
        %3360 = vmatpush1.bf16.msra.mxu0 %v3101
        %3361 = vmatprep.subr.bf16.mxu0 %v3098
        %3362 = vmatpush1.bf16.msra.mxu0 %v3097
        %3363 = vmatprep.subr.bf16.mxu0 %v3094
        %3364 = vmatpush1.bf16.msra.mxu0 %v3093
        %3365 = vmatprep.subr.bf16.mxu0 %v3154
        %3366 = vmatpush2.bf16.msra.mxu0 %v3153
        %3367 = vmatprep.subr.bf16.mxu0 %v3150
        %3368 = vmatpush2.bf16.msra.mxu0 %v3149
        %3369 = vmatprep.subr.bf16.mxu0 %v3146
        %3370 = vmatpush2.bf16.msra.mxu0 %v3145
        %3371 = vmatprep.subr.bf16.mxu0 %v3142
        %3372 = vmatpush2.bf16.msra.mxu0 %v3141
        %3373 = vmatprep.subr.bf16.mxu0 %v3138
        %3374 = vmatpush2.bf16.msra.mxu0 %v3137
        %3375 = vmatprep.subr.bf16.mxu0 %v3134
        %3376 = vmatpush2.bf16.msra.mxu0 %v3133
        %3377 = vmatprep.subr.bf16.mxu0 %v3130
        %3378 = vmatpush2.bf16.msra.mxu0 %v3129
        %3379 = vmatprep.subr.bf16.mxu0 %v3126
        %3380 = vmatpush2.bf16.msra.mxu0 %v3125
        %3381 = vmatprep.mubr.bf16.mxu0 %v2682
        %3382 = vmatmul.mubr.bf16.gmra.mxu0 %v2679
        %v3383 = vpop.f32.mrf.mxu0
        %v3384 = vadd.f32 0.0, %v3383
        %v3385 = vpop.f32.mrf.mxu0
        %v3386 = vadd.f32 0.0, %v3385
        %v3387 = vpop.f32.mrf.mxu0
        %v3388 = vadd.f32 0.0, %v3387
        %v3389 = vpop.f32.mrf.mxu0
        %v3390 = vadd.f32 0.0, %v3389
        %3391 = vmatprep.mubr.bf16.mxu0 %v2692
        %3392 = vmatmul.mubr.bf16.gmra.mxu0 %v2690
        %v3393 = vpop.f32.mrf.mxu0
        %v3394 = vadd.f32 0.0, %v3393
        %v3395 = vpop.f32.mrf.mxu0
        %v3396 = vadd.f32 0.0, %v3395
        %v3397 = vpop.f32.mrf.mxu0
        %v3398 = vadd.f32 0.0, %v3397
        %v3399 = vpop.f32.mrf.mxu0
        %v3400 = vadd.f32 0.0, %v3399
        %3401 = vmatprep.mubr.bf16.mxu0 %v2691
        %3402 = vmatmul.mubr.bf16.gmra.mxu0 %v2689
        %v3403 = vpop.f32.mrf.mxu0
        %v3404 = vadd.f32 0.0, %v3403
        %v3405 = vpop.f32.mrf.mxu0
        %v3406 = vadd.f32 0.0, %v3405
        %v3407 = vpop.f32.mrf.mxu0
        %v3408 = vpop.f32.mrf.mxu0
        %3409 = vdwg.mxu0
        %3410 = vmatprep.subr.bf16.mxu0 %v3186
        %3411 = vmatpush1.bf16.msra.mxu0 %v3185
        %3412 = vmatprep.subr.bf16.mxu0 %v3182
        %3413 = vmatpush1.bf16.msra.mxu0 %v3181
        %3414 = vmatprep.subr.bf16.mxu0 %v3178
        %3415 = vmatpush1.bf16.msra.mxu0 %v3177
        %3416 = vmatprep.subr.bf16.mxu0 %v3174
        %3417 = vmatpush1.bf16.msra.mxu0 %v3173
        %3418 = vmatprep.subr.bf16.mxu0 %v3170
        %3419 = vmatpush1.bf16.msra.mxu0 %v3169
        %3420 = vmatprep.subr.bf16.mxu0 %v3166
        %3421 = vmatpush1.bf16.msra.mxu0 %v3165
        %3422 = vmatprep.subr.bf16.mxu0 %v3162
        %3423 = vmatpush1.bf16.msra.mxu0 %v3161
        %3424 = vmatprep.subr.bf16.mxu0 %v3158
        %3425 = vmatpush1.bf16.msra.mxu0 %v3157
        %3426 = vmatprep.subr.bf16.mxu0 %v3218
        %3427 = vmatpush2.bf16.msra.mxu0 %v3217
        %3428 = vmatprep.subr.bf16.mxu0 %v3214
        %3429 = vmatpush2.bf16.msra.mxu0 %v3213
        %3430 = vmatprep.subr.bf16.mxu0 %v3210
        %3431 = vmatpush2.bf16.msra.mxu0 %v3209
        %3432 = vmatprep.subr.bf16.mxu0 %v3206
        %3433 = vmatpush2.bf16.msra.mxu0 %v3205
        %3434 = vmatprep.subr.bf16.mxu0 %v3202
        %3435 = vmatpush2.bf16.msra.mxu0 %v3201
        %3436 = vmatprep.subr.bf16.mxu0 %v3198
        %3437 = vmatpush2.bf16.msra.mxu0 %v3197
        %3438 = vmatprep.subr.bf16.mxu0 %v3194
        %3439 = vmatpush2.bf16.msra.mxu0 %v3193
        %3440 = vmatprep.subr.bf16.mxu0 %v3190
        %3441 = vmatpush2.bf16.msra.mxu0 %v3189
        %3442 = vmatprep.mubr.bf16.mxu0 %v2688
        %3443 = vmatmul.mubr.bf16.gmra.mxu0 %v2685
        %v3444 = vpop.f32.mrf.mxu0
        %v3445 = vadd.f32 %v3384, %v3444
        %v3446 = vpop.f32.mrf.mxu0
        %v3447 = vadd.f32 %v3386, %v3446
        %v3448 = vpop.f32.mrf.mxu0
        %v3449 = vadd.f32 %v3388, %v3448
        %v3450 = vpop.f32.mrf.mxu0
        %v3451 = vadd.f32 %v3390, %v3450
        %3452 = vmatprep.mubr.bf16.mxu0 %v2696
        %3453 = vmatmul.mubr.bf16.gmra.mxu0 %v2694
        %v3454 = vpop.f32.mrf.mxu0
        %v3455 = vadd.f32 %v3394, %v3454
        %v3456 = vpop.f32.mrf.mxu0
        %v3457 = vadd.f32 %v3396, %v3456
        %v3458 = vpop.f32.mrf.mxu0
        %v3459 = vadd.f32 %v3398, %v3458
        %v3460 = vpop.f32.mrf.mxu0
        %v3461 = vadd.f32 %v3400, %v3460
        %3462 = vmatprep.mubr.bf16.mxu0 %v2695
        %3463 = vmatmul.mubr.bf16.gmra.mxu0 %v2693
        %v3464 = vpop.f32.mrf.mxu0
        %v3465 = vadd.f32 %v3404, %v3464
        %v3466 = vpop.f32.mrf.mxu0
        %v3467 = vadd.f32 %v3406, %v3466
        %v3468 = vpop.f32.mrf.mxu0
        %v3469 = vpop.f32.mrf.mxu0
        %3470 = vdwg.mxu0
        %3471 = vmatprep.subr.bf16.mxu0 %v3124
        %3472 = vmatpush1.bf16.msra.mxu0 %v3123
        %3473 = vmatprep.subr.bf16.mxu0 %v3120
        %3474 = vmatpush1.bf16.msra.mxu0 %v3119
        %3475 = vmatprep.subr.bf16.mxu0 %v3116
        %3476 = vmatpush1.bf16.msra.mxu0 %v3115
        %3477 = vmatprep.subr.bf16.mxu0 %v3112
        %3478 = vmatpush1.bf16.msra.mxu0 %v3111
        %3479 = vmatprep.subr.bf16.mxu0 %v3108
        %3480 = vmatpush1.bf16.msra.mxu0 %v3107
        %3481 = vmatprep.subr.bf16.mxu0 %v3104
        %3482 = vmatpush1.bf16.msra.mxu0 %v3103
        %3483 = vmatprep.subr.bf16.mxu0 %v3100
        %3484 = vmatpush1.bf16.msra.mxu0 %v3099
        %3485 = vmatprep.subr.bf16.mxu0 %v3096
        %3486 = vmatpush1.bf16.msra.mxu0 %v3095
        %3487 = vmatprep.subr.bf16.mxu0 %v3156
        %3488 = vmatpush2.bf16.msra.mxu0 %v3155
        %3489 = vmatprep.subr.bf16.mxu0 %v3152
        %3490 = vmatpush2.bf16.msra.mxu0 %v3151
        %3491 = vmatprep.subr.bf16.mxu0 %v3148
        %3492 = vmatpush2.bf16.msra.mxu0 %v3147
        %3493 = vmatprep.subr.bf16.mxu0 %v3144
        %3494 = vmatpush2.bf16.msra.mxu0 %v3143
        %3495 = vmatprep.subr.bf16.mxu0 %v3140
        %3496 = vmatpush2.bf16.msra.mxu0 %v3139
        %3497 = vmatprep.subr.bf16.mxu0 %v3136
        %3498 = vmatpush2.bf16.msra.mxu0 %v3135
        %3499 = vmatprep.subr.bf16.mxu0 %v3132
        %3500 = vmatpush2.bf16.msra.mxu0 %v3131
        %3501 = vmatprep.subr.bf16.mxu0 %v3128
        %3502 = vmatpush2.bf16.msra.mxu0 %v3127
        %3503 = vmatprep.mubr.bf16.mxu0 %v2682
        %3504 = vmatmul.mubr.bf16.gmra.mxu0 %v2679
        %v3505 = vpop.f32.mrf.mxu0
        %v3506 = vadd.f32 0.0, %v3505
        %v3507 = vpop.f32.mrf.mxu0
        %v3508 = vadd.f32 0.0, %v3507
        %v3509 = vpop.f32.mrf.mxu0
        %v3510 = vadd.f32 0.0, %v3509
        %v3511 = vpop.f32.mrf.mxu0
        %v3512 = vadd.f32 0.0, %v3511
        %3513 = vmatprep.mubr.bf16.mxu0 %v2692
        %3514 = vmatmul.mubr.bf16.gmra.mxu0 %v2690
        %v3515 = vpop.f32.mrf.mxu0
        %v3516 = vadd.f32 0.0, %v3515
        %v3517 = vpop.f32.mrf.mxu0
        %v3518 = vadd.f32 0.0, %v3517
        %v3519 = vpop.f32.mrf.mxu0
        %v3520 = vadd.f32 0.0, %v3519
        %v3521 = vpop.f32.mrf.mxu0
        %v3522 = vadd.f32 0.0, %v3521
        %3523 = vmatprep.mubr.bf16.mxu0 %v2691
        %3524 = vmatmul.mubr.bf16.gmra.mxu0 %v2689
        %v3525 = vpop.f32.mrf.mxu0
        %v3526 = vadd.f32 0.0, %v3525
        %v3527 = vpop.f32.mrf.mxu0
        %v3528 = vadd.f32 0.0, %v3527
        %v3529 = vpop.f32.mrf.mxu0
        %v3530 = vpop.f32.mrf.mxu0
        %3531 = vdwg.mxu0
        %3532 = vmatprep.subr.bf16.mxu0 %v3188
        %3533 = vmatpush1.bf16.msra.mxu0 %v3187
        %3534 = vmatprep.subr.bf16.mxu0 %v3184
        %3535 = vmatpush1.bf16.msra.mxu0 %v3183
        %3536 = vmatprep.subr.bf16.mxu0 %v3180
        %3537 = vmatpush1.bf16.msra.mxu0 %v3179
        %3538 = vmatprep.subr.bf16.mxu0 %v3176
        %3539 = vmatpush1.bf16.msra.mxu0 %v3175
        %3540 = vmatprep.subr.bf16.mxu0 %v3172
        %3541 = vmatpush1.bf16.msra.mxu0 %v3171
        %3542 = vmatprep.subr.bf16.mxu0 %v3168
        %3543 = vmatpush1.bf16.msra.mxu0 %v3167
        %3544 = vmatprep.subr.bf16.mxu0 %v3164
        %3545 = vmatpush1.bf16.msra.mxu0 %v3163
        %3546 = vmatprep.subr.bf16.mxu0 %v3160
        %3547 = vmatpush1.bf16.msra.mxu0 %v3159
        %3548 = vmatprep.subr.bf16.mxu0 %v3220
        %3549 = vmatpush2.bf16.msra.mxu0 %v3219
        %3550 = vmatprep.subr.bf16.mxu0 %v3216
        %3551 = vmatpush2.bf16.msra.mxu0 %v3215
        %3552 = vmatprep.subr.bf16.mxu0 %v3212
        %3553 = vmatpush2.bf16.msra.mxu0 %v3211
        %3554 = vmatprep.subr.bf16.mxu0 %v3208
        %3555 = vmatpush2.bf16.msra.mxu0 %v3207
        %3556 = vmatprep.subr.bf16.mxu0 %v3204
        %3557 = vmatpush2.bf16.msra.mxu0 %v3203
        %3558 = vmatprep.subr.bf16.mxu0 %v3200
        %3559 = vmatpush2.bf16.msra.mxu0 %v3199
        %3560 = vmatprep.subr.bf16.mxu0 %v3196
        %3561 = vmatpush2.bf16.msra.mxu0 %v3195
        %3562 = vmatprep.subr.bf16.mxu0 %v3192
        %3563 = vmatpush2.bf16.msra.mxu0 %v3191
        %3564 = vmatprep.mubr.bf16.mxu0 %v2688
        %3565 = vmatmul.mubr.bf16.gmra.mxu0 %v2685
        %v3566 = vpop.f32.mrf.mxu0
        %v3567 = vadd.f32 %v3506, %v3566
        %v3568 = vpop.f32.mrf.mxu0
        %v3569 = vadd.f32 %v3508, %v3568
        %v3570 = vpop.f32.mrf.mxu0
        %v3571 = vadd.f32 %v3510, %v3570
        %v3572 = vpop.f32.mrf.mxu0
        %v3573 = vadd.f32 %v3512, %v3572
        %3574 = vmatprep.mubr.bf16.mxu0 %v2696
        %3575 = vmatmul.mubr.bf16.gmra.mxu0 %v2694
        %v3576 = vpop.f32.mrf.mxu0
        %v3577 = vadd.f32 %v3516, %v3576
        %v3578 = vpop.f32.mrf.mxu0
        %v3579 = vadd.f32 %v3518, %v3578
        %v3580 = vpop.f32.mrf.mxu0
        %v3581 = vadd.f32 %v3520, %v3580
        %v3582 = vpop.f32.mrf.mxu0
        %v3583 = vadd.f32 %v3522, %v3582
        %3584 = vmatprep.mubr.bf16.mxu0 %v2695
        %3585 = vmatmul.mubr.bf16.gmra.mxu0 %v2693
        %v3586 = vpop.f32.mrf.mxu0
        %v3587 = vadd.f32 %v3526, %v3586
        %v3588 = vpop.f32.mrf.mxu0
        %v3589 = vadd.f32 %v3528, %v3588
        %v3590 = vpop.f32.mrf.mxu0
        %v3591 = vpop.f32.mrf.mxu0
        %3592 = vdwg.mxu0
        %v3593 = vadd.f32 %v2371, %v3445
        %v3594 = vadd.f32 %v2373, %v3447
        %v3595 = vadd.f32 %v2493, %v3567
        %v3596 = vadd.f32 %v2495, %v3569
        %v3597 = vadd.f32 %v2375, %v3449
        %v3598 = vadd.f32 %v2377, %v3451
        %v3599 = vadd.f32 %v2497, %v3571
        %v3600 = vadd.f32 %v2499, %v3573
        %v3601 = vadd.f32 %v2381, %v3455
        %v3602 = vadd.f32 %v2383, %v3457
        %v3603 = vadd.f32 %v2503, %v3577
        %v3604 = vadd.f32 %v2505, %v3579
        %v3605 = vadd.f32 %v2385, %v3459
        %v3606 = vadd.f32 %v2387, %v3461
        %v3607 = vadd.f32 %v2507, %v3581
        %v3608 = vadd.f32 %v2509, %v3583
        %v3609 = vadd.f32 %v2391, %v3465
        %v3610 = vadd.f32 %v2393, %v3467
        %v3611 = vadd.f32 %v2513, %v3587
        %v3612 = vadd.f32 %v2515, %v3589
        %v3613 = vld [vmem:[%s191] sm:$0xf]
        %v3615 = vlaneseq
        %v3616 = vshrl.u32 %v3615, 7
        %v3617 = vsub.s32 0, %v3616
        %v3618 = vrot.slane %v3613, %v3617
        %v3619 = vlaneseq
        %v3620 = vshrl.u32 %v3619, 7
        %v3621 = vsub.s32 1, %v3620
        %v3622 = vrot.slane %v3613, %v3621
        %v3623 = vlaneseq
        %v3624 = vshrl.u32 %v3623, 7
        %v3625 = vsub.s32 2, %v3624
        %v3626 = vrot.slane %v3613, %v3625
        %v3627 = vlaneseq
        %v3628 = vshrl.u32 %v3627, 7
        %v3629 = vsub.s32 3, %v3628
        %v3630 = vrot.slane %v3613, %v3629
        %v3635 = vadd.f32 %v3593, %v3618
        %v3636 = vadd.f32 %v3594, %v3622
        %v3637 = vadd.f32 %v3595, %v3626
        %v3638 = vadd.f32 %v3596, %v3630
        %v3639 = vadd.f32 %v3597, %v3618
        %v3640 = vadd.f32 %v3598, %v3622
        %v3641 = vadd.f32 %v3599, %v3626
        %v3642 = vadd.f32 %v3600, %v3630
        %v3643 = vadd.f32 %v3601, %v3618
        %v3644 = vadd.f32 %v3602, %v3622
        %v3645 = vadd.f32 %v3603, %v3626
        %v3646 = vadd.f32 %v3604, %v3630
        %v3647 = vadd.f32 %v3605, %v3618
        %v3648 = vadd.f32 %v3606, %v3622
        %v3649 = vadd.f32 %v3607, %v3626
        %v3650 = vadd.f32 %v3608, %v3630
        %v3651 = vadd.f32 %v3609, %v3618
        %v3652 = vadd.f32 %v3610, %v3622
        %v3653 = vadd.f32 %v3611, %v3626
        %v3654 = vadd.f32 %v3612, %v3630
        %p3655 = scmp.lt.s32.totalorder %s20, 4
        // Predicated region
        $region45: #{feature_forward_unit.1} parent=31 // pred_check
          %p3656 = pneg %p3655
        $region46: #{feature_forward_unit.1} parent=31 // pred_check_branch
          %3658 = sbr.rel (%p3656) target = $region48
        $region47: #{feature_forward_unit.1} parent=31 // pred_region
          %vm3659 = vcmp.ge.f32.partialorder %v3635, 0.0
          %vm3660 = vcmp.ge.f32.partialorder %v3636, 0.0
          %vm3661 = vcmp.ge.f32.partialorder %v3637, 0.0
          %vm3662 = vcmp.ge.f32.partialorder %v3638, 0.0
          %vm3663 = vcmp.ge.f32.partialorder %v3639, 0.0
          %vm3664 = vcmp.ge.f32.partialorder %v3640, 0.0
          %vm3665 = vcmp.ge.f32.partialorder %v3641, 0.0
          %vm3666 = vcmp.ge.f32.partialorder %v3642, 0.0
          %vm3667 = vcmp.ge.f32.partialorder %v3643, 0.0
          %vm3668 = vcmp.ge.f32.partialorder %v3644, 0.0
          %vm3669 = vcmp.ge.f32.partialorder %v3645, 0.0
          %vm3670 = vcmp.ge.f32.partialorder %v3646, 0.0
          %vm3671 = vcmp.ge.f32.partialorder %v3647, 0.0
          %vm3672 = vcmp.ge.f32.partialorder %v3648, 0.0
          %vm3673 = vcmp.ge.f32.partialorder %v3649, 0.0
          %vm3674 = vcmp.ge.f32.partialorder %v3650, 0.0
          %vm3675 = vcmp.ge.f32.partialorder %v3651, 0.0
          %vm3676 = vcmp.ge.f32.partialorder %v3652, 0.0
          %vm3677 = vcmp.ge.f32.partialorder %v3653, 0.0
          %vm3678 = vcmp.ge.f32.partialorder %v3654, 0.0
          %v3679 = vmul.f32 %v3635, 0.01
          %v3680 = vmul.f32 %v3636, 0.01
          %v3681 = vmul.f32 %v3637, 0.01
          %v3682 = vmul.f32 %v3638, 0.01
          %v3683 = vmul.f32 %v3639, 0.01
          %v3684 = vmul.f32 %v3640, 0.01
          %v3685 = vmul.f32 %v3641, 0.01
          %v3686 = vmul.f32 %v3642, 0.01
          %v3687 = vmul.f32 %v3643, 0.01
          %v3688 = vmul.f32 %v3644, 0.01
          %v3689 = vmul.f32 %v3645, 0.01
          %v3690 = vmul.f32 %v3646, 0.01
          %v3691 = vmul.f32 %v3647, 0.01
          %v3692 = vmul.f32 %v3648, 0.01
          %v3693 = vmul.f32 %v3649, 0.01
          %v3694 = vmul.f32 %v3650, 0.01
          %v3695 = vmul.f32 %v3651, 0.01
          %v3696 = vmul.f32 %v3652, 0.01
          %v3697 = vmul.f32 %v3653, 0.01
          %v3698 = vmul.f32 %v3654, 0.01
          %v3699 = vsel %vm3659, %v3635, %v3679
          %v3700 = vsel %vm3660, %v3636, %v3680
          %v3701 = vsel %vm3661, %v3637, %v3681
          %v3702 = vsel %vm3662, %v3638, %v3682
          %v3703 = vsel %vm3663, %v3639, %v3683
          %v3704 = vsel %vm3664, %v3640, %v3684
          %v3705 = vsel %vm3665, %v3641, %v3685
          %v3706 = vsel %vm3666, %v3642, %v3686
          %v3707 = vsel %vm3667, %v3643, %v3687
          %v3708 = vsel %vm3668, %v3644, %v3688
          %v3709 = vsel %vm3669, %v3645, %v3689
          %v3710 = vsel %vm3670, %v3646, %v3690
          %v3711 = vsel %vm3671, %v3647, %v3691
          %v3712 = vsel %vm3672, %v3648, %v3692
          %v3713 = vsel %vm3673, %v3649, %v3693
          %v3714 = vsel %vm3674, %v3650, %v3694
          %v3715 = vsel %vm3675, %v3651, %v3695
          %v3716 = vsel %vm3676, %v3652, %v3696
          %v3717 = vsel %vm3677, %v3653, %v3697
          %v3718 = vsel %vm3678, %v3654, %v3698
          %vm3739 = vcmask 1040384
          %v3740 = vrot.slane %v3699, 7
          %v3741 = vrot.slane %v3700, 7
          %v3742 = vrot.slane %v3701, 7
          %v3743 = vrot.slane %v3702, 7
          %v3744 = vrot.slane %v3703, 7
          %v3745 = vsel %vm3739, %v3740, %v3744
          %v3746 = vrot.slane %v3704, 7
          %v3747 = vsel %vm3739, %v3741, %v3746
          %v3748 = vrot.slane %v3705, 7
          %v3749 = vsel %vm3739, %v3742, %v3748
          %v3750 = vrot.slane %v3706, 7
          %v3751 = vsel %vm3739, %v3743, %v3750
          %v3752 = vrot.slane %v3707, 7
          %v3753 = vsel %vm3739, %v3744, %v3752
          %v3754 = vrot.slane %v3708, 7
          %v3755 = vsel %vm3739, %v3746, %v3754
          %v3756 = vrot.slane %v3709, 7
          %v3757 = vsel %vm3739, %v3748, %v3756
          %v3758 = vrot.slane %v3710, 7
          %v3759 = vsel %vm3739, %v3750, %v3758
          %v3760 = vrot.slane %v3711, 7
          %v3761 = vsel %vm3739, %v3752, %v3760
          %v3762 = vrot.slane %v3712, 7
          %v3763 = vsel %vm3739, %v3754, %v3762
          %v3764 = vrot.slane %v3713, 7
          %v3765 = vsel %vm3739, %v3756, %v3764
          %v3766 = vrot.slane %v3714, 7
          %v3767 = vsel %vm3739, %v3758, %v3766
          %v3768 = vrot.slane %v3715, 7
          %v3769 = vsel %vm3739, %v3760, %v3768
          %v3770 = vrot.slane %v3716, 7
          %v3771 = vsel %vm3739, %v3762, %v3770
          %v3772 = vrot.slane %v3717, 7
          %v3773 = vsel %vm3739, %v3764, %v3772
          %v3774 = vrot.slane %v3718, 7
          %v3775 = vsel %vm3739, %v3766, %v3774
          %3796 = vst [vmem:[#allocation2] sm:$0xfe] %v3740
          %3797 = vst [vmem:[#allocation2 + $0x8] sm:$0xfe] %v3741
          %3798 = vst [vmem:[#allocation2 + $0x10] sm:$0xfe] %v3742
          %3799 = vst [vmem:[#allocation2 + $0x18] sm:$0xfe] %v3743
          %3800 = vst [vmem:[#allocation2 + $0x20] sm:$0xff] %v3745
          %3801 = vst [vmem:[#allocation2 + $0x28] sm:$0xff] %v3747
          %3802 = vst [vmem:[#allocation2 + $0x30] sm:$0xff] %v3749
          %3803 = vst [vmem:[#allocation2 + $0x38] sm:$0xff] %v3751
          %3804 = vst [vmem:[#allocation2 + $0x40] sm:$0xff] %v3753
          %3805 = vst [vmem:[#allocation2 + $0x48] sm:$0xff] %v3755
          %3806 = vst [vmem:[#allocation2 + $0x50] sm:$0xff] %v3757
          %3807 = vst [vmem:[#allocation2 + $0x58] sm:$0xff] %v3759
          %3808 = vst [vmem:[#allocation2 + $0x60] sm:$0xff] %v3761
          %3809 = vst [vmem:[#allocation2 + $0x68] sm:$0xff] %v3763
          %3810 = vst [vmem:[#allocation2 + $0x70] sm:$0xff] %v3765
          %3811 = vst [vmem:[#allocation2 + $0x78] sm:$0xff] %v3767
          %3812 = vst [vmem:[#allocation2 + $0x80] sm:$0x3] %v3769
          %3813 = vst [vmem:[#allocation2 + $0x88] sm:$0x3] %v3771
          %3814 = vst [vmem:[#allocation2 + $0x90] sm:$0x3] %v3773
          %3815 = vst [vmem:[#allocation2 + $0x98] sm:$0x3] %v3775
          %v3816 = vlaneseq
          %vm3817 = vcmp.ge.s32.totalorder %v3816, 0
          %vm3818 = vcmp.lt.s32.totalorder %v3816, 512
          %vm3819 = vmand %vm3817, %vm3818
          %s3820 = scalar_lea.vmem [#allocation2], 65
          %3821 = vst.msk [vmem:[%s3820] ss:$8 sm:$0xf] %vm3819, 0.0
          %3822 = vst.msk [vmem:[%s3820] ss:$8 sm:$0x0] %vm3819, 0.0
        $region48: #{feature_forward_unit.1} parent=31 // pred_fallthru
          _
        %p3823 = scmp.eq.s32.totalorder %s20, 4
        // Predicated region
        $region49: #{feature_forward_unit.1} parent=31 // pred_check
          %p3824 = pneg %p3823
        $region50: #{feature_forward_unit.1} parent=31 // pred_check_branch
          %3826 = sbr.rel (%p3824) target = $region52
        $region51: #{feature_forward_unit.1} parent=31 // pred_region
          %v3827 = vld [vmem:[%s0] sm:$0xff]
          %v3828 = vld [vmem:[%s0 + $0x8] sm:$0xff]
          %v3829 = vld [vmem:[%s0 + $0x10] sm:$0xff]
          %v3830 = vld [vmem:[%s0 + $0x18] sm:$0xff]
          %v3831 = vld [vmem:[%s0 + $0x20] sm:$0xff]
          %v3832 = vld [vmem:[%s0 + $0x28] sm:$0xff]
          %v3833 = vld [vmem:[%s0 + $0x30] sm:$0xff]
          %v3834 = vld [vmem:[%s0 + $0x38] sm:$0xff]
          %v3835 = vadd.f32 %v3635, %v3827
          %v3836 = vadd.f32 %v3636, %v3828
          %v3837 = vadd.f32 %v3637, %v3829
          %v3838 = vadd.f32 %v3638, %v3830
          %v3839 = vadd.f32 %v3639, %v3831
          %v3840 = vadd.f32 %v3640, %v3832
          %v3841 = vadd.f32 %v3641, %v3833
          %v3842 = vadd.f32 %v3642, %v3834
          %vm3843 = vcmp.ge.f32.partialorder %v3835, 0.0
          %vm3844 = vcmp.ge.f32.partialorder %v3836, 0.0
          %vm3845 = vcmp.ge.f32.partialorder %v3837, 0.0
          %vm3846 = vcmp.ge.f32.partialorder %v3838, 0.0
          %vm3847 = vcmp.ge.f32.partialorder %v3839, 0.0
          %vm3848 = vcmp.ge.f32.partialorder %v3840, 0.0
          %vm3849 = vcmp.ge.f32.partialorder %v3841, 0.0
          %vm3850 = vcmp.ge.f32.partialorder %v3842, 0.0
          %v3851 = vmul.f32 %v3835, 0.01
          %v3852 = vmul.f32 %v3836, 0.01
          %v3853 = vmul.f32 %v3837, 0.01
          %v3854 = vmul.f32 %v3838, 0.01
          %v3855 = vmul.f32 %v3839, 0.01
          %v3856 = vmul.f32 %v3840, 0.01
          %v3857 = vmul.f32 %v3841, 0.01
          %v3858 = vmul.f32 %v3842, 0.01
          %v3859 = vsel %vm3843, %v3835, %v3851
          %v3860 = vsel %vm3844, %v3836, %v3852
          %v3861 = vsel %vm3845, %v3837, %v3853
          %v3862 = vsel %vm3846, %v3838, %v3854
          %v3863 = vsel %vm3847, %v3839, %v3855
          %v3864 = vsel %vm3848, %v3840, %v3856
          %v3865 = vsel %vm3849, %v3841, %v3857
          %v3866 = vsel %vm3850, %v3842, %v3858
          %3867 = vst [vmem:[%s3] sm:$0xff] %v3859
          %3868 = vst [vmem:[%s3 + $0x8] sm:$0xff] %v3860
          %3869 = vst [vmem:[%s3 + $0x10] sm:$0xff] %v3861
          %3870 = vst [vmem:[%s3 + $0x18] sm:$0xff] %v3862
          %3871 = vst [vmem:[%s3 + $0x20] sm:$0xff] %v3863
          %3872 = vst [vmem:[%s3 + $0x28] sm:$0xff] %v3864
          %3873 = vst [vmem:[%s3 + $0x30] sm:$0xff] %v3865
          %3874 = vst [vmem:[%s3 + $0x38] sm:$0xff] %v3866
          %s3875 = scalar_lea.vmem %s0, 64
          %v3876 = vld [vmem:[%s3875] sm:$0xff]
          %v3877 = vld [vmem:[%s3875 + $0x8] sm:$0xff]
          %v3878 = vld [vmem:[%s3875 + $0x10] sm:$0xff]
          %v3879 = vld [vmem:[%s3875 + $0x18] sm:$0xff]
          %v3880 = vld [vmem:[%s3875 + $0x20] sm:$0xff]
          %v3881 = vld [vmem:[%s3875 + $0x28] sm:$0xff]
          %v3882 = vld [vmem:[%s3875 + $0x30] sm:$0xff]
          %v3883 = vld [vmem:[%s3875 + $0x38] sm:$0xff]
          %vm3892 = vcmask 1040384
          %v3893 = vrot.slane %v3876, 7
          %v3894 = vrot.slane %v3877, 7
          %v3895 = vrot.slane %v3878, 7
          %v3896 = vrot.slane %v3879, 7
          %v3897 = vrot.slane %v3880, 7
          %v3898 = vsel %vm3892, %v3893, %v3897
          %v3899 = vrot.slane %v3881, 7
          %v3900 = vsel %vm3892, %v3894, %v3899
          %v3901 = vrot.slane %v3882, 7
          %v3902 = vsel %vm3892, %v3895, %v3901
          %v3903 = vrot.slane %v3883, 7
          %v3904 = vsel %vm3892, %v3896, %v3903
          %v3917 = vadd.f32 %v3643, %v3893
          %v3918 = vadd.f32 %v3644, %v3894
          %v3919 = vadd.f32 %v3645, %v3895
          %v3920 = vadd.f32 %v3646, %v3896
          %v3921 = vadd.f32 %v3647, %v3898
          %v3922 = vadd.f32 %v3648, %v3900
          %v3923 = vadd.f32 %v3649, %v3902
          %v3924 = vadd.f32 %v3650, %v3904
          %v3925 = vadd.f32 %v3651, %v3897
          %v3926 = vadd.f32 %v3652, %v3899
          %v3927 = vadd.f32 %v3653, %v3901
          %v3928 = vadd.f32 %v3654, %v3903
          %vm3929 = vcmp.ge.f32.partialorder %v3917, 0.0
          %vm3930 = vcmp.ge.f32.partialorder %v3918, 0.0
          %vm3931 = vcmp.ge.f32.partialorder %v3919, 0.0
          %vm3932 = vcmp.ge.f32.partialorder %v3920, 0.0
          %vm3933 = vcmp.ge.f32.partialorder %v3921, 0.0
          %vm3934 = vcmp.ge.f32.partialorder %v3922, 0.0
          %vm3935 = vcmp.ge.f32.partialorder %v3923, 0.0
          %vm3936 = vcmp.ge.f32.partialorder %v3924, 0.0
          %vm3937 = vcmp.ge.f32.partialorder %v3925, 0.0
          %vm3938 = vcmp.ge.f32.partialorder %v3926, 0.0
          %vm3939 = vcmp.ge.f32.partialorder %v3927, 0.0
          %vm3940 = vcmp.ge.f32.partialorder %v3928, 0.0
          %v3941 = vmul.f32 %v3917, 0.01
          %v3942 = vmul.f32 %v3918, 0.01
          %v3943 = vmul.f32 %v3919, 0.01
          %v3944 = vmul.f32 %v3920, 0.01
          %v3945 = vmul.f32 %v3921, 0.01
          %v3946 = vmul.f32 %v3922, 0.01
          %v3947 = vmul.f32 %v3923, 0.01
          %v3948 = vmul.f32 %v3924, 0.01
          %v3949 = vmul.f32 %v3925, 0.01
          %v3950 = vmul.f32 %v3926, 0.01
          %v3951 = vmul.f32 %v3927, 0.01
          %v3952 = vmul.f32 %v3928, 0.01
          %v3953 = vsel %vm3929, %v3917, %v3941
          %v3954 = vsel %vm3930, %v3918, %v3942
          %v3955 = vsel %vm3931, %v3919, %v3943
          %v3956 = vsel %vm3932, %v3920, %v3944
          %v3957 = vsel %vm3933, %v3921, %v3945
          %v3958 = vsel %vm3934, %v3922, %v3946
          %v3959 = vsel %vm3935, %v3923, %v3947
          %v3960 = vsel %vm3936, %v3924, %v3948
          %v3961 = vsel %vm3937, %v3925, %v3949
          %v3962 = vsel %vm3938, %v3926, %v3950
          %v3963 = vsel %vm3939, %v3927, %v3951
          %v3964 = vsel %vm3940, %v3928, %v3952
          %vm3977 = vcmask 1046528
          %v3978 = vrot.slane %v3953, 1
          %v3979 = vrot.slane %v3957, 1
          %v3980 = vsel %vm3977, %v3978, %v3979
          %v3981 = vrot.slane %v3954, 1
          %v3982 = vrot.slane %v3958, 1
          %v3983 = vsel %vm3977, %v3981, %v3982
          %v3984 = vrot.slane %v3955, 1
          %v3985 = vrot.slane %v3959, 1
          %v3986 = vsel %vm3977, %v3984, %v3985
          %v3987 = vrot.slane %v3956, 1
          %v3988 = vrot.slane %v3960, 1
          %v3989 = vsel %vm3977, %v3987, %v3988
          %v3990 = vrot.slane %v3961, 1
          %v3991 = vsel %vm3977, %v3979, %v3990
          %v3992 = vrot.slane %v3962, 1
          %v3993 = vsel %vm3977, %v3982, %v3992
          %v3994 = vrot.slane %v3963, 1
          %v3995 = vsel %vm3977, %v3985, %v3994
          %v3996 = vrot.slane %v3964, 1
          %v3997 = vsel %vm3977, %v3988, %v3996
          %s4006 = scalar_lea.vmem %s3, 64
          %4007 = vst [vmem:[%s4006] sm:$0xff] %v3980
          %4008 = vst [vmem:[%s4006 + $0x8] sm:$0xff] %v3983
          %4009 = vst [vmem:[%s4006 + $0x10] sm:$0xff] %v3986
          %4010 = vst [vmem:[%s4006 + $0x18] sm:$0xff] %v3989
          %4011 = vst [vmem:[%s4006 + $0x20] sm:$0xff] %v3991
          %4012 = vst [vmem:[%s4006 + $0x28] sm:$0xff] %v3993
          %4013 = vst [vmem:[%s4006 + $0x30] sm:$0xff] %v3995
          %4014 = vst [vmem:[%s4006 + $0x38] sm:$0xff] %v3997
        $region52: #{feature_forward_unit.1} parent=31 // pred_fallthru
          _
        // Predicated region
        $region53: #{feature_forward_unit.1} parent=31 // pred_check
          %p4015 = pneg %p106
        $region54: #{feature_forward_unit.1} parent=31 // pred_check_branch
          %4017 = sbr.rel (%p4015) target = $region56
        $region55: #{feature_forward_unit.1} parent=31 // pred_region
          _
        $region56: #{feature_forward_unit.1} parent=31 // pred_fallthru
          _
        // Predicated region
        $region57: #{feature_forward_unit.1} parent=31 // pred_check
          %p4018 = pneg %p106
        $region58: #{feature_forward_unit.1} parent=31 // pred_check_branch
          %4020 = sbr.rel (%p4018) target = $region60
        $region59: #{feature_forward_unit.1} parent=31 // pred_region
          _
        $region60: #{feature_forward_unit.1} parent=31 // pred_fallthru
          _
      $region32: #{feature_forward_unit.1} parent=5 // pred_fallthru
        _
      %p4021 = scmp.le.s32.totalorder 2, %s15
      // Predicated region
      $region61: #{feature_forward_unit.1} parent=5 // pred_check
        %p4022 = pneg %p4021
      $region62: #{feature_forward_unit.1} parent=5 // pred_check_branch
        %4024 = sbr.rel (%p4022) target = $region64
      $region63: #{feature_forward_unit.1} parent=5 // pred_region
        %s4025 = ssub.s32 %s15, 2
      $region64: #{feature_forward_unit.1} parent=5 // pred_fallthru
        _
    $region6: #{feature_forward_unit.1} parent=1 // loop_footer
      %s19 = sadd.s32 1, %s15
    $region7: #{feature_forward_unit.1} parent=1 // loop_footer_branch
      %14 = sbr.rel target = $region3
    $region8: #{feature_forward_unit.1} parent=1 // loop_exit
      _
    %4026 = vsyncpa [#allocation4], 1
    %s4027 = scalar_lea.sflag [#allocation4], 1
    %4028 = vsyncpa %s4027, 1
    %4029 = vsyncpa [#allocation6], 1
    %s4030 = scalar_lea.sflag [#allocation6], 1
    %4031 = vsyncpa %s4030, 1

</llo_original>
